<compile_context>
chip_gen: v5e
topology: v5e:2x2
jax: 0.10.0
libtpu: 0.0.40
codegen_flags: <defaults>
</compile_context>

<pallas_src>
import functools

import jax
import jax.numpy as jnp
from jax import lax
from jax.experimental import pallas as pl
from jax.experimental.pallas import tpu as pltpu

HIDDEN = 64                   # hidden_dims
NF = HIDDEN // 4              # num_filters per inception branch = 16
NBRANCH = 3                   # number of wide conv branches
KSIZES = (41, 21, 11)         # kernel_size=40 -> [40, 20, 10] -> Conv1d kernel k+1
BN_EPS = 1e-5


# ---------------------------------------------------------------- fused kernel

def _fused_kernel(xs_ref, band_ref, wpbd_ref, csum_ref, csumt_ref,
                  gamma_ref, beta_ref, wl_ref, bl_ref, out_ref,
                  *, B, T, nenc):
    """All encoders, feature concat, Linear head and log_softmax in one call.

    xs_ref    (3, B, W)      : [x_flat, x at t-1 (-inf pad), x at t+1 (-inf pad)]
                               where W = sum_j T*C_j, encoders concatenated on lanes
    band_ref  (W, nenc*T*48) : block-diag (encoders) bottleneck+wide-conv matrix
    wpbd_ref  (W, nenc*T*16) : block-diag (encoders) pool-branch 1x1-conv matrix
    csum_ref  (T*64, 64)     : 0/1 map flat feature column -> BN channel (shared)
    csumt_ref (64, T*64)     : its transpose (channel -> flat column broadcast)
    gamma/beta (nenc, 64), wl (nenc*64, nc), bl (1, nc), out (B, nc)
    """
    csum = csum_ref[...]
    csumt = csumt_ref[...]
    inv_bt = 1.0 / (B * T)
    inv_t = 1.0 / T
    C4 = 4 * NF                      # 64 channels per encoder
    conv_w = T * NBRANCH * NF        # 768 conv columns per encoder
    pool_w = T * NF                  # 256 pool columns per encoder

    xf = xs_ref[0]                   # (B, W)  time-major flattened inputs
    xdn = xs_ref[1]                  # value at t-1 (-inf where t == 0)
    xup = xs_ref[2]                  # value at t+1 (-inf where t == T-1)

    # bottleneck + all three "same"-padded wide convs, ALL encoders: ONE matmul
    conv_all = jnp.dot(xf, band_ref[...],
                       preferred_element_type=jnp.float32)       # (B, nenc*768)

    # MaxPool1d(3,1,1) + 1x1 conv branch, ALL encoders: one max + ONE matmul
    pooled = jnp.maximum(jnp.maximum(xf, xdn), xup)              # (B, W)
    pool_all = jnp.dot(pooled, wpbd_ref[...],
                       preferred_element_type=jnp.float32)       # (B, nenc*256)

    logits = bl_ref[...]             # (1, nc); broadcasts against (B, nc)

    for j in range(nenc):            # unrolled at trace time (nenc == 3)
        conv = conv_all[:, j * conv_w:(j + 1) * conv_w]          # (B, T*48)
        pool = pool_all[:, j * pool_w:(j + 1) * pool_w]          # (B, T*16)
        feats = jnp.concatenate([conv, pool], axis=-1)           # (B, T*64)

        # BatchNorm1d(64) training-mode stats over (B, T), all 64 ch at once.
        colsum = jnp.sum(feats, axis=0, keepdims=True)           # (1, T*64)
        mean = jnp.dot(colsum, csum,
                       preferred_element_type=jnp.float32) * inv_bt   # (1, 64)
        mean_b = jnp.dot(mean, csumt, preferred_element_type=jnp.float32)
        cent = feats - mean_b
        var = jnp.dot(jnp.sum(cent * cent, axis=0, keepdims=True), csum,
                      preferred_element_type=jnp.float32) * inv_bt    # (1, 64)
        scale = gamma_ref[j:j + 1, :] * lax.rsqrt(var + BN_EPS)       # (1, 64)
        sb = jnp.dot(jnp.concatenate([scale, beta_ref[j:j + 1, :]], axis=0),
                     csumt, preferred_element_type=jnp.float32)       # (2, T*64)
        fn = jnp.maximum(cent * sb[0:1, :] + sb[1:2, :], 0.0)         # BN + ReLU

        # AdaptiveAvgPool1d(1) over time -> (B, 64); accumulate this encoder's
        # slice of the Linear head (equivalent to concat + one big matmul).
        enc = jnp.dot(fn, csum, preferred_element_type=jnp.float32) * inv_t
        logits = logits + jnp.dot(enc, wl_ref[j * C4:(j + 1) * C4, :],
                                  preferred_element_type=jnp.float32)

    # log_softmax (numerically stabilized)
    m = jnp.max(logits, axis=-1, keepdims=True)
    z = logits - m
    lse = jnp.log(jnp.sum(jnp.exp(z), axis=-1, keepdims=True))
    out_ref[...] = z - lse


# ------------------------------------------------- wrapper-side weight folding

def _conv_band(w, T):
    """w: (K, F_in, F_out) taps -> (T*F_in, T*F_out) banded 'same'-conv matrix."""
    K, F, _ = w.shape
    p = K // 2
    t_in = jnp.arange(T)[:, None]
    t_out = jnp.arange(T)[None, :]
    k = t_in - t_out + p                                   # tap index for (t_in, t_out)
    valid = (k >= 0) & (k < K)
    blocks = jnp.where(valid[:, :, None, None],
                       w[jnp.clip(k, 0, K - 1)], 0.0)      # (T, T, F, F)
    return blocks.transpose(0, 2, 1, 3).reshape(T * F, T * F)


def _combined_conv_band(convs, T):
    """Stack the 3 branch bands so output columns are ordered t*48 + branch*16 + f."""
    F = convs[0].shape[1]
    mats = [_conv_band(w, T).reshape(T * F, T, F) for w in convs]
    return jnp.stack(mats, axis=2).reshape(T * F, T * NBRANCH * F)


def _block_diag_time(w, T):
    """w: (Cin, Cout) -> (T*Cin, T*Cout): a per-timestep (1x1 conv) matmul."""
    cin, cout = w.shape
    eye = jnp.eye(T, dtype=w.dtype)
    return jnp.einsum('ts,io->tiso', eye, w).reshape(T * cin, T * cout)


def _blockdiag_cat(mats):
    """Block-diagonal concatenation of 2-D matrices (across encoders)."""
    rows = sum(int(m.shape[0]) for m in mats)
    cols = sum(int(m.shape[1]) for m in mats)
    out = jnp.zeros((rows, cols), jnp.float32)
    r = c = 0
    for m in mats:
        out = out.at[r:r + m.shape[0], c:c + m.shape[1]].set(m)
        r += int(m.shape[0])
        c += int(m.shape[1])
    return out


def _comb_matrix(T):
    """(T*64, 64) 0/1 matrix mapping flat feature columns to BN channels."""
    ch_conv = jnp.tile(jnp.arange(NBRANCH * NF), T)        # conv cols: t*48 + ch
    ch_pool = NBRANCH * NF + jnp.tile(jnp.arange(NF), T)   # pool cols: t*16 + f
    ch = jnp.concatenate([ch_conv, ch_pool])
    return (ch[:, None] == jnp.arange(4 * NF)[None, :]).astype(jnp.float32)


def _vmem_spec():
    return pl.BlockSpec(memory_space=pltpu.MemorySpace.VMEM)


@jax.jit
def inception_fuse_net(vals, encoder_params, wl, bl):
    """vals: list of (B, T, C_j) float32 arrays -> (B, num_classes) log-probs."""
    B, T, _ = vals[0].shape
    nenc = len(vals)

    xfs, xdns, xups, bands, wpbds = [], [], [], [], []
    for j in range(nenc):
        x = vals[j]
        wb, w0, w1, w2, wp, _, _ = encoder_params[j]
        C = x.shape[-1]
        xf = x.reshape(B, T * C)                           # lane-dense flat input
        neg = jnp.full((B, C), -jnp.inf, jnp.float32)
        xdns.append(jnp.concatenate([neg, xf[:, :-C]], axis=1))   # value at t-1
        xups.append(jnp.concatenate([xf[:, C:], neg], axis=1))    # value at t+1
        xfs.append(xf)
        bands.append(_block_diag_time(wb, T) @ _combined_conv_band((w0, w1, w2), T))
        wpbds.append(_block_diag_time(wp, T))

    xs = jnp.stack([jnp.concatenate(xfs, axis=1),
                    jnp.concatenate(xdns, axis=1),
                    jnp.concatenate(xups, axis=1)], axis=0)        # (3, B, W)
    band_all = _blockdiag_cat(bands)                               # (W, nenc*T*48)
    wpbd_all = _blockdiag_cat(wpbds)                               # (W, nenc*T*16)
    csum = _comb_matrix(T)
    csumt = csum.T
    gamma = jnp.stack([p[5] for p in encoder_params])              # (nenc, 64)
    beta = jnp.stack([p[6] for p in encoder_params])               # (nenc, 64)
    num_classes = wl.shape[1]

    operands = (xs, band_all, wpbd_all, csum, csumt, gamma, beta, wl, bl)
    kernel = functools.partial(_fused_kernel, B=B, T=T, nenc=nenc)
    return pl.pallas_call(
        kernel,
        out_shape=jax.ShapeDtypeStruct((B, num_classes), jnp.float32),
        in_specs=[_vmem_spec()] * len(operands),
        out_specs=_vmem_spec(),
    )(*operands)


# ------------------------------------------------------------------ params

def _uniform(key, shape, fan_in):
    bound = 1.0 / (fan_in ** 0.5)
    return jax.random.uniform(key, shape, jnp.float32, -bound, bound)


def init_encoder_params(key, c_in):
    ks = jax.random.split(key, 5)
    # PyTorch Conv1d weights are (out, in, K); stored pre-transposed for matmul use.
    wbt = _uniform(ks[0], (c_in, NF), c_in * 1)               # bottleneck (C, F)
    convs = [_uniform(ks[1 + i], (K, NF, NF), NF * K)         # (K, f_in, f_out)
             for i, K in enumerate(KSIZES)]
    wpt = _uniform(ks[4], (c_in, NF), c_in * 1)               # pool-branch 1x1 (C, F)
    gamma = jnp.ones((HIDDEN,), jnp.float32)                  # BN affine defaults
    beta = jnp.zeros((HIDDEN,), jnp.float32)
    return (wbt, convs[0], convs[1], convs[2], wpt, gamma, beta)
# TODO(synk): BatchNorm running-stat updates (a training-mode side effect) are not
# modeled; they do not affect the forward output, which uses batch statistics.


# ------------------------------------------------------------------ main

if __name__ == "__main__":
    key = jax.random.PRNGKey(0)
    B, T = 2, 16
    input_dims = [1, 3, 3]
    num_classes = 5

    k_data, k_enc, k_lin = jax.random.split(key, 3)

    # inputs: list of (B, T, C_j), matching InceptionFuseNet.forward(vals)
    data_keys = jax.random.split(k_data, len(input_dims))
    vals = [jax.random.normal(data_keys[j], (B, T, c), jnp.float32)
            for j, c in enumerate(input_dims)]

    enc_keys = jax.random.split(k_enc, len(input_dims))
    encoder_params = [init_encoder_params(enc_keys[j], c)
                      for j, c in enumerate(input_dims)]

    k_w, k_b = jax.random.split(k_lin)
    fan_in = HIDDEN * len(input_dims)
    wl = _uniform(k_w, (fan_in, num_classes), fan_in)         # Linear weight, pre-transposed
    bl = _uniform(k_b, (1, num_classes), fan_in)              # Linear bias

    logs = inception_fuse_net(vals, encoder_params, wl, bl)
    logs = jax.block_until_ready(logs)
    assert logs.shape == (B, num_classes)
    assert bool(jnp.all(jnp.isfinite(logs)))
    # log_softmax rows must sum to 1 in prob space
    assert bool(jnp.all(jnp.abs(jnp.sum(jnp.exp(logs), axis=-1) - 1.0) < 1e-4))
    print("KERNEL_OK")
</pallas_src>

<mosaic_0001>
module attributes {stable_mosaic.version = 11 : i64} {
  func.func @_fused_kernel(%arg0: memref<3x2x112xf32, #tpu.memory_space<vmem>>, %arg1: memref<112x2304xf32, #tpu.memory_space<vmem>>, %arg2: memref<112x768xf32, #tpu.memory_space<vmem>>, %arg3: memref<1024x64xf32, #tpu.memory_space<vmem>>, %arg4: memref<64x1024xf32, #tpu.memory_space<vmem>>, %arg5: memref<3x64xf32, #tpu.memory_space<vmem>>, %arg6: memref<3x64xf32, #tpu.memory_space<vmem>>, %arg7: memref<192x5xf32, #tpu.memory_space<vmem>>, %arg8: memref<1x5xf32, #tpu.memory_space<vmem>>, %arg9: memref<2x5xf32, #tpu.memory_space<vmem>>) attributes {dimension_semantics = [], scalar_prefetch = 0 : i64, scratch_operands = 0 : i64, tpu.core_type = #tpu.core_type<tc>} {
    %c0 = arith.constant 0 : index
    %c0_0 = arith.constant 0 : index
    %0 = vector.load %arg3[%c0, %c0_0] : memref<1024x64xf32, #tpu.memory_space<vmem>>, vector<1024x64xf32>
    %c0_1 = arith.constant 0 : index
    %c0_2 = arith.constant 0 : index
    %1 = vector.load %arg4[%c0_1, %c0_2] : memref<64x1024xf32, #tpu.memory_space<vmem>>, vector<64x1024xf32>
    %c0_3 = arith.constant 0 : index
    %c0_4 = arith.constant 0 : index
    %c0_5 = arith.constant 0 : index
    %2 = vector.load %arg0[%c0_3, %c0_4, %c0_5] : memref<3x2x112xf32, #tpu.memory_space<vmem>>, vector<1x2x112xf32>
    %3 = vector.shape_cast %2 : vector<1x2x112xf32> to vector<2x112xf32>
    %c1 = arith.constant 1 : index
    %c0_6 = arith.constant 0 : index
    %c0_7 = arith.constant 0 : index
    %4 = vector.load %arg0[%c1, %c0_6, %c0_7] : memref<3x2x112xf32, #tpu.memory_space<vmem>>, vector<1x2x112xf32>
    %5 = vector.shape_cast %4 : vector<1x2x112xf32> to vector<2x112xf32>
    %c2 = arith.constant 2 : index
    %c0_8 = arith.constant 0 : index
    %c0_9 = arith.constant 0 : index
    %6 = vector.load %arg0[%c2, %c0_8, %c0_9] : memref<3x2x112xf32, #tpu.memory_space<vmem>>, vector<1x2x112xf32>
    %7 = vector.shape_cast %6 : vector<1x2x112xf32> to vector<2x112xf32>
    %c0_10 = arith.constant 0 : index
    %c0_11 = arith.constant 0 : index
    %8 = vector.load %arg1[%c0_10, %c0_11] : memref<112x2304xf32, #tpu.memory_space<vmem>>, vector<112x2304xf32>
    %cst = arith.constant dense<0.000000e+00> : vector<2x2304xf32>
    %9 = tpu.matmul %3, %8, %cst {dimension_numbers = #tpu.dot_dimension_numbers<[1], [0], [0], [1], [0, 0, 1, 1], [], []>} : vector<2x112xf32>, vector<112x2304xf32>, vector<2x2304xf32> -> vector<2x2304xf32>
    %10 = arith.maximumf %3, %5 : vector<2x112xf32>
    %11 = arith.maximumf %10, %7 : vector<2x112xf32>
    %c0_12 = arith.constant 0 : index
    %c0_13 = arith.constant 0 : index
    %12 = vector.load %arg2[%c0_12, %c0_13] : memref<112x768xf32, #tpu.memory_space<vmem>>, vector<112x768xf32>
    %cst_14 = arith.constant dense<0.000000e+00> : vector<2x768xf32>
    %13 = tpu.matmul %11, %12, %cst_14 {dimension_numbers = #tpu.dot_dimension_numbers<[1], [0], [0], [1], [0, 0, 1, 1], [], []>} : vector<2x112xf32>, vector<112x768xf32>, vector<2x768xf32> -> vector<2x768xf32>
    %c0_15 = arith.constant 0 : index
    %c0_16 = arith.constant 0 : index
    %14 = vector.load %arg8[%c0_15, %c0_16] : memref<1x5xf32, #tpu.memory_space<vmem>>, vector<1x5xf32>
    %15 = vector.extract_strided_slice %9 {offsets = [0, 0], sizes = [2, 768], strides = [1, 1]} : vector<2x2304xf32> to vector<2x768xf32>
    %16 = vector.extract_strided_slice %13 {offsets = [0, 0], sizes = [2, 256], strides = [1, 1]} : vector<2x768xf32> to vector<2x256xf32>
    %17 = tpu.concatenate %15, %16 in 1 : vector<2x768xf32>, vector<2x256xf32> -> vector<2x1024xf32>
    %cst_17 = arith.constant dense<0.000000e+00> : vector<1024xf32>
    %18 = vector.multi_reduction <add>, %17, %cst_17 [0] : vector<2x1024xf32> to vector<1024xf32>
    %19 = vector.shape_cast %18 : vector<1024xf32> to vector<1x1024xf32>
    %cst_18 = arith.constant dense<0.000000e+00> : vector<1x64xf32>
    %20 = tpu.matmul %19, %0, %cst_18 {dimension_numbers = #tpu.dot_dimension_numbers<[1], [0], [0], [1], [0, 0, 1, 1], [], []>} : vector<1x1024xf32>, vector<1024x64xf32>, vector<1x64xf32> -> vector<1x64xf32>
    %cst_19 = arith.constant 3.125000e-02 : f32
    %21 = vector.broadcast %cst_19 : f32 to vector<1x64xf32>
    %22 = arith.mulf %20, %21 : vector<1x64xf32>
    %cst_20 = arith.constant dense<0.000000e+00> : vector<1x1024xf32>
    %23 = tpu.matmul %22, %1, %cst_20 {dimension_numbers = #tpu.dot_dimension_numbers<[1], [0], [0], [1], [0, 0, 1, 1], [], []>} : vector<1x64xf32>, vector<64x1024xf32>, vector<1x1024xf32> -> vector<1x1024xf32>
    %24 = vector.broadcast %23 : vector<1x1024xf32> to vector<2x1024xf32>
    %25 = arith.subf %17, %24 : vector<2x1024xf32>
    %26 = arith.mulf %25, %25 : vector<2x1024xf32>
    %cst_21 = arith.constant dense<0.000000e+00> : vector<1024xf32>
    %27 = vector.multi_reduction <add>, %26, %cst_21 [0] : vector<2x1024xf32> to vector<1024xf32>
    %28 = vector.shape_cast %27 : vector<1024xf32> to vector<1x1024xf32>
    %cst_22 = arith.constant dense<0.000000e+00> : vector<1x64xf32>
    %29 = tpu.matmul %28, %0, %cst_22 {dimension_numbers = #tpu.dot_dimension_numbers<[1], [0], [0], [1], [0, 0, 1, 1], [], []>} : vector<1x1024xf32>, vector<1024x64xf32>, vector<1x64xf32> -> vector<1x64xf32>
    %cst_23 = arith.constant 3.125000e-02 : f32
    %30 = vector.broadcast %cst_23 : f32 to vector<1x64xf32>
    %31 = arith.mulf %29, %30 : vector<1x64xf32>
    %c0_24 = arith.constant 0 : index
    %c0_25 = arith.constant 0 : index
    %32 = vector.load %arg5[%c0_24, %c0_25] : memref<3x64xf32, #tpu.memory_space<vmem>>, vector<1x64xf32>
    %cst_26 = arith.constant 9.99999974E-6 : f32
    %33 = vector.broadcast %cst_26 : f32 to vector<1x64xf32>
    %34 = arith.addf %31, %33 : vector<1x64xf32>
    %35 = math.rsqrt %34 : vector<1x64xf32>
    %36 = arith.mulf %32, %35 : vector<1x64xf32>
    %c0_27 = arith.constant 0 : index
    %c0_28 = arith.constant 0 : index
    %37 = vector.load %arg6[%c0_27, %c0_28] : memref<3x64xf32, #tpu.memory_space<vmem>>, vector<1x64xf32>
    %38 = tpu.concatenate %36, %37 in 0 : vector<1x64xf32>, vector<1x64xf32> -> vector<2x64xf32>
    %cst_29 = arith.constant dense<0.000000e+00> : vector<2x1024xf32>
    %39 = tpu.matmul %38, %1, %cst_29 {dimension_numbers = #tpu.dot_dimension_numbers<[1], [0], [0], [1], [0, 0, 1, 1], [], []>} : vector<2x64xf32>, vector<64x1024xf32>, vector<2x1024xf32> -> vector<2x1024xf32>
    %40 = vector.extract_strided_slice %39 {offsets = [0, 0], sizes = [1, 1024], strides = [1, 1]} : vector<2x1024xf32> to vector<1x1024xf32>
    %41 = vector.broadcast %40 : vector<1x1024xf32> to vector<2x1024xf32>
    %42 = arith.mulf %25, %41 : vector<2x1024xf32>
    %43 = vector.extract_strided_slice %39 {offsets = [1, 0], sizes = [1, 1024], strides = [1, 1]} : vector<2x1024xf32> to vector<1x1024xf32>
    %44 = vector.broadcast %43 : vector<1x1024xf32> to vector<2x1024xf32>
    %45 = arith.addf %42, %44 : vector<2x1024xf32>
    %cst_30 = arith.constant 0.000000e+00 : f32
    %46 = vector.broadcast %cst_30 : f32 to vector<2x1024xf32>
    %47 = arith.maximumf %45, %46 : vector<2x1024xf32>
    %cst_31 = arith.constant dense<0.000000e+00> : vector<2x64xf32>
    %48 = tpu.matmul %47, %0, %cst_31 {dimension_numbers = #tpu.dot_dimension_numbers<[1], [0], [0], [1], [0, 0, 1, 1], [], []>} : vector<2x1024xf32>, vector<1024x64xf32>, vector<2x64xf32> -> vector<2x64xf32>
    %cst_32 = arith.constant 6.250000e-02 : f32
    %49 = vector.broadcast %cst_32 : f32 to vector<2x64xf32>
    %50 = arith.mulf %48, %49 : vector<2x64xf32>
    %c0_33 = arith.constant 0 : index
    %c0_34 = arith.constant 0 : index
    %51 = vector.load %arg7[%c0_33, %c0_34] : memref<192x5xf32, #tpu.memory_space<vmem>>, vector<64x5xf32>
    %cst_35 = arith.constant dense<0.000000e+00> : vector<2x5xf32>
    %52 = tpu.matmul %50, %51, %cst_35 {dimension_numbers = #tpu.dot_dimension_numbers<[1], [0], [0], [1], [0, 0, 1, 1], [], []>} : vector<2x64xf32>, vector<64x5xf32>, vector<2x5xf32> -> vector<2x5xf32>
    %53 = vector.broadcast %14 : vector<1x5xf32> to vector<2x5xf32>
    %54 = arith.addf %53, %52 : vector<2x5xf32>
    %55 = vector.extract_strided_slice %9 {offsets = [0, 768], sizes = [2, 768], strides = [1, 1]} : vector<2x2304xf32> to vector<2x768xf32>
    %56 = vector.extract_strided_slice %13 {offsets = [0, 256], sizes = [2, 256], strides = [1, 1]} : vector<2x768xf32> to vector<2x256xf32>
    %57 = tpu.concatenate %55, %56 in 1 : vector<2x768xf32>, vector<2x256xf32> -> vector<2x1024xf32>
    %cst_36 = arith.constant dense<0.000000e+00> : vector<1024xf32>
    %58 = vector.multi_reduction <add>, %57, %cst_36 [0] : vector<2x1024xf32> to vector<1024xf32>
    %59 = vector.shape_cast %58 : vector<1024xf32> to vector<1x1024xf32>
    %cst_37 = arith.constant dense<0.000000e+00> : vector<1x64xf32>
    %60 = tpu.matmul %59, %0, %cst_37 {dimension_numbers = #tpu.dot_dimension_numbers<[1], [0], [0], [1], [0, 0, 1, 1], [], []>} : vector<1x1024xf32>, vector<1024x64xf32>, vector<1x64xf32> -> vector<1x64xf32>
    %cst_38 = arith.constant 3.125000e-02 : f32
    %61 = vector.broadcast %cst_38 : f32 to vector<1x64xf32>
    %62 = arith.mulf %60, %61 : vector<1x64xf32>
    %cst_39 = arith.constant dense<0.000000e+00> : vector<1x1024xf32>
    %63 = tpu.matmul %62, %1, %cst_39 {dimension_numbers = #tpu.dot_dimension_numbers<[1], [0], [0], [1], [0, 0, 1, 1], [], []>} : vector<1x64xf32>, vector<64x1024xf32>, vector<1x1024xf32> -> vector<1x1024xf32>
    %64 = vector.broadcast %63 : vector<1x1024xf32> to vector<2x1024xf32>
    %65 = arith.subf %57, %64 : vector<2x1024xf32>
    %66 = arith.mulf %65, %65 : vector<2x1024xf32>
    %cst_40 = arith.constant dense<0.000000e+00> : vector<1024xf32>
    %67 = vector.multi_reduction <add>, %66, %cst_40 [0] : vector<2x1024xf32> to vector<1024xf32>
    %68 = vector.shape_cast %67 : vector<1024xf32> to vector<1x1024xf32>
    %cst_41 = arith.constant dense<0.000000e+00> : vector<1x64xf32>
    %69 = tpu.matmul %68, %0, %cst_41 {dimension_numbers = #tpu.dot_dimension_numbers<[1], [0], [0], [1], [0, 0, 1, 1], [], []>} : vector<1x1024xf32>, vector<1024x64xf32>, vector<1x64xf32> -> vector<1x64xf32>
    %cst_42 = arith.constant 3.125000e-02 : f32
    %70 = vector.broadcast %cst_42 : f32 to vector<1x64xf32>
    %71 = arith.mulf %69, %70 : vector<1x64xf32>
    %c1_43 = arith.constant 1 : index
    %c0_44 = arith.constant 0 : index
    %72 = vector.load %arg5[%c1_43, %c0_44] : memref<3x64xf32, #tpu.memory_space<vmem>>, vector<1x64xf32>
    %cst_45 = arith.constant 9.99999974E-6 : f32
    %73 = vector.broadcast %cst_45 : f32 to vector<1x64xf32>
    %74 = arith.addf %71, %73 : vector<1x64xf32>
    %75 = math.rsqrt %74 : vector<1x64xf32>
    %76 = arith.mulf %72, %75 : vector<1x64xf32>
    %c1_46 = arith.constant 1 : index
    %c0_47 = arith.constant 0 : index
    %77 = vector.load %arg6[%c1_46, %c0_47] : memref<3x64xf32, #tpu.memory_space<vmem>>, vector<1x64xf32>
    %78 = tpu.concatenate %76, %77 in 0 : vector<1x64xf32>, vector<1x64xf32> -> vector<2x64xf32>
    %cst_48 = arith.constant dense<0.000000e+00> : vector<2x1024xf32>
    %79 = tpu.matmul %78, %1, %cst_48 {dimension_numbers = #tpu.dot_dimension_numbers<[1], [0], [0], [1], [0, 0, 1, 1], [], []>} : vector<2x64xf32>, vector<64x1024xf32>, vector<2x1024xf32> -> vector<2x1024xf32>
    %80 = vector.extract_strided_slice %79 {offsets = [0, 0], sizes = [1, 1024], strides = [1, 1]} : vector<2x1024xf32> to vector<1x1024xf32>
    %81 = vector.broadcast %80 : vector<1x1024xf32> to vector<2x1024xf32>
    %82 = arith.mulf %65, %81 : vector<2x1024xf32>
    %83 = vector.extract_strided_slice %79 {offsets = [1, 0], sizes = [1, 1024], strides = [1, 1]} : vector<2x1024xf32> to vector<1x1024xf32>
    %84 = vector.broadcast %83 : vector<1x1024xf32> to vector<2x1024xf32>
    %85 = arith.addf %82, %84 : vector<2x1024xf32>
    %cst_49 = arith.constant 0.000000e+00 : f32
    %86 = vector.broadcast %cst_49 : f32 to vector<2x1024xf32>
    %87 = arith.maximumf %85, %86 : vector<2x1024xf32>
    %cst_50 = arith.constant dense<0.000000e+00> : vector<2x64xf32>
    %88 = tpu.matmul %87, %0, %cst_50 {dimension_numbers = #tpu.dot_dimension_numbers<[1], [0], [0], [1], [0, 0, 1, 1], [], []>} : vector<2x1024xf32>, vector<1024x64xf32>, vector<2x64xf32> -> vector<2x64xf32>
    %cst_51 = arith.constant 6.250000e-02 : f32
    %89 = vector.broadcast %cst_51 : f32 to vector<2x64xf32>
    %90 = arith.mulf %88, %89 : vector<2x64xf32>
    %c64 = arith.constant 64 : index
    %c0_52 = arith.constant 0 : index
    %91 = vector.load %arg7[%c64, %c0_52] : memref<192x5xf32, #tpu.memory_space<vmem>>, vector<64x5xf32>
    %cst_53 = arith.constant dense<0.000000e+00> : vector<2x5xf32>
    %92 = tpu.matmul %90, %91, %cst_53 {dimension_numbers = #tpu.dot_dimension_numbers<[1], [0], [0], [1], [0, 0, 1, 1], [], []>} : vector<2x64xf32>, vector<64x5xf32>, vector<2x5xf32> -> vector<2x5xf32>
    %93 = arith.addf %54, %92 : vector<2x5xf32>
    %94 = vector.extract_strided_slice %9 {offsets = [0, 1536], sizes = [2, 768], strides = [1, 1]} : vector<2x2304xf32> to vector<2x768xf32>
    %95 = vector.extract_strided_slice %13 {offsets = [0, 512], sizes = [2, 256], strides = [1, 1]} : vector<2x768xf32> to vector<2x256xf32>
    %96 = tpu.concatenate %94, %95 in 1 : vector<2x768xf32>, vector<2x256xf32> -> vector<2x1024xf32>
    %cst_54 = arith.constant dense<0.000000e+00> : vector<1024xf32>
    %97 = vector.multi_reduction <add>, %96, %cst_54 [0] : vector<2x1024xf32> to vector<1024xf32>
    %98 = vector.shape_cast %97 : vector<1024xf32> to vector<1x1024xf32>
    %cst_55 = arith.constant dense<0.000000e+00> : vector<1x64xf32>
    %99 = tpu.matmul %98, %0, %cst_55 {dimension_numbers = #tpu.dot_dimension_numbers<[1], [0], [0], [1], [0, 0, 1, 1], [], []>} : vector<1x1024xf32>, vector<1024x64xf32>, vector<1x64xf32> -> vector<1x64xf32>
    %cst_56 = arith.constant 3.125000e-02 : f32
    %100 = vector.broadcast %cst_56 : f32 to vector<1x64xf32>
    %101 = arith.mulf %99, %100 : vector<1x64xf32>
    %cst_57 = arith.constant dense<0.000000e+00> : vector<1x1024xf32>
    %102 = tpu.matmul %101, %1, %cst_57 {dimension_numbers = #tpu.dot_dimension_numbers<[1], [0], [0], [1], [0, 0, 1, 1], [], []>} : vector<1x64xf32>, vector<64x1024xf32>, vector<1x1024xf32> -> vector<1x1024xf32>
    %103 = vector.broadcast %102 : vector<1x1024xf32> to vector<2x1024xf32>
    %104 = arith.subf %96, %103 : vector<2x1024xf32>
    %105 = arith.mulf %104, %104 : vector<2x1024xf32>
    %cst_58 = arith.constant dense<0.000000e+00> : vector<1024xf32>
    %106 = vector.multi_reduction <add>, %105, %cst_58 [0] : vector<2x1024xf32> to vector<1024xf32>
    %107 = vector.shape_cast %106 : vector<1024xf32> to vector<1x1024xf32>
    %cst_59 = arith.constant dense<0.000000e+00> : vector<1x64xf32>
    %108 = tpu.matmul %107, %0, %cst_59 {dimension_numbers = #tpu.dot_dimension_numbers<[1], [0], [0], [1], [0, 0, 1, 1], [], []>} : vector<1x1024xf32>, vector<1024x64xf32>, vector<1x64xf32> -> vector<1x64xf32>
    %cst_60 = arith.constant 3.125000e-02 : f32
    %109 = vector.broadcast %cst_60 : f32 to vector<1x64xf32>
    %110 = arith.mulf %108, %109 : vector<1x64xf32>
    %c2_61 = arith.constant 2 : index
    %c0_62 = arith.constant 0 : index
    %111 = vector.load %arg5[%c2_61, %c0_62] : memref<3x64xf32, #tpu.memory_space<vmem>>, vector<1x64xf32>
    %cst_63 = arith.constant 9.99999974E-6 : f32
    %112 = vector.broadcast %cst_63 : f32 to vector<1x64xf32>
    %113 = arith.addf %110, %112 : vector<1x64xf32>
    %114 = math.rsqrt %113 : vector<1x64xf32>
    %115 = arith.mulf %111, %114 : vector<1x64xf32>
    %c2_64 = arith.constant 2 : index
    %c0_65 = arith.constant 0 : index
    %116 = vector.load %arg6[%c2_64, %c0_65] : memref<3x64xf32, #tpu.memory_space<vmem>>, vector<1x64xf32>
    %117 = tpu.concatenate %115, %116 in 0 : vector<1x64xf32>, vector<1x64xf32> -> vector<2x64xf32>
    %cst_66 = arith.constant dense<0.000000e+00> : vector<2x1024xf32>
    %118 = tpu.matmul %117, %1, %cst_66 {dimension_numbers = #tpu.dot_dimension_numbers<[1], [0], [0], [1], [0, 0, 1, 1], [], []>} : vector<2x64xf32>, vector<64x1024xf32>, vector<2x1024xf32> -> vector<2x1024xf32>
    %119 = vector.extract_strided_slice %118 {offsets = [0, 0], sizes = [1, 1024], strides = [1, 1]} : vector<2x1024xf32> to vector<1x1024xf32>
    %120 = vector.broadcast %119 : vector<1x1024xf32> to vector<2x1024xf32>
    %121 = arith.mulf %104, %120 : vector<2x1024xf32>
    %122 = vector.extract_strided_slice %118 {offsets = [1, 0], sizes = [1, 1024], strides = [1, 1]} : vector<2x1024xf32> to vector<1x1024xf32>
    %123 = vector.broadcast %122 : vector<1x1024xf32> to vector<2x1024xf32>
    %124 = arith.addf %121, %123 : vector<2x1024xf32>
    %cst_67 = arith.constant 0.000000e+00 : f32
    %125 = vector.broadcast %cst_67 : f32 to vector<2x1024xf32>
    %126 = arith.maximumf %124, %125 : vector<2x1024xf32>
    %cst_68 = arith.constant dense<0.000000e+00> : vector<2x64xf32>
    %127 = tpu.matmul %126, %0, %cst_68 {dimension_numbers = #tpu.dot_dimension_numbers<[1], [0], [0], [1], [0, 0, 1, 1], [], []>} : vector<2x1024xf32>, vector<1024x64xf32>, vector<2x64xf32> -> vector<2x64xf32>
    %cst_69 = arith.constant 6.250000e-02 : f32
    %128 = vector.broadcast %cst_69 : f32 to vector<2x64xf32>
    %129 = arith.mulf %127, %128 : vector<2x64xf32>
    %c128 = arith.constant 128 : index
    %c0_70 = arith.constant 0 : index
    %130 = vector.load %arg7[%c128, %c0_70] : memref<192x5xf32, #tpu.memory_space<vmem>>, vector<64x5xf32>
    %cst_71 = arith.constant dense<0.000000e+00> : vector<2x5xf32>
    %131 = tpu.matmul %129, %130, %cst_71 {dimension_numbers = #tpu.dot_dimension_numbers<[1], [0], [0], [1], [0, 0, 1, 1], [], []>} : vector<2x64xf32>, vector<64x5xf32>, vector<2x5xf32> -> vector<2x5xf32>
    %132 = arith.addf %93, %131 : vector<2x5xf32>
    %cst_72 = arith.constant dense<0xFF800000> : vector<2xf32>
    %133 = vector.multi_reduction <maximumf>, %132, %cst_72 [1] : vector<2x5xf32> to vector<2xf32>
    %134 = vector.shape_cast %133 : vector<2xf32> to vector<2x1xf32>
    %135 = vector.broadcast %134 : vector<2x1xf32> to vector<2x5xf32>
    %136 = arith.subf %132, %135 : vector<2x5xf32>
    %137 = math.exp %136 : vector<2x5xf32>
    %cst_73 = arith.constant dense<0.000000e+00> : vector<2xf32>
    %138 = vector.multi_reduction <add>, %137, %cst_73 [1] : vector<2x5xf32> to vector<2xf32>
    %139 = vector.shape_cast %138 : vector<2xf32> to vector<2x1xf32>
    %140 = math.log %139 : vector<2x1xf32>
    %141 = vector.broadcast %140 : vector<2x1xf32> to vector<2x5xf32>
    %142 = arith.subf %136, %141 : vector<2x5xf32>
    %c0_74 = arith.constant 0 : index
    %c0_75 = arith.constant 0 : index
    %143 = vector.load %arg9[%c0_74, %c0_75] : memref<2x5xf32, #tpu.memory_space<vmem>>, vector<2x5xf32>
    tpu.vector_store %arg9[%c0_74, %c0_75], %142 {strides = array<i32>} : memref<2x5xf32, #tpu.memory_space<vmem>>, vector<2x5xf32>,
    return
  }
}

</mosaic_0001>

<llo_original>
// kernel: custom-call
$region0: #{custom-call}
  %s0 = inlined_call_operand.vmem [shape: s32[1024], index: 0, kind: output, shape index: {}]

// kernel: tile.14
$region0: #{tile.14}
  %s0 = inlined_call_operand.vmem [shape: s32[16,48], index: 0, kind: input, shape index: {}]
  %s1 = inlined_call_operand.vmem [shape: s32[768], index: 1, kind: output, shape index: {}]
  %s2 = smov 3
  %v3 = vld [vmem:[%s0] ss:$8 sm:%s2]
  %vm4 = vcmask 392192
  %5 = vst.msk [vmem:[%s1] ss:$3 sm:$0x3] %vm4, %v3
  %s6 = scalar_lea.vmem %s0, 5
  %s7 = smov 3
  %v8 = vld [vmem:[%s6] ss:$8 sm:%s7]
  %s9 = scalar_lea.vmem %s0, 5
  %s10 = smov 3
  %v11 = vld [vmem:[%s9] ss:$8 sm:%s10]
  %vm12 = vcmask 130048
  %v13 = vsel %vm12, %v11, %v8
  %14 = vrot.lane.b32.xlu0 %v13, 112
  %v15 = vpop.permute.xlu0 %14
  %vm16 = vcmask 261120
  %s17 = scalar_lea.vmem %s1, 2
  %18 = vst.msk [vmem:[%s17] ss:$3 sm:$0x3] %vm16, %v15
  %vm19 = vcmask 1048448
  %s20 = scalar_lea.vmem %s1, 1
  %21 = vst.msk [vmem:[%s20] ss:$3 sm:$0x3] %vm19, %v15
  %s22 = scalar_lea.vmem %s0, 2
  %s23 = smov 3
  %v24 = vld [vmem:[%s22] ss:$8 sm:%s23]
  %s25 = scalar_lea.vmem %s0, 2
  %s26 = smov 3
  %v27 = vld [vmem:[%s25] ss:$8 sm:%s26]
  %vm28 = vcmask 261120
  %v29 = vsel %vm28, %v27, %v24
  %30 = vrot.lane.b32.xlu0 %v29, 96
  %v31 = vpop.permute.xlu0 %30
  %vm32 = vcmask 130048
  %s33 = scalar_lea.vmem %s1, 1
  %34 = vst.msk [vmem:[%s33] ss:$3 sm:$0x3] %vm32, %v31
  %vm35 = vcmask 1048320
  %36 = vst.msk [vmem:[%s1] ss:$3 sm:$0x3] %vm35, %v31
  %s37 = scalar_lea.vmem %s0, 7
  %s38 = smov 3
  %v39 = vld [vmem:[%s37] ss:$8 sm:%s38]
  %40 = vrot.lane.b32.xlu0 %v39, 80
  %v41 = vpop.permute.xlu0 %40
  %vm42 = vcmask 1048192
  %s43 = scalar_lea.vmem %s1, 2
  %44 = vst.msk [vmem:[%s43] ss:$3 sm:$0x3] %vm42, %v41
  %s45 = scalar_lea.vmem %s0, 4
  %s46 = smov 3
  %v47 = vld [vmem:[%s45] ss:$8 sm:%s46]
  %48 = vrot.lane.b32.xlu0 %v47, 64
  %v49 = vpop.permute.xlu0 %48
  %vm50 = vcmask 916992
  %s51 = scalar_lea.vmem %s1, 1
  %52 = vst.msk [vmem:[%s51] ss:$3 sm:$0x3] %vm50, %v49
  %s53 = scalar_lea.vmem %s0, 1
  %s54 = smov 3
  %v55 = vld [vmem:[%s53] ss:$8 sm:%s54]
  %56 = vrot.lane.b32.xlu0 %v55, 48
  %v57 = vpop.permute.xlu0 %56
  %vm58 = vcmask 785792
  %59 = vst.msk [vmem:[%s1] ss:$3 sm:$0x3] %vm58, %v57
  %s60 = scalar_lea.vmem %s0, 6
  %s61 = smov 3
  %v62 = vld [vmem:[%s60] ss:$8 sm:%s61]
  %63 = vrot.lane.b32.xlu0 %v62, 32
  %v64 = vpop.permute.xlu0 %63
  %vm65 = vcmask 654592
  %s66 = scalar_lea.vmem %s1, 2
  %67 = vst.msk [vmem:[%s66] ss:$3 sm:$0x3] %vm65, %v64
  %s68 = scalar_lea.vmem %s0, 3
  %s69 = smov 3
  %v70 = vld [vmem:[%s68] ss:$8 sm:%s69]
  %71 = vrot.lane.b32.xlu0 %v70, 16
  %v72 = vpop.permute.xlu0 %71
  %vm73 = vcmask 523392
  %s74 = scalar_lea.vmem %s1, 1
  %75 = vst.msk [vmem:[%s74] ss:$3 sm:$0x3] %vm73, %v72

// kernel: inception_fuse_net.1
$region0: #{inception_fuse_net.1}
  #allocation0 [shape = 'u32[]', space=smem, size = 0x4, offset = 0x4, fixed_abs, tag = 'smem constant byte address 0x4 - core index']
  #allocation1 [shape = 'u32[72,128]{1,0:T(1,128)}', space=vmem, size = 0x9000, scoped, tag = 'internal scratch']
  %s0 = inlined_call_operand.vmem [shape: f32[3,2,112], index: 0, kind: input, shape index: {}]
  %s1 = inlined_call_operand.vmem [shape: f32[112,2304], index: 1, kind: input, shape index: {}]
  %s2 = inlined_call_operand.vmem [shape: f32[112,768], index: 2, kind: input, shape index: {}]
  %s3 = inlined_call_operand.vmem [shape: f32[1024,64], index: 3, kind: input, shape index: {}]
  %s4 = inlined_call_operand.vmem [shape: f32[64,1024], index: 4, kind: input, shape index: {}]
  %s5 = inlined_call_operand.vmem [shape: f32[3,64], index: 5, kind: input, shape index: {}]
  %s6 = inlined_call_operand.vmem [shape: f32[3,64], index: 6, kind: input, shape index: {}]
  %s7 = inlined_call_operand.vmem [shape: f32[192,5], index: 7, kind: input, shape index: {}]
  %s8 = inlined_call_operand.vmem [shape: f32[1,5], index: 8, kind: input, shape index: {}]
  %s9 = inlined_call_operand.hbm [shape: f32[2,5], index: 9, kind: output, shape index: {}]
  %s10 = sld [smem:[#allocation0]]
  $region46: #{inception_fuse_net.1} parent=0
    _
  %s12 = ssub.s32 1, %s10
  %s13 = scalar_select 0, %s12, %s10
  $region1: #{inception_fuse_net.1} parent=0
    #allocation2 [shape = 'u8[1024]{0}', space=vmem, size = 0x400, scoped, tag = 'output window, operand 0, single buffered']
    #allocation3 [shape = 's32[1]{0}', space=sflag, size = 0x4, scoped, tag = 'scoped memory for inception_fuse_net.1']
    %14 = vsyncpa [#allocation3], 0
    // Predicated region
    $region2: #{inception_fuse_net.1} parent=1 // pred_check
      _
    $region3: #{inception_fuse_net.1} parent=1 // pred_check_branch
      %16 = sbr.rel (0) target = $region5
    $region4: #{inception_fuse_net.1} parent=1 // pred_region
      _
    $region5: #{inception_fuse_net.1} parent=1 // pred_fallthru
      _
    // Predicated region
    $region6: #{inception_fuse_net.1} parent=1 // pred_check
      _
    $region7: #{inception_fuse_net.1} parent=1 // pred_check_branch
      %18 = sbr.rel (0) target = $region9
    $region8: #{inception_fuse_net.1} parent=1 // pred_region
      _
    $region9: #{inception_fuse_net.1} parent=1 // pred_fallthru
      _
    // Predicated region
    $region10: #{inception_fuse_net.1} parent=1 // pred_check
      _
    $region11: #{inception_fuse_net.1} parent=1 // pred_check_branch
      %20 = sbr.rel (0) target = $region13
    $region12: #{inception_fuse_net.1} parent=1 // pred_region
      _
    $region13: #{inception_fuse_net.1} parent=1 // pred_fallthru
      _
    // Predicated region
    $region14: #{inception_fuse_net.1} parent=1 // pred_check
      _
    $region15: #{inception_fuse_net.1} parent=1 // pred_check_branch
      %22 = sbr.rel (0) target = $region17
    $region16: #{inception_fuse_net.1} parent=1 // pred_region
      _
    $region17: #{inception_fuse_net.1} parent=1 // pred_fallthru
      _
    // Predicated region
    $region18: #{inception_fuse_net.1} parent=1 // pred_check
      _
    $region19: #{inception_fuse_net.1} parent=1 // pred_check_branch
      %24 = sbr.rel (0) target = $region21
    $region20: #{inception_fuse_net.1} parent=1 // pred_region
      _
    $region21: #{inception_fuse_net.1} parent=1 // pred_fallthru
      _
    // Predicated region
    $region22: #{inception_fuse_net.1} parent=1 // pred_check
      _
    $region23: #{inception_fuse_net.1} parent=1 // pred_check_branch
      %26 = sbr.rel (0) target = $region25
    $region24: #{inception_fuse_net.1} parent=1 // pred_region
      _
    $region25: #{inception_fuse_net.1} parent=1 // pred_fallthru
      _
    // Predicated region
    $region26: #{inception_fuse_net.1} parent=1 // pred_check
      _
    $region27: #{inception_fuse_net.1} parent=1 // pred_check_branch
      %28 = sbr.rel (0) target = $region29
    $region28: #{inception_fuse_net.1} parent=1 // pred_region
      _
    $region29: #{inception_fuse_net.1} parent=1 // pred_fallthru
      _
    // Predicated region
    $region30: #{inception_fuse_net.1} parent=1 // pred_check
      _
    $region31: #{inception_fuse_net.1} parent=1 // pred_check_branch
      %30 = sbr.rel (0) target = $region33
    $region32: #{inception_fuse_net.1} parent=1 // pred_region
      _
    $region33: #{inception_fuse_net.1} parent=1 // pred_fallthru
      _
    // Predicated region
    $region34: #{inception_fuse_net.1} parent=1 // pred_check
      _
    $region35: #{inception_fuse_net.1} parent=1 // pred_check_branch
      %32 = sbr.rel (0) target = $region37
    $region36: #{inception_fuse_net.1} parent=1 // pred_region
      _
    $region37: #{inception_fuse_net.1} parent=1 // pred_fallthru
      _
    %v33 = vld [vmem:[%s3] sm:$0xff]
    %v34 = vld [vmem:[%s3 + $0x8] sm:$0xff]
    %v35 = vld [vmem:[%s3 + $0x10] sm:$0xff]
    %v36 = vld [vmem:[%s3 + $0x18] sm:$0xff]
    %v37 = vld [vmem:[%s3 + $0x20] sm:$0xff]
    %v38 = vld [vmem:[%s3 + $0x28] sm:$0xff]
    %v39 = vld [vmem:[%s3 + $0x30] sm:$0xff]
    %v40 = vld [vmem:[%s3 + $0x38] sm:$0xff]
    %v41 = vld [vmem:[%s3 + $0x40] sm:$0xff]
    %v42 = vld [vmem:[%s3 + $0x48] sm:$0xff]
    %v43 = vld [vmem:[%s3 + $0x50] sm:$0xff]
    %v44 = vld [vmem:[%s3 + $0x58] sm:$0xff]
    %v45 = vld [vmem:[%s3 + $0x60] sm:$0xff]
    %v46 = vld [vmem:[%s3 + $0x68] sm:$0xff]
    %v47 = vld [vmem:[%s3 + $0x70] sm:$0xff]
    %v48 = vld [vmem:[%s3 + $0x78] sm:$0xff]
    %v49 = vld [vmem:[%s3 + $0x80] sm:$0xff]
    %v50 = vld [vmem:[%s3 + $0x88] sm:$0xff]
    %v51 = vld [vmem:[%s3 + $0x90] sm:$0xff]
    %v52 = vld [vmem:[%s3 + $0x98] sm:$0xff]
    %v53 = vld [vmem:[%s3 + $0xa0] sm:$0xff]
    %v54 = vld [vmem:[%s3 + $0xa8] sm:$0xff]
    %v55 = vld [vmem:[%s3 + $0xb0] sm:$0xff]
    %v56 = vld [vmem:[%s3 + $0xb8] sm:$0xff]
    %v57 = vld [vmem:[%s3 + $0xc0] sm:$0xff]
    %v58 = vld [vmem:[%s3 + $0xc8] sm:$0xff]
    %v59 = vld [vmem:[%s3 + $0xd0] sm:$0xff]
    %v60 = vld [vmem:[%s3 + $0xd8] sm:$0xff]
    %v61 = vld [vmem:[%s3 + $0xe0] sm:$0xff]
    %v62 = vld [vmem:[%s3 + $0xe8] sm:$0xff]
    %v63 = vld [vmem:[%s3 + $0xf0] sm:$0xff]
    %v64 = vld [vmem:[%s3 + $0xf8] sm:$0xff]
    %v65 = vld [vmem:[%s3 + $0x100] sm:$0xff]
    %v66 = vld [vmem:[%s3 + $0x108] sm:$0xff]
    %v67 = vld [vmem:[%s3 + $0x110] sm:$0xff]
    %v68 = vld [vmem:[%s3 + $0x118] sm:$0xff]
    %v69 = vld [vmem:[%s3 + $0x120] sm:$0xff]
    %v70 = vld [vmem:[%s3 + $0x128] sm:$0xff]
    %v71 = vld [vmem:[%s3 + $0x130] sm:$0xff]
    %v72 = vld [vmem:[%s3 + $0x138] sm:$0xff]
    %v73 = vld [vmem:[%s3 + $0x140] sm:$0xff]
    %v74 = vld [vmem:[%s3 + $0x148] sm:$0xff]
    %v75 = vld [vmem:[%s3 + $0x150] sm:$0xff]
    %v76 = vld [vmem:[%s3 + $0x158] sm:$0xff]
    %v77 = vld [vmem:[%s3 + $0x160] sm:$0xff]
    %v78 = vld [vmem:[%s3 + $0x168] sm:$0xff]
    %v79 = vld [vmem:[%s3 + $0x170] sm:$0xff]
    %v80 = vld [vmem:[%s3 + $0x178] sm:$0xff]
    %v81 = vld [vmem:[%s3 + $0x180] sm:$0xff]
    %v82 = vld [vmem:[%s3 + $0x188] sm:$0xff]
    %v83 = vld [vmem:[%s3 + $0x190] sm:$0xff]
    %v84 = vld [vmem:[%s3 + $0x198] sm:$0xff]
    %v85 = vld [vmem:[%s3 + $0x1a0] sm:$0xff]
    %v86 = vld [vmem:[%s3 + $0x1a8] sm:$0xff]
    %v87 = vld [vmem:[%s3 + $0x1b0] sm:$0xff]
    %v88 = vld [vmem:[%s3 + $0x1b8] sm:$0xff]
    %v89 = vld [vmem:[%s3 + $0x1c0] sm:$0xff]
    %v90 = vld [vmem:[%s3 + $0x1c8] sm:$0xff]
    %v91 = vld [vmem:[%s3 + $0x1d0] sm:$0xff]
    %v92 = vld [vmem:[%s3 + $0x1d8] sm:$0xff]
    %v93 = vld [vmem:[%s3 + $0x1e0] sm:$0xff]
    %v94 = vld [vmem:[%s3 + $0x1e8] sm:$0xff]
    %v95 = vld [vmem:[%s3 + $0x1f0] sm:$0xff]
    %v96 = vld [vmem:[%s3 + $0x1f8] sm:$0xff]
    %v97 = vld [vmem:[%s3 + $0x200] sm:$0xff]
    %v98 = vld [vmem:[%s3 + $0x208] sm:$0xff]
    %v99 = vld [vmem:[%s3 + $0x210] sm:$0xff]
    %v100 = vld [vmem:[%s3 + $0x218] sm:$0xff]
    %v101 = vld [vmem:[%s3 + $0x220] sm:$0xff]
    %v102 = vld [vmem:[%s3 + $0x228] sm:$0xff]
    %v103 = vld [vmem:[%s3 + $0x230] sm:$0xff]
    %v104 = vld [vmem:[%s3 + $0x238] sm:$0xff]
    %v105 = vld [vmem:[%s3 + $0x240] sm:$0xff]
    %v106 = vld [vmem:[%s3 + $0x248] sm:$0xff]
    %v107 = vld [vmem:[%s3 + $0x250] sm:$0xff]
    %v108 = vld [vmem:[%s3 + $0x258] sm:$0xff]
    %v109 = vld [vmem:[%s3 + $0x260] sm:$0xff]
    %v110 = vld [vmem:[%s3 + $0x268] sm:$0xff]
    %v111 = vld [vmem:[%s3 + $0x270] sm:$0xff]
    %v112 = vld [vmem:[%s3 + $0x278] sm:$0xff]
    %v113 = vld [vmem:[%s3 + $0x280] sm:$0xff]
    %v114 = vld [vmem:[%s3 + $0x288] sm:$0xff]
    %v115 = vld [vmem:[%s3 + $0x290] sm:$0xff]
    %v116 = vld [vmem:[%s3 + $0x298] sm:$0xff]
    %v117 = vld [vmem:[%s3 + $0x2a0] sm:$0xff]
    %v118 = vld [vmem:[%s3 + $0x2a8] sm:$0xff]
    %v119 = vld [vmem:[%s3 + $0x2b0] sm:$0xff]
    %v120 = vld [vmem:[%s3 + $0x2b8] sm:$0xff]
    %v121 = vld [vmem:[%s3 + $0x2c0] sm:$0xff]
    %v122 = vld [vmem:[%s3 + $0x2c8] sm:$0xff]
    %v123 = vld [vmem:[%s3 + $0x2d0] sm:$0xff]
    %v124 = vld [vmem:[%s3 + $0x2d8] sm:$0xff]
    %v125 = vld [vmem:[%s3 + $0x2e0] sm:$0xff]
    %v126 = vld [vmem:[%s3 + $0x2e8] sm:$0xff]
    %v127 = vld [vmem:[%s3 + $0x2f0] sm:$0xff]
    %v128 = vld [vmem:[%s3 + $0x2f8] sm:$0xff]
    %v129 = vld [vmem:[%s3 + $0x300] sm:$0xff]
    %v130 = vld [vmem:[%s3 + $0x308] sm:$0xff]
    %v131 = vld [vmem:[%s3 + $0x310] sm:$0xff]
    %v132 = vld [vmem:[%s3 + $0x318] sm:$0xff]
    %v133 = vld [vmem:[%s3 + $0x320] sm:$0xff]
    %v134 = vld [vmem:[%s3 + $0x328] sm:$0xff]
    %v135 = vld [vmem:[%s3 + $0x330] sm:$0xff]
    %v136 = vld [vmem:[%s3 + $0x338] sm:$0xff]
    %v137 = vld [vmem:[%s3 + $0x340] sm:$0xff]
    %v138 = vld [vmem:[%s3 + $0x348] sm:$0xff]
    %v139 = vld [vmem:[%s3 + $0x350] sm:$0xff]
    %v140 = vld [vmem:[%s3 + $0x358] sm:$0xff]
    %v141 = vld [vmem:[%s3 + $0x360] sm:$0xff]
    %v142 = vld [vmem:[%s3 + $0x368] sm:$0xff]
    %v143 = vld [vmem:[%s3 + $0x370] sm:$0xff]
    %v144 = vld [vmem:[%s3 + $0x378] sm:$0xff]
    %v145 = vld [vmem:[%s3 + $0x380] sm:$0xff]
    %v146 = vld [vmem:[%s3 + $0x388] sm:$0xff]
    %v147 = vld [vmem:[%s3 + $0x390] sm:$0xff]
    %v148 = vld [vmem:[%s3 + $0x398] sm:$0xff]
    %v149 = vld [vmem:[%s3 + $0x3a0] sm:$0xff]
    %v150 = vld [vmem:[%s3 + $0x3a8] sm:$0xff]
    %v151 = vld [vmem:[%s3 + $0x3b0] sm:$0xff]
    %v152 = vld [vmem:[%s3 + $0x3b8] sm:$0xff]
    %v153 = vld [vmem:[%s3 + $0x3c0] sm:$0xff]
    %v154 = vld [vmem:[%s3 + $0x3c8] sm:$0xff]
    %v155 = vld [vmem:[%s3 + $0x3d0] sm:$0xff]
    %v156 = vld [vmem:[%s3 + $0x3d8] sm:$0xff]
    %v157 = vld [vmem:[%s3 + $0x3e0] sm:$0xff]
    %v158 = vld [vmem:[%s3 + $0x3e8] sm:$0xff]
    %v159 = vld [vmem:[%s3 + $0x3f0] sm:$0xff]
    %v160 = vld [vmem:[%s3 + $0x3f8] sm:$0xff]
    %v161 = vld [vmem:[%s4] sm:$0xff]
    %v162 = vld [vmem:[%s4 + $0x8] sm:$0xff]
    %v163 = vld [vmem:[%s4 + $0x10] sm:$0xff]
    %v164 = vld [vmem:[%s4 + $0x18] sm:$0xff]
    %v165 = vld [vmem:[%s4 + $0x20] sm:$0xff]
    %v166 = vld [vmem:[%s4 + $0x28] sm:$0xff]
    %v167 = vld [vmem:[%s4 + $0x30] sm:$0xff]
    %v168 = vld [vmem:[%s4 + $0x38] sm:$0xff]
    %v169 = vld [vmem:[%s4 + $0x40] sm:$0xff]
    %v170 = vld [vmem:[%s4 + $0x48] sm:$0xff]
    %v171 = vld [vmem:[%s4 + $0x50] sm:$0xff]
    %v172 = vld [vmem:[%s4 + $0x58] sm:$0xff]
    %v173 = vld [vmem:[%s4 + $0x60] sm:$0xff]
    %v174 = vld [vmem:[%s4 + $0x68] sm:$0xff]
    %v175 = vld [vmem:[%s4 + $0x70] sm:$0xff]
    %v176 = vld [vmem:[%s4 + $0x78] sm:$0xff]
    %v177 = vld [vmem:[%s4 + $0x80] sm:$0xff]
    %v178 = vld [vmem:[%s4 + $0x88] sm:$0xff]
    %v179 = vld [vmem:[%s4 + $0x90] sm:$0xff]
    %v180 = vld [vmem:[%s4 + $0x98] sm:$0xff]
    %v181 = vld [vmem:[%s4 + $0xa0] sm:$0xff]
    %v182 = vld [vmem:[%s4 + $0xa8] sm:$0xff]
    %v183 = vld [vmem:[%s4 + $0xb0] sm:$0xff]
    %v184 = vld [vmem:[%s4 + $0xb8] sm:$0xff]
    %v185 = vld [vmem:[%s4 + $0xc0] sm:$0xff]
    %v186 = vld [vmem:[%s4 + $0xc8] sm:$0xff]
    %v187 = vld [vmem:[%s4 + $0xd0] sm:$0xff]
    %v188 = vld [vmem:[%s4 + $0xd8] sm:$0xff]
    %v189 = vld [vmem:[%s4 + $0xe0] sm:$0xff]
    %v190 = vld [vmem:[%s4 + $0xe8] sm:$0xff]
    %v191 = vld [vmem:[%s4 + $0xf0] sm:$0xff]
    %v192 = vld [vmem:[%s4 + $0xf8] sm:$0xff]
    %v193 = vld [vmem:[%s4 + $0x100] sm:$0xff]
    %v194 = vld [vmem:[%s4 + $0x108] sm:$0xff]
    %v195 = vld [vmem:[%s4 + $0x110] sm:$0xff]
    %v196 = vld [vmem:[%s4 + $0x118] sm:$0xff]
    %v197 = vld [vmem:[%s4 + $0x120] sm:$0xff]
    %v198 = vld [vmem:[%s4 + $0x128] sm:$0xff]
    %v199 = vld [vmem:[%s4 + $0x130] sm:$0xff]
    %v200 = vld [vmem:[%s4 + $0x138] sm:$0xff]
    %v201 = vld [vmem:[%s4 + $0x140] sm:$0xff]
    %v202 = vld [vmem:[%s4 + $0x148] sm:$0xff]
    %v203 = vld [vmem:[%s4 + $0x150] sm:$0xff]
    %v204 = vld [vmem:[%s4 + $0x158] sm:$0xff]
    %v205 = vld [vmem:[%s4 + $0x160] sm:$0xff]
    %v206 = vld [vmem:[%s4 + $0x168] sm:$0xff]
    %v207 = vld [vmem:[%s4 + $0x170] sm:$0xff]
    %v208 = vld [vmem:[%s4 + $0x178] sm:$0xff]
    %v209 = vld [vmem:[%s4 + $0x180] sm:$0xff]
    %v210 = vld [vmem:[%s4 + $0x188] sm:$0xff]
    %v211 = vld [vmem:[%s4 + $0x190] sm:$0xff]
    %v212 = vld [vmem:[%s4 + $0x198] sm:$0xff]
    %v213 = vld [vmem:[%s4 + $0x1a0] sm:$0xff]
    %v214 = vld [vmem:[%s4 + $0x1a8] sm:$0xff]
    %v215 = vld [vmem:[%s4 + $0x1b0] sm:$0xff]
    %v216 = vld [vmem:[%s4 + $0x1b8] sm:$0xff]
    %v217 = vld [vmem:[%s4 + $0x1c0] sm:$0xff]
    %v218 = vld [vmem:[%s4 + $0x1c8] sm:$0xff]
    %v219 = vld [vmem:[%s4 + $0x1d0] sm:$0xff]
    %v220 = vld [vmem:[%s4 + $0x1d8] sm:$0xff]
    %v221 = vld [vmem:[%s4 + $0x1e0] sm:$0xff]
    %v222 = vld [vmem:[%s4 + $0x1e8] sm:$0xff]
    %v223 = vld [vmem:[%s4 + $0x1f0] sm:$0xff]
    %v224 = vld [vmem:[%s4 + $0x1f8] sm:$0xff]
    %v225 = vld [vmem:[%s0] sm:$0x3]
    %s226 = scalar_lea.vmem %s0, 2
    %v227 = vld [vmem:[%s226] sm:$0x3]
    %s228 = scalar_lea.vmem %s0, 4
    %v229 = vld [vmem:[%s228] sm:$0x3]
    %v230 = vld [vmem:[%s1] sm:$0xff]
    %v231 = vld [vmem:[%s1 + $0x8] sm:$0xff]
    %v232 = vld [vmem:[%s1 + $0x10] sm:$0xff]
    %v233 = vld [vmem:[%s1 + $0x18] sm:$0xff]
    %v234 = vld [vmem:[%s1 + $0x20] sm:$0xff]
    %v235 = vld [vmem:[%s1 + $0x28] sm:$0xff]
    %v236 = vld [vmem:[%s1 + $0x30] sm:$0xff]
    %v237 = vld [vmem:[%s1 + $0x38] sm:$0xff]
    %v238 = vld [vmem:[%s1 + $0x40] sm:$0xff]
    %v239 = vld [vmem:[%s1 + $0x48] sm:$0xff]
    %v240 = vld [vmem:[%s1 + $0x50] sm:$0xff]
    %v241 = vld [vmem:[%s1 + $0x58] sm:$0xff]
    %v242 = vld [vmem:[%s1 + $0x60] sm:$0xff]
    %v243 = vld [vmem:[%s1 + $0x68] sm:$0xff]
    %v244 = vld [vmem:[%s1 + $0x70] sm:$0xff]
    %v245 = vld [vmem:[%s1 + $0x78] sm:$0xff]
    %v246 = vld [vmem:[%s1 + $0x80] sm:$0xff]
    %v247 = vld [vmem:[%s1 + $0x88] sm:$0xff]
    %v248 = vld [vmem:[%s1 + $0x90] sm:$0xff]
    %v249 = vld [vmem:[%s1 + $0x98] sm:$0xff]
    %v250 = vld [vmem:[%s1 + $0xa0] sm:$0xff]
    %v251 = vld [vmem:[%s1 + $0xa8] sm:$0xff]
    %v252 = vld [vmem:[%s1 + $0xb0] sm:$0xff]
    %v253 = vld [vmem:[%s1 + $0xb8] sm:$0xff]
    %v254 = vld [vmem:[%s1 + $0xc0] sm:$0xff]
    %v255 = vld [vmem:[%s1 + $0xc8] sm:$0xff]
    %v256 = vld [vmem:[%s1 + $0xd0] sm:$0xff]
    %v257 = vld [vmem:[%s1 + $0xd8] sm:$0xff]
    %v258 = vld [vmem:[%s1 + $0xe0] sm:$0xff]
    %v259 = vld [vmem:[%s1 + $0xe8] sm:$0xff]
    %v260 = vld [vmem:[%s1 + $0xf0] sm:$0xff]
    %v261 = vld [vmem:[%s1 + $0xf8] sm:$0xff]
    %v262 = vld [vmem:[%s1 + $0x100] sm:$0xff]
    %v263 = vld [vmem:[%s1 + $0x108] sm:$0xff]
    %v264 = vld [vmem:[%s1 + $0x110] sm:$0xff]
    %v265 = vld [vmem:[%s1 + $0x118] sm:$0xff]
    %v266 = vld [vmem:[%s1 + $0x120] sm:$0xff]
    %v267 = vld [vmem:[%s1 + $0x128] sm:$0xff]
    %v268 = vld [vmem:[%s1 + $0x130] sm:$0xff]
    %v269 = vld [vmem:[%s1 + $0x138] sm:$0xff]
    %v270 = vld [vmem:[%s1 + $0x140] sm:$0xff]
    %v271 = vld [vmem:[%s1 + $0x148] sm:$0xff]
    %v272 = vld [vmem:[%s1 + $0x150] sm:$0xff]
    %v273 = vld [vmem:[%s1 + $0x158] sm:$0xff]
    %v274 = vld [vmem:[%s1 + $0x160] sm:$0xff]
    %v275 = vld [vmem:[%s1 + $0x168] sm:$0xff]
    %v276 = vld [vmem:[%s1 + $0x170] sm:$0xff]
    %v277 = vld [vmem:[%s1 + $0x178] sm:$0xff]
    %v278 = vld [vmem:[%s1 + $0x180] sm:$0xff]
    %v279 = vld [vmem:[%s1 + $0x188] sm:$0xff]
    %v280 = vld [vmem:[%s1 + $0x190] sm:$0xff]
    %v281 = vld [vmem:[%s1 + $0x198] sm:$0xff]
    %v282 = vld [vmem:[%s1 + $0x1a0] sm:$0xff]
    %v283 = vld [vmem:[%s1 + $0x1a8] sm:$0xff]
    %v284 = vld [vmem:[%s1 + $0x1b0] sm:$0xff]
    %v285 = vld [vmem:[%s1 + $0x1b8] sm:$0xff]
    %v286 = vld [vmem:[%s1 + $0x1c0] sm:$0xff]
    %v287 = vld [vmem:[%s1 + $0x1c8] sm:$0xff]
    %v288 = vld [vmem:[%s1 + $0x1d0] sm:$0xff]
    %v289 = vld [vmem:[%s1 + $0x1d8] sm:$0xff]
    %v290 = vld [vmem:[%s1 + $0x1e0] sm:$0xff]
    %v291 = vld [vmem:[%s1 + $0x1e8] sm:$0xff]
    %v292 = vld [vmem:[%s1 + $0x1f0] sm:$0xff]
    %v293 = vld [vmem:[%s1 + $0x1f8] sm:$0xff]
    %v294 = vld [vmem:[%s1 + $0x200] sm:$0xff]
    %v295 = vld [vmem:[%s1 + $0x208] sm:$0xff]
    %v296 = vld [vmem:[%s1 + $0x210] sm:$0xff]
    %v297 = vld [vmem:[%s1 + $0x218] sm:$0xff]
    %v298 = vld [vmem:[%s1 + $0x220] sm:$0xff]
    %v299 = vld [vmem:[%s1 + $0x228] sm:$0xff]
    %v300 = vld [vmem:[%s1 + $0x230] sm:$0xff]
    %v301 = vld [vmem:[%s1 + $0x238] sm:$0xff]
    %v302 = vld [vmem:[%s1 + $0x240] sm:$0xff]
    %v303 = vld [vmem:[%s1 + $0x248] sm:$0xff]
    %v304 = vld [vmem:[%s1 + $0x250] sm:$0xff]
    %v305 = vld [vmem:[%s1 + $0x258] sm:$0xff]
    %v306 = vld [vmem:[%s1 + $0x260] sm:$0xff]
    %v307 = vld [vmem:[%s1 + $0x268] sm:$0xff]
    %v308 = vld [vmem:[%s1 + $0x270] sm:$0xff]
    %v309 = vld [vmem:[%s1 + $0x278] sm:$0xff]
    %v310 = vld [vmem:[%s1 + $0x280] sm:$0xff]
    %v311 = vld [vmem:[%s1 + $0x288] sm:$0xff]
    %v312 = vld [vmem:[%s1 + $0x290] sm:$0xff]
    %v313 = vld [vmem:[%s1 + $0x298] sm:$0xff]
    %v314 = vld [vmem:[%s1 + $0x2a0] sm:$0xff]
    %v315 = vld [vmem:[%s1 + $0x2a8] sm:$0xff]
    %v316 = vld [vmem:[%s1 + $0x2b0] sm:$0xff]
    %v317 = vld [vmem:[%s1 + $0x2b8] sm:$0xff]
    %v318 = vld [vmem:[%s1 + $0x2c0] sm:$0xff]
    %v319 = vld [vmem:[%s1 + $0x2c8] sm:$0xff]
    %v320 = vld [vmem:[%s1 + $0x2d0] sm:$0xff]
    %v321 = vld [vmem:[%s1 + $0x2d8] sm:$0xff]
    %v322 = vld [vmem:[%s1 + $0x2e0] sm:$0xff]
    %v323 = vld [vmem:[%s1 + $0x2e8] sm:$0xff]
    %v324 = vld [vmem:[%s1 + $0x2f0] sm:$0xff]
    %v325 = vld [vmem:[%s1 + $0x2f8] sm:$0xff]
    %v326 = vld [vmem:[%s1 + $0x300] sm:$0xff]
    %v327 = vld [vmem:[%s1 + $0x308] sm:$0xff]
    %v328 = vld [vmem:[%s1 + $0x310] sm:$0xff]
    %v329 = vld [vmem:[%s1 + $0x318] sm:$0xff]
    %v330 = vld [vmem:[%s1 + $0x320] sm:$0xff]
    %v331 = vld [vmem:[%s1 + $0x328] sm:$0xff]
    %v332 = vld [vmem:[%s1 + $0x330] sm:$0xff]
    %v333 = vld [vmem:[%s1 + $0x338] sm:$0xff]
    %v334 = vld [vmem:[%s1 + $0x340] sm:$0xff]
    %v335 = vld [vmem:[%s1 + $0x348] sm:$0xff]
    %v336 = vld [vmem:[%s1 + $0x350] sm:$0xff]
    %v337 = vld [vmem:[%s1 + $0x358] sm:$0xff]
    %v338 = vld [vmem:[%s1 + $0x360] sm:$0xff]
    %v339 = vld [vmem:[%s1 + $0x368] sm:$0xff]
    %v340 = vld [vmem:[%s1 + $0x370] sm:$0xff]
    %v341 = vld [vmem:[%s1 + $0x378] sm:$0xff]
    %v342 = vld [vmem:[%s1 + $0x380] sm:$0xff]
    %v343 = vld [vmem:[%s1 + $0x388] sm:$0xff]
    %v344 = vld [vmem:[%s1 + $0x390] sm:$0xff]
    %v345 = vld [vmem:[%s1 + $0x398] sm:$0xff]
    %v346 = vld [vmem:[%s1 + $0x3a0] sm:$0xff]
    %v347 = vld [vmem:[%s1 + $0x3a8] sm:$0xff]
    %v348 = vld [vmem:[%s1 + $0x3b0] sm:$0xff]
    %v349 = vld [vmem:[%s1 + $0x3b8] sm:$0xff]
    %v350 = vld [vmem:[%s1 + $0x3c0] sm:$0xff]
    %v351 = vld [vmem:[%s1 + $0x3c8] sm:$0xff]
    %v352 = vld [vmem:[%s1 + $0x3d0] sm:$0xff]
    %v353 = vld [vmem:[%s1 + $0x3d8] sm:$0xff]
    %v354 = vld [vmem:[%s1 + $0x3e0] sm:$0xff]
    %v355 = vld [vmem:[%s1 + $0x3e8] sm:$0xff]
    %v356 = vld [vmem:[%s1 + $0x3f0] sm:$0xff]
    %v357 = vld [vmem:[%s1 + $0x3f8] sm:$0xff]
    %v358 = vld [vmem:[%s1 + $0x400] sm:$0xff]
    %v359 = vld [vmem:[%s1 + $0x408] sm:$0xff]
    %v360 = vld [vmem:[%s1 + $0x410] sm:$0xff]
    %v361 = vld [vmem:[%s1 + $0x418] sm:$0xff]
    %v362 = vld [vmem:[%s1 + $0x420] sm:$0xff]
    %v363 = vld [vmem:[%s1 + $0x428] sm:$0xff]
    %v364 = vld [vmem:[%s1 + $0x430] sm:$0xff]
    %v365 = vld [vmem:[%s1 + $0x438] sm:$0xff]
    %v366 = vld [vmem:[%s1 + $0x440] sm:$0xff]
    %v367 = vld [vmem:[%s1 + $0x448] sm:$0xff]
    %v368 = vld [vmem:[%s1 + $0x450] sm:$0xff]
    %v369 = vld [vmem:[%s1 + $0x458] sm:$0xff]
    %v370 = vld [vmem:[%s1 + $0x460] sm:$0xff]
    %v371 = vld [vmem:[%s1 + $0x468] sm:$0xff]
    %v372 = vld [vmem:[%s1 + $0x470] sm:$0xff]
    %v373 = vld [vmem:[%s1 + $0x478] sm:$0xff]
    %v374 = vld [vmem:[%s1 + $0x480] sm:$0xff]
    %v375 = vld [vmem:[%s1 + $0x488] sm:$0xff]
    %v376 = vld [vmem:[%s1 + $0x490] sm:$0xff]
    %v377 = vld [vmem:[%s1 + $0x498] sm:$0xff]
    %v378 = vld [vmem:[%s1 + $0x4a0] sm:$0xff]
    %v379 = vld [vmem:[%s1 + $0x4a8] sm:$0xff]
    %v380 = vld [vmem:[%s1 + $0x4b0] sm:$0xff]
    %v381 = vld [vmem:[%s1 + $0x4b8] sm:$0xff]
    %v382 = vld [vmem:[%s1 + $0x4c0] sm:$0xff]
    %v383 = vld [vmem:[%s1 + $0x4c8] sm:$0xff]
    %v384 = vld [vmem:[%s1 + $0x4d0] sm:$0xff]
    %v385 = vld [vmem:[%s1 + $0x4d8] sm:$0xff]
    %v386 = vld [vmem:[%s1 + $0x4e0] sm:$0xff]
    %v387 = vld [vmem:[%s1 + $0x4e8] sm:$0xff]
    %v388 = vld [vmem:[%s1 + $0x4f0] sm:$0xff]
    %v389 = vld [vmem:[%s1 + $0x4f8] sm:$0xff]
    %v390 = vld [vmem:[%s1 + $0x500] sm:$0xff]
    %v391 = vld [vmem:[%s1 + $0x508] sm:$0xff]
    %v392 = vld [vmem:[%s1 + $0x510] sm:$0xff]
    %v393 = vld [vmem:[%s1 + $0x518] sm:$0xff]
    %v394 = vld [vmem:[%s1 + $0x520] sm:$0xff]
    %v395 = vld [vmem:[%s1 + $0x528] sm:$0xff]
    %v396 = vld [vmem:[%s1 + $0x530] sm:$0xff]
    %v397 = vld [vmem:[%s1 + $0x538] sm:$0xff]
    %v398 = vld [vmem:[%s1 + $0x540] sm:$0xff]
    %v399 = vld [vmem:[%s1 + $0x548] sm:$0xff]
    %v400 = vld [vmem:[%s1 + $0x550] sm:$0xff]
    %v401 = vld [vmem:[%s1 + $0x558] sm:$0xff]
    %v402 = vld [vmem:[%s1 + $0x560] sm:$0xff]
    %v403 = vld [vmem:[%s1 + $0x568] sm:$0xff]
    %v404 = vld [vmem:[%s1 + $0x570] sm:$0xff]
    %v405 = vld [vmem:[%s1 + $0x578] sm:$0xff]
    %v406 = vld [vmem:[%s1 + $0x580] sm:$0xff]
    %v407 = vld [vmem:[%s1 + $0x588] sm:$0xff]
    %v408 = vld [vmem:[%s1 + $0x590] sm:$0xff]
    %v409 = vld [vmem:[%s1 + $0x598] sm:$0xff]
    %v410 = vld [vmem:[%s1 + $0x5a0] sm:$0xff]
    %v411 = vld [vmem:[%s1 + $0x5a8] sm:$0xff]
    %v412 = vld [vmem:[%s1 + $0x5b0] sm:$0xff]
    %v413 = vld [vmem:[%s1 + $0x5b8] sm:$0xff]
    %v414 = vld [vmem:[%s1 + $0x5c0] sm:$0xff]
    %v415 = vld [vmem:[%s1 + $0x5c8] sm:$0xff]
    %v416 = vld [vmem:[%s1 + $0x5d0] sm:$0xff]
    %v417 = vld [vmem:[%s1 + $0x5d8] sm:$0xff]
    %v418 = vld [vmem:[%s1 + $0x5e0] sm:$0xff]
    %v419 = vld [vmem:[%s1 + $0x5e8] sm:$0xff]
    %v420 = vld [vmem:[%s1 + $0x5f0] sm:$0xff]
    %v421 = vld [vmem:[%s1 + $0x5f8] sm:$0xff]
    %v422 = vld [vmem:[%s1 + $0x600] sm:$0xff]
    %v423 = vld [vmem:[%s1 + $0x608] sm:$0xff]
    %v424 = vld [vmem:[%s1 + $0x610] sm:$0xff]
    %v425 = vld [vmem:[%s1 + $0x618] sm:$0xff]
    %v426 = vld [vmem:[%s1 + $0x620] sm:$0xff]
    %v427 = vld [vmem:[%s1 + $0x628] sm:$0xff]
    %v428 = vld [vmem:[%s1 + $0x630] sm:$0xff]
    %v429 = vld [vmem:[%s1 + $0x638] sm:$0xff]
    %v430 = vld [vmem:[%s1 + $0x640] sm:$0xff]
    %v431 = vld [vmem:[%s1 + $0x648] sm:$0xff]
    %v432 = vld [vmem:[%s1 + $0x650] sm:$0xff]
    %v433 = vld [vmem:[%s1 + $0x658] sm:$0xff]
    %v434 = vld [vmem:[%s1 + $0x660] sm:$0xff]
    %v435 = vld [vmem:[%s1 + $0x668] sm:$0xff]
    %v436 = vld [vmem:[%s1 + $0x670] sm:$0xff]
    %v437 = vld [vmem:[%s1 + $0x678] sm:$0xff]
    %v438 = vld [vmem:[%s1 + $0x680] sm:$0xff]
    %v439 = vld [vmem:[%s1 + $0x688] sm:$0xff]
    %v440 = vld [vmem:[%s1 + $0x690] sm:$0xff]
    %v441 = vld [vmem:[%s1 + $0x698] sm:$0xff]
    %v442 = vld [vmem:[%s1 + $0x6a0] sm:$0xff]
    %v443 = vld [vmem:[%s1 + $0x6a8] sm:$0xff]
    %v444 = vld [vmem:[%s1 + $0x6b0] sm:$0xff]
    %v445 = vld [vmem:[%s1 + $0x6b8] sm:$0xff]
    %v446 = vld [vmem:[%s1 + $0x6c0] sm:$0xff]
    %v447 = vld [vmem:[%s1 + $0x6c8] sm:$0xff]
    %v448 = vld [vmem:[%s1 + $0x6d0] sm:$0xff]
    %v449 = vld [vmem:[%s1 + $0x6d8] sm:$0xff]
    %v450 = vld [vmem:[%s1 + $0x6e0] sm:$0xff]
    %v451 = vld [vmem:[%s1 + $0x6e8] sm:$0xff]
    %v452 = vld [vmem:[%s1 + $0x6f0] sm:$0xff]
    %v453 = vld [vmem:[%s1 + $0x6f8] sm:$0xff]
    %v454 = vld [vmem:[%s1 + $0x700] sm:$0xff]
    %v455 = vld [vmem:[%s1 + $0x708] sm:$0xff]
    %v456 = vld [vmem:[%s1 + $0x710] sm:$0xff]
    %v457 = vld [vmem:[%s1 + $0x718] sm:$0xff]
    %v458 = vld [vmem:[%s1 + $0x720] sm:$0xff]
    %v459 = vld [vmem:[%s1 + $0x728] sm:$0xff]
    %v460 = vld [vmem:[%s1 + $0x730] sm:$0xff]
    %v461 = vld [vmem:[%s1 + $0x738] sm:$0xff]
    %v462 = vld [vmem:[%s1 + $0x740] sm:$0xff]
    %v463 = vld [vmem:[%s1 + $0x748] sm:$0xff]
    %v464 = vld [vmem:[%s1 + $0x750] sm:$0xff]
    %v465 = vld [vmem:[%s1 + $0x758] sm:$0xff]
    %v466 = vld [vmem:[%s1 + $0x760] sm:$0xff]
    %v467 = vld [vmem:[%s1 + $0x768] sm:$0xff]
    %v468 = vld [vmem:[%s1 + $0x770] sm:$0xff]
    %v469 = vld [vmem:[%s1 + $0x778] sm:$0xff]
    %v470 = vld [vmem:[%s1 + $0x780] sm:$0xff]
    %v471 = vld [vmem:[%s1 + $0x788] sm:$0xff]
    %v472 = vld [vmem:[%s1 + $0x790] sm:$0xff]
    %v473 = vld [vmem:[%s1 + $0x798] sm:$0xff]
    %v474 = vld [vmem:[%s1 + $0x7a0] sm:$0xff]
    %v475 = vld [vmem:[%s1 + $0x7a8] sm:$0xff]
    %v476 = vld [vmem:[%s1 + $0x7b0] sm:$0xff]
    %v477 = vld [vmem:[%s1 + $0x7b8] sm:$0xff]
    %v478 = vld [vmem:[%s1 + $0x7c0] sm:$0xff]
    %v479 = vld [vmem:[%s1 + $0x7c8] sm:$0xff]
    %v480 = vld [vmem:[%s1 + $0x7d0] sm:$0xff]
    %v481 = vld [vmem:[%s1 + $0x7d8] sm:$0xff]
    %vm482 = vcmask 916480
    %v484 = vsel %vm482, %v225, 0
    %486 = vmatpush.msra.mxu0 0.0
    %487 = vmatpush.msra.mxu0 0.0
    %488 = vmatpush.msra.mxu0 %v464
    %489 = vmatpush.msra.mxu0 %v446
    %490 = vmatpush.msra.mxu0 %v428
    %491 = vmatpush.msra.mxu0 %v410
    %492 = vmatpush.msra.mxu0 %v392
    %493 = vmatpush.msra.mxu0 %v374
    %494 = vmatpush.msra.mxu0 %v356
    %495 = vmatpush.msra.mxu0 %v338
    %496 = vmatpush.msra.mxu0 %v320
    %497 = vmatpush.msra.mxu0 %v302
    %498 = vmatpush.msra.mxu0 %v284
    %499 = vmatpush.msra.mxu0 %v266
    %500 = vmatpush.msra.mxu0 %v248
    %501 = vmatpush.msra.mxu0 %v230
    %502 = vmatmul.f32.gmra.mxu0 %v484
    %v503 = vpop.f32.mrf.mxu0
    %v504 = vadd.f32 0.0, %v503
    %505 = vdwg.mxu0
    %506 = vmatpush.msra.mxu0 0.0
    %507 = vmatpush.msra.mxu0 0.0
    %508 = vmatpush.msra.mxu0 %v465
    %509 = vmatpush.msra.mxu0 %v447
    %510 = vmatpush.msra.mxu0 %v429
    %511 = vmatpush.msra.mxu0 %v411
    %512 = vmatpush.msra.mxu0 %v393
    %513 = vmatpush.msra.mxu0 %v375
    %514 = vmatpush.msra.mxu0 %v357
    %515 = vmatpush.msra.mxu0 %v339
    %516 = vmatpush.msra.mxu0 %v321
    %517 = vmatpush.msra.mxu0 %v303
    %518 = vmatpush.msra.mxu0 %v285
    %519 = vmatpush.msra.mxu0 %v267
    %520 = vmatpush.msra.mxu0 %v249
    %521 = vmatpush.msra.mxu0 %v231
    %522 = vmatmul.f32.gmra.mxu0 %v484
    %v523 = vpop.f32.mrf.mxu0
    %v524 = vadd.f32 0.0, %v523
    %525 = vdwg.mxu0
    %526 = vmatpush.msra.mxu0 0.0
    %527 = vmatpush.msra.mxu0 0.0
    %528 = vmatpush.msra.mxu0 %v466
    %529 = vmatpush.msra.mxu0 %v448
    %530 = vmatpush.msra.mxu0 %v430
    %531 = vmatpush.msra.mxu0 %v412
    %532 = vmatpush.msra.mxu0 %v394
    %533 = vmatpush.msra.mxu0 %v376
    %534 = vmatpush.msra.mxu0 %v358
    %535 = vmatpush.msra.mxu0 %v340
    %536 = vmatpush.msra.mxu0 %v322
    %537 = vmatpush.msra.mxu0 %v304
    %538 = vmatpush.msra.mxu0 %v286
    %539 = vmatpush.msra.mxu0 %v268
    %540 = vmatpush.msra.mxu0 %v250
    %541 = vmatpush.msra.mxu0 %v232
    %542 = vmatmul.f32.gmra.mxu0 %v484
    %v543 = vpop.f32.mrf.mxu0
    %v544 = vadd.f32 0.0, %v543
    %545 = vdwg.mxu0
    %546 = vmatpush.msra.mxu0 0.0
    %547 = vmatpush.msra.mxu0 0.0
    %548 = vmatpush.msra.mxu0 %v467
    %549 = vmatpush.msra.mxu0 %v449
    %550 = vmatpush.msra.mxu0 %v431
    %551 = vmatpush.msra.mxu0 %v413
    %552 = vmatpush.msra.mxu0 %v395
    %553 = vmatpush.msra.mxu0 %v377
    %554 = vmatpush.msra.mxu0 %v359
    %555 = vmatpush.msra.mxu0 %v341
    %556 = vmatpush.msra.mxu0 %v323
    %557 = vmatpush.msra.mxu0 %v305
    %558 = vmatpush.msra.mxu0 %v287
    %559 = vmatpush.msra.mxu0 %v269
    %560 = vmatpush.msra.mxu0 %v251
    %561 = vmatpush.msra.mxu0 %v233
    %562 = vmatmul.f32.gmra.mxu0 %v484
    %v563 = vpop.f32.mrf.mxu0
    %v564 = vadd.f32 0.0, %v563
    %565 = vdwg.mxu0
    %566 = vmatpush.msra.mxu0 0.0
    %567 = vmatpush.msra.mxu0 0.0
    %568 = vmatpush.msra.mxu0 %v468
    %569 = vmatpush.msra.mxu0 %v450
    %570 = vmatpush.msra.mxu0 %v432
    %571 = vmatpush.msra.mxu0 %v414
    %572 = vmatpush.msra.mxu0 %v396
    %573 = vmatpush.msra.mxu0 %v378
    %574 = vmatpush.msra.mxu0 %v360
    %575 = vmatpush.msra.mxu0 %v342
    %576 = vmatpush.msra.mxu0 %v324
    %577 = vmatpush.msra.mxu0 %v306
    %578 = vmatpush.msra.mxu0 %v288
    %579 = vmatpush.msra.mxu0 %v270
    %580 = vmatpush.msra.mxu0 %v252
    %581 = vmatpush.msra.mxu0 %v234
    %582 = vmatmul.f32.gmra.mxu0 %v484
    %v583 = vpop.f32.mrf.mxu0
    %v584 = vadd.f32 0.0, %v583
    %585 = vdwg.mxu0
    %586 = vmatpush.msra.mxu0 0.0
    %587 = vmatpush.msra.mxu0 0.0
    %588 = vmatpush.msra.mxu0 %v469
    %589 = vmatpush.msra.mxu0 %v451
    %590 = vmatpush.msra.mxu0 %v433
    %591 = vmatpush.msra.mxu0 %v415
    %592 = vmatpush.msra.mxu0 %v397
    %593 = vmatpush.msra.mxu0 %v379
    %594 = vmatpush.msra.mxu0 %v361
    %595 = vmatpush.msra.mxu0 %v343
    %596 = vmatpush.msra.mxu0 %v325
    %597 = vmatpush.msra.mxu0 %v307
    %598 = vmatpush.msra.mxu0 %v289
    %599 = vmatpush.msra.mxu0 %v271
    %600 = vmatpush.msra.mxu0 %v253
    %601 = vmatpush.msra.mxu0 %v235
    %602 = vmatmul.f32.gmra.mxu0 %v484
    %v603 = vpop.f32.mrf.mxu0
    %v604 = vadd.f32 0.0, %v603
    %605 = vdwg.mxu0
    %606 = vmatpush.msra.mxu0 0.0
    %607 = vmatpush.msra.mxu0 0.0
    %608 = vmatpush.msra.mxu0 %v470
    %609 = vmatpush.msra.mxu0 %v452
    %610 = vmatpush.msra.mxu0 %v434
    %611 = vmatpush.msra.mxu0 %v416
    %612 = vmatpush.msra.mxu0 %v398
    %613 = vmatpush.msra.mxu0 %v380
    %614 = vmatpush.msra.mxu0 %v362
    %615 = vmatpush.msra.mxu0 %v344
    %616 = vmatpush.msra.mxu0 %v326
    %617 = vmatpush.msra.mxu0 %v308
    %618 = vmatpush.msra.mxu0 %v290
    %619 = vmatpush.msra.mxu0 %v272
    %620 = vmatpush.msra.mxu0 %v254
    %621 = vmatpush.msra.mxu0 %v236
    %622 = vmatmul.f32.gmra.mxu0 %v484
    %v623 = vpop.f32.mrf.mxu0
    %v624 = vadd.f32 0.0, %v623
    %625 = vdwg.mxu0
    %626 = vmatpush.msra.mxu0 0.0
    %627 = vmatpush.msra.mxu0 0.0
    %628 = vmatpush.msra.mxu0 %v471
    %629 = vmatpush.msra.mxu0 %v453
    %630 = vmatpush.msra.mxu0 %v435
    %631 = vmatpush.msra.mxu0 %v417
    %632 = vmatpush.msra.mxu0 %v399
    %633 = vmatpush.msra.mxu0 %v381
    %634 = vmatpush.msra.mxu0 %v363
    %635 = vmatpush.msra.mxu0 %v345
    %636 = vmatpush.msra.mxu0 %v327
    %637 = vmatpush.msra.mxu0 %v309
    %638 = vmatpush.msra.mxu0 %v291
    %639 = vmatpush.msra.mxu0 %v273
    %640 = vmatpush.msra.mxu0 %v255
    %641 = vmatpush.msra.mxu0 %v237
    %642 = vmatmul.f32.gmra.mxu0 %v484
    %v643 = vpop.f32.mrf.mxu0
    %v644 = vadd.f32 0.0, %v643
    %645 = vdwg.mxu0
    %646 = vmatpush.msra.mxu0 0.0
    %647 = vmatpush.msra.mxu0 0.0
    %648 = vmatpush.msra.mxu0 %v472
    %649 = vmatpush.msra.mxu0 %v454
    %650 = vmatpush.msra.mxu0 %v436
    %651 = vmatpush.msra.mxu0 %v418
    %652 = vmatpush.msra.mxu0 %v400
    %653 = vmatpush.msra.mxu0 %v382
    %654 = vmatpush.msra.mxu0 %v364
    %655 = vmatpush.msra.mxu0 %v346
    %656 = vmatpush.msra.mxu0 %v328
    %657 = vmatpush.msra.mxu0 %v310
    %658 = vmatpush.msra.mxu0 %v292
    %659 = vmatpush.msra.mxu0 %v274
    %660 = vmatpush.msra.mxu0 %v256
    %661 = vmatpush.msra.mxu0 %v238
    %662 = vmatmul.f32.gmra.mxu0 %v484
    %v663 = vpop.f32.mrf.mxu0
    %v664 = vadd.f32 0.0, %v663
    %665 = vdwg.mxu0
    %666 = vmatpush.msra.mxu0 0.0
    %667 = vmatpush.msra.mxu0 0.0
    %668 = vmatpush.msra.mxu0 %v473
    %669 = vmatpush.msra.mxu0 %v455
    %670 = vmatpush.msra.mxu0 %v437
    %671 = vmatpush.msra.mxu0 %v419
    %672 = vmatpush.msra.mxu0 %v401
    %673 = vmatpush.msra.mxu0 %v383
    %674 = vmatpush.msra.mxu0 %v365
    %675 = vmatpush.msra.mxu0 %v347
    %676 = vmatpush.msra.mxu0 %v329
    %677 = vmatpush.msra.mxu0 %v311
    %678 = vmatpush.msra.mxu0 %v293
    %679 = vmatpush.msra.mxu0 %v275
    %680 = vmatpush.msra.mxu0 %v257
    %681 = vmatpush.msra.mxu0 %v239
    %682 = vmatmul.f32.gmra.mxu0 %v484
    %v683 = vpop.f32.mrf.mxu0
    %v684 = vadd.f32 0.0, %v683
    %685 = vdwg.mxu0
    %686 = vmatpush.msra.mxu0 0.0
    %687 = vmatpush.msra.mxu0 0.0
    %688 = vmatpush.msra.mxu0 %v474
    %689 = vmatpush.msra.mxu0 %v456
    %690 = vmatpush.msra.mxu0 %v438
    %691 = vmatpush.msra.mxu0 %v420
    %692 = vmatpush.msra.mxu0 %v402
    %693 = vmatpush.msra.mxu0 %v384
    %694 = vmatpush.msra.mxu0 %v366
    %695 = vmatpush.msra.mxu0 %v348
    %696 = vmatpush.msra.mxu0 %v330
    %697 = vmatpush.msra.mxu0 %v312
    %698 = vmatpush.msra.mxu0 %v294
    %699 = vmatpush.msra.mxu0 %v276
    %700 = vmatpush.msra.mxu0 %v258
    %701 = vmatpush.msra.mxu0 %v240
    %702 = vmatmul.f32.gmra.mxu0 %v484
    %v703 = vpop.f32.mrf.mxu0
    %v704 = vadd.f32 0.0, %v703
    %705 = vdwg.mxu0
    %706 = vmatpush.msra.mxu0 0.0
    %707 = vmatpush.msra.mxu0 0.0
    %708 = vmatpush.msra.mxu0 %v475
    %709 = vmatpush.msra.mxu0 %v457
    %710 = vmatpush.msra.mxu0 %v439
    %711 = vmatpush.msra.mxu0 %v421
    %712 = vmatpush.msra.mxu0 %v403
    %713 = vmatpush.msra.mxu0 %v385
    %714 = vmatpush.msra.mxu0 %v367
    %715 = vmatpush.msra.mxu0 %v349
    %716 = vmatpush.msra.mxu0 %v331
    %717 = vmatpush.msra.mxu0 %v313
    %718 = vmatpush.msra.mxu0 %v295
    %719 = vmatpush.msra.mxu0 %v277
    %720 = vmatpush.msra.mxu0 %v259
    %721 = vmatpush.msra.mxu0 %v241
    %722 = vmatmul.f32.gmra.mxu0 %v484
    %v723 = vpop.f32.mrf.mxu0
    %v724 = vadd.f32 0.0, %v723
    %725 = vdwg.mxu0
    %726 = vmatpush.msra.mxu0 0.0
    %727 = vmatpush.msra.mxu0 0.0
    %728 = vmatpush.msra.mxu0 %v476
    %729 = vmatpush.msra.mxu0 %v458
    %730 = vmatpush.msra.mxu0 %v440
    %731 = vmatpush.msra.mxu0 %v422
    %732 = vmatpush.msra.mxu0 %v404
    %733 = vmatpush.msra.mxu0 %v386
    %734 = vmatpush.msra.mxu0 %v368
    %735 = vmatpush.msra.mxu0 %v350
    %736 = vmatpush.msra.mxu0 %v332
    %737 = vmatpush.msra.mxu0 %v314
    %738 = vmatpush.msra.mxu0 %v296
    %739 = vmatpush.msra.mxu0 %v278
    %740 = vmatpush.msra.mxu0 %v260
    %741 = vmatpush.msra.mxu0 %v242
    %742 = vmatmul.f32.gmra.mxu0 %v484
    %v743 = vpop.f32.mrf.mxu0
    %v744 = vadd.f32 0.0, %v743
    %745 = vdwg.mxu0
    %746 = vmatpush.msra.mxu0 0.0
    %747 = vmatpush.msra.mxu0 0.0
    %748 = vmatpush.msra.mxu0 %v477
    %749 = vmatpush.msra.mxu0 %v459
    %750 = vmatpush.msra.mxu0 %v441
    %751 = vmatpush.msra.mxu0 %v423
    %752 = vmatpush.msra.mxu0 %v405
    %753 = vmatpush.msra.mxu0 %v387
    %754 = vmatpush.msra.mxu0 %v369
    %755 = vmatpush.msra.mxu0 %v351
    %756 = vmatpush.msra.mxu0 %v333
    %757 = vmatpush.msra.mxu0 %v315
    %758 = vmatpush.msra.mxu0 %v297
    %759 = vmatpush.msra.mxu0 %v279
    %760 = vmatpush.msra.mxu0 %v261
    %761 = vmatpush.msra.mxu0 %v243
    %762 = vmatmul.f32.gmra.mxu0 %v484
    %v763 = vpop.f32.mrf.mxu0
    %v764 = vadd.f32 0.0, %v763
    %765 = vdwg.mxu0
    %766 = vmatpush.msra.mxu0 0.0
    %767 = vmatpush.msra.mxu0 0.0
    %768 = vmatpush.msra.mxu0 %v478
    %769 = vmatpush.msra.mxu0 %v460
    %770 = vmatpush.msra.mxu0 %v442
    %771 = vmatpush.msra.mxu0 %v424
    %772 = vmatpush.msra.mxu0 %v406
    %773 = vmatpush.msra.mxu0 %v388
    %774 = vmatpush.msra.mxu0 %v370
    %775 = vmatpush.msra.mxu0 %v352
    %776 = vmatpush.msra.mxu0 %v334
    %777 = vmatpush.msra.mxu0 %v316
    %778 = vmatpush.msra.mxu0 %v298
    %779 = vmatpush.msra.mxu0 %v280
    %780 = vmatpush.msra.mxu0 %v262
    %781 = vmatpush.msra.mxu0 %v244
    %782 = vmatmul.f32.gmra.mxu0 %v484
    %v783 = vpop.f32.mrf.mxu0
    %v784 = vadd.f32 0.0, %v783
    %785 = vdwg.mxu0
    %786 = vmatpush.msra.mxu0 0.0
    %787 = vmatpush.msra.mxu0 0.0
    %788 = vmatpush.msra.mxu0 %v479
    %789 = vmatpush.msra.mxu0 %v461
    %790 = vmatpush.msra.mxu0 %v443
    %791 = vmatpush.msra.mxu0 %v425
    %792 = vmatpush.msra.mxu0 %v407
    %793 = vmatpush.msra.mxu0 %v389
    %794 = vmatpush.msra.mxu0 %v371
    %795 = vmatpush.msra.mxu0 %v353
    %796 = vmatpush.msra.mxu0 %v335
    %797 = vmatpush.msra.mxu0 %v317
    %798 = vmatpush.msra.mxu0 %v299
    %799 = vmatpush.msra.mxu0 %v281
    %800 = vmatpush.msra.mxu0 %v263
    %801 = vmatpush.msra.mxu0 %v245
    %802 = vmatmul.f32.gmra.mxu0 %v484
    %v803 = vpop.f32.mrf.mxu0
    %v804 = vadd.f32 0.0, %v803
    %805 = vdwg.mxu0
    %806 = vmatpush.msra.mxu0 0.0
    %807 = vmatpush.msra.mxu0 0.0
    %808 = vmatpush.msra.mxu0 %v480
    %809 = vmatpush.msra.mxu0 %v462
    %810 = vmatpush.msra.mxu0 %v444
    %811 = vmatpush.msra.mxu0 %v426
    %812 = vmatpush.msra.mxu0 %v408
    %813 = vmatpush.msra.mxu0 %v390
    %814 = vmatpush.msra.mxu0 %v372
    %815 = vmatpush.msra.mxu0 %v354
    %816 = vmatpush.msra.mxu0 %v336
    %817 = vmatpush.msra.mxu0 %v318
    %818 = vmatpush.msra.mxu0 %v300
    %819 = vmatpush.msra.mxu0 %v282
    %820 = vmatpush.msra.mxu0 %v264
    %821 = vmatpush.msra.mxu0 %v246
    %822 = vmatmul.f32.gmra.mxu0 %v484
    %v823 = vpop.f32.mrf.mxu0
    %v824 = vadd.f32 0.0, %v823
    %825 = vdwg.mxu0
    %826 = vmatpush.msra.mxu0 0.0
    %827 = vmatpush.msra.mxu0 0.0
    %828 = vmatpush.msra.mxu0 %v481
    %829 = vmatpush.msra.mxu0 %v463
    %830 = vmatpush.msra.mxu0 %v445
    %831 = vmatpush.msra.mxu0 %v427
    %832 = vmatpush.msra.mxu0 %v409
    %833 = vmatpush.msra.mxu0 %v391
    %834 = vmatpush.msra.mxu0 %v373
    %835 = vmatpush.msra.mxu0 %v355
    %836 = vmatpush.msra.mxu0 %v337
    %837 = vmatpush.msra.mxu0 %v319
    %838 = vmatpush.msra.mxu0 %v301
    %839 = vmatpush.msra.mxu0 %v283
    %840 = vmatpush.msra.mxu0 %v265
    %841 = vmatpush.msra.mxu0 %v247
    %842 = vmatmul.f32.gmra.mxu0 %v484
    %v843 = vpop.f32.mrf.mxu0
    %v844 = vadd.f32 0.0, %v843
    %845 = vdwg.mxu0
    %v846 = vmax.f32 %v225, %v227
    %v847 = vmax.f32 %v846, %v229
    %v848 = vld [vmem:[%s2] sm:$0xff]
    %v849 = vld [vmem:[%s2 + $0x8] sm:$0xff]
    %v850 = vld [vmem:[%s2 + $0x10] sm:$0xff]
    %v851 = vld [vmem:[%s2 + $0x18] sm:$0xff]
    %v852 = vld [vmem:[%s2 + $0x20] sm:$0xff]
    %v853 = vld [vmem:[%s2 + $0x28] sm:$0xff]
    %v854 = vld [vmem:[%s2 + $0x30] sm:$0xff]
    %v855 = vld [vmem:[%s2 + $0x38] sm:$0xff]
    %v856 = vld [vmem:[%s2 + $0x40] sm:$0xff]
    %v857 = vld [vmem:[%s2 + $0x48] sm:$0xff]
    %v858 = vld [vmem:[%s2 + $0x50] sm:$0xff]
    %v859 = vld [vmem:[%s2 + $0x58] sm:$0xff]
    %v860 = vld [vmem:[%s2 + $0x60] sm:$0xff]
    %v861 = vld [vmem:[%s2 + $0x68] sm:$0xff]
    %v862 = vld [vmem:[%s2 + $0x70] sm:$0xff]
    %v863 = vld [vmem:[%s2 + $0x78] sm:$0xff]
    %v864 = vld [vmem:[%s2 + $0x80] sm:$0xff]
    %v865 = vld [vmem:[%s2 + $0x88] sm:$0xff]
    %v866 = vld [vmem:[%s2 + $0x90] sm:$0xff]
    %v867 = vld [vmem:[%s2 + $0x98] sm:$0xff]
    %v868 = vld [vmem:[%s2 + $0xa0] sm:$0xff]
    %v869 = vld [vmem:[%s2 + $0xa8] sm:$0xff]
    %v870 = vld [vmem:[%s2 + $0xb0] sm:$0xff]
    %v871 = vld [vmem:[%s2 + $0xb8] sm:$0xff]
    %v872 = vld [vmem:[%s2 + $0xc0] sm:$0xff]
    %v873 = vld [vmem:[%s2 + $0xc8] sm:$0xff]
    %v874 = vld [vmem:[%s2 + $0xd0] sm:$0xff]
    %v875 = vld [vmem:[%s2 + $0xd8] sm:$0xff]
    %v876 = vld [vmem:[%s2 + $0xe0] sm:$0xff]
    %v877 = vld [vmem:[%s2 + $0xe8] sm:$0xff]
    %v878 = vld [vmem:[%s2 + $0xf0] sm:$0xff]
    %v879 = vld [vmem:[%s2 + $0xf8] sm:$0xff]
    %v880 = vld [vmem:[%s2 + $0x100] sm:$0xff]
    %v881 = vld [vmem:[%s2 + $0x108] sm:$0xff]
    %v882 = vld [vmem:[%s2 + $0x110] sm:$0xff]
    %v883 = vld [vmem:[%s2 + $0x118] sm:$0xff]
    %v884 = vld [vmem:[%s2 + $0x120] sm:$0xff]
    %v885 = vld [vmem:[%s2 + $0x128] sm:$0xff]
    %v886 = vld [vmem:[%s2 + $0x130] sm:$0xff]
    %v887 = vld [vmem:[%s2 + $0x138] sm:$0xff]
    %v888 = vld [vmem:[%s2 + $0x140] sm:$0xff]
    %v889 = vld [vmem:[%s2 + $0x148] sm:$0xff]
    %v890 = vld [vmem:[%s2 + $0x150] sm:$0xff]
    %v891 = vld [vmem:[%s2 + $0x158] sm:$0xff]
    %v892 = vld [vmem:[%s2 + $0x160] sm:$0xff]
    %v893 = vld [vmem:[%s2 + $0x168] sm:$0xff]
    %v894 = vld [vmem:[%s2 + $0x170] sm:$0xff]
    %v895 = vld [vmem:[%s2 + $0x178] sm:$0xff]
    %v896 = vld [vmem:[%s2 + $0x180] sm:$0xff]
    %v897 = vld [vmem:[%s2 + $0x188] sm:$0xff]
    %v898 = vld [vmem:[%s2 + $0x190] sm:$0xff]
    %v899 = vld [vmem:[%s2 + $0x198] sm:$0xff]
    %v900 = vld [vmem:[%s2 + $0x1a0] sm:$0xff]
    %v901 = vld [vmem:[%s2 + $0x1a8] sm:$0xff]
    %v902 = vld [vmem:[%s2 + $0x1b0] sm:$0xff]
    %v903 = vld [vmem:[%s2 + $0x1b8] sm:$0xff]
    %v904 = vld [vmem:[%s2 + $0x1c0] sm:$0xff]
    %v905 = vld [vmem:[%s2 + $0x1c8] sm:$0xff]
    %v906 = vld [vmem:[%s2 + $0x1d0] sm:$0xff]
    %v907 = vld [vmem:[%s2 + $0x1d8] sm:$0xff]
    %v908 = vld [vmem:[%s2 + $0x1e0] sm:$0xff]
    %v909 = vld [vmem:[%s2 + $0x1e8] sm:$0xff]
    %v910 = vld [vmem:[%s2 + $0x1f0] sm:$0xff]
    %v911 = vld [vmem:[%s2 + $0x1f8] sm:$0xff]
    %v912 = vld [vmem:[%s2 + $0x200] sm:$0xff]
    %v913 = vld [vmem:[%s2 + $0x208] sm:$0xff]
    %v914 = vld [vmem:[%s2 + $0x210] sm:$0xff]
    %v915 = vld [vmem:[%s2 + $0x218] sm:$0xff]
    %v916 = vld [vmem:[%s2 + $0x220] sm:$0xff]
    %v917 = vld [vmem:[%s2 + $0x228] sm:$0xff]
    %v918 = vld [vmem:[%s2 + $0x230] sm:$0xff]
    %v919 = vld [vmem:[%s2 + $0x238] sm:$0xff]
    %v920 = vld [vmem:[%s2 + $0x240] sm:$0xff]
    %v921 = vld [vmem:[%s2 + $0x248] sm:$0xff]
    %v922 = vld [vmem:[%s2 + $0x250] sm:$0xff]
    %v923 = vld [vmem:[%s2 + $0x258] sm:$0xff]
    %v924 = vld [vmem:[%s2 + $0x260] sm:$0xff]
    %v925 = vld [vmem:[%s2 + $0x268] sm:$0xff]
    %v926 = vld [vmem:[%s2 + $0x270] sm:$0xff]
    %v927 = vld [vmem:[%s2 + $0x278] sm:$0xff]
    %v928 = vld [vmem:[%s2 + $0x280] sm:$0xff]
    %v929 = vld [vmem:[%s2 + $0x288] sm:$0xff]
    %v930 = vld [vmem:[%s2 + $0x290] sm:$0xff]
    %v931 = vld [vmem:[%s2 + $0x298] sm:$0xff]
    %v933 = vsel %vm482, %v847, 0
    %935 = vmatpush.msra.mxu0 0.0
    %936 = vmatpush.msra.mxu0 0.0
    %937 = vmatpush.msra.mxu0 %v926
    %938 = vmatpush.msra.mxu0 %v920
    %939 = vmatpush.msra.mxu0 %v914
    %940 = vmatpush.msra.mxu0 %v908
    %941 = vmatpush.msra.mxu0 %v902
    %942 = vmatpush.msra.mxu0 %v896
    %943 = vmatpush.msra.mxu0 %v890
    %944 = vmatpush.msra.mxu0 %v884
    %945 = vmatpush.msra.mxu0 %v878
    %946 = vmatpush.msra.mxu0 %v872
    %947 = vmatpush.msra.mxu0 %v866
    %948 = vmatpush.msra.mxu0 %v860
    %949 = vmatpush.msra.mxu0 %v854
    %950 = vmatpush.msra.mxu0 %v848
    %951 = vmatmul.f32.gmra.mxu0 %v933
    %v952 = vpop.f32.mrf.mxu0
    %v953 = vadd.f32 0.0, %v952
    %954 = vdwg.mxu0
    %955 = vmatpush.msra.mxu0 0.0
    %956 = vmatpush.msra.mxu0 0.0
    %957 = vmatpush.msra.mxu0 %v927
    %958 = vmatpush.msra.mxu0 %v921
    %959 = vmatpush.msra.mxu0 %v915
    %960 = vmatpush.msra.mxu0 %v909
    %961 = vmatpush.msra.mxu0 %v903
    %962 = vmatpush.msra.mxu0 %v897
    %963 = vmatpush.msra.mxu0 %v891
    %964 = vmatpush.msra.mxu0 %v885
    %965 = vmatpush.msra.mxu0 %v879
    %966 = vmatpush.msra.mxu0 %v873
    %967 = vmatpush.msra.mxu0 %v867
    %968 = vmatpush.msra.mxu0 %v861
    %969 = vmatpush.msra.mxu0 %v855
    %970 = vmatpush.msra.mxu0 %v849
    %971 = vmatmul.f32.gmra.mxu0 %v933
    %v972 = vpop.f32.mrf.mxu0
    %v973 = vadd.f32 0.0, %v972
    %974 = vdwg.mxu0
    %975 = vmatpush.msra.mxu0 0.0
    %976 = vmatpush.msra.mxu0 0.0
    %977 = vmatpush.msra.mxu0 %v928
    %978 = vmatpush.msra.mxu0 %v922
    %979 = vmatpush.msra.mxu0 %v916
    %980 = vmatpush.msra.mxu0 %v910
    %981 = vmatpush.msra.mxu0 %v904
    %982 = vmatpush.msra.mxu0 %v898
    %983 = vmatpush.msra.mxu0 %v892
    %984 = vmatpush.msra.mxu0 %v886
    %985 = vmatpush.msra.mxu0 %v880
    %986 = vmatpush.msra.mxu0 %v874
    %987 = vmatpush.msra.mxu0 %v868
    %988 = vmatpush.msra.mxu0 %v862
    %989 = vmatpush.msra.mxu0 %v856
    %990 = vmatpush.msra.mxu0 %v850
    %991 = vmatmul.f32.gmra.mxu0 %v933
    %v992 = vpop.f32.mrf.mxu0
    %v993 = vadd.f32 0.0, %v992
    %994 = vdwg.mxu0
    %995 = vmatpush.msra.mxu0 0.0
    %996 = vmatpush.msra.mxu0 0.0
    %997 = vmatpush.msra.mxu0 %v929
    %998 = vmatpush.msra.mxu0 %v923
    %999 = vmatpush.msra.mxu0 %v917
    %1000 = vmatpush.msra.mxu0 %v911
    %1001 = vmatpush.msra.mxu0 %v905
    %1002 = vmatpush.msra.mxu0 %v899
    %1003 = vmatpush.msra.mxu0 %v893
    %1004 = vmatpush.msra.mxu0 %v887
    %1005 = vmatpush.msra.mxu0 %v881
    %1006 = vmatpush.msra.mxu0 %v875
    %1007 = vmatpush.msra.mxu0 %v869
    %1008 = vmatpush.msra.mxu0 %v863
    %1009 = vmatpush.msra.mxu0 %v857
    %1010 = vmatpush.msra.mxu0 %v851
    %1011 = vmatmul.f32.gmra.mxu0 %v933
    %v1012 = vpop.f32.mrf.mxu0
    %v1013 = vadd.f32 0.0, %v1012
    %1014 = vdwg.mxu0
    %1015 = vmatpush.msra.mxu0 0.0
    %1016 = vmatpush.msra.mxu0 0.0
    %1017 = vmatpush.msra.mxu0 %v930
    %1018 = vmatpush.msra.mxu0 %v924
    %1019 = vmatpush.msra.mxu0 %v918
    %1020 = vmatpush.msra.mxu0 %v912
    %1021 = vmatpush.msra.mxu0 %v906
    %1022 = vmatpush.msra.mxu0 %v900
    %1023 = vmatpush.msra.mxu0 %v894
    %1024 = vmatpush.msra.mxu0 %v888
    %1025 = vmatpush.msra.mxu0 %v882
    %1026 = vmatpush.msra.mxu0 %v876
    %1027 = vmatpush.msra.mxu0 %v870
    %1028 = vmatpush.msra.mxu0 %v864
    %1029 = vmatpush.msra.mxu0 %v858
    %1030 = vmatpush.msra.mxu0 %v852
    %1031 = vmatmul.f32.gmra.mxu0 %v933
    %v1032 = vpop.f32.mrf.mxu0
    %v1033 = vadd.f32 0.0, %v1032
    %1034 = vdwg.mxu0
    %1035 = vmatpush.msra.mxu0 0.0
    %1036 = vmatpush.msra.mxu0 0.0
    %1037 = vmatpush.msra.mxu0 %v931
    %1038 = vmatpush.msra.mxu0 %v925
    %1039 = vmatpush.msra.mxu0 %v919
    %1040 = vmatpush.msra.mxu0 %v913
    %1041 = vmatpush.msra.mxu0 %v907
    %1042 = vmatpush.msra.mxu0 %v901
    %1043 = vmatpush.msra.mxu0 %v895
    %1044 = vmatpush.msra.mxu0 %v889
    %1045 = vmatpush.msra.mxu0 %v883
    %1046 = vmatpush.msra.mxu0 %v877
    %1047 = vmatpush.msra.mxu0 %v871
    %1048 = vmatpush.msra.mxu0 %v865
    %1049 = vmatpush.msra.mxu0 %v859
    %1050 = vmatpush.msra.mxu0 %v853
    %1051 = vmatmul.f32.gmra.mxu0 %v933
    %v1052 = vpop.f32.mrf.mxu0
    %v1053 = vadd.f32 0.0, %v1052
    %1054 = vdwg.mxu0
    %v1055 = vld [vmem:[%s8] sm:$0x1]
    %vm1056 = vcmask 1041408
    %v1057 = vsel %vm1056, %v504, 0.0
    %v1058 = vrot.slane %v1057, 4
    %v1059 = vadd.f32 %v1057, %v1058
    %v1060 = vrot.slane %v1059, 2
    %v1061 = vadd.f32 %v1059, %v1060
    %v1062 = vrot.slane %v1061, 1
    %v1063 = vadd.f32 %v1061, %v1062
    %v1064 = vsel %vm1056, %v524, 0.0
    %v1065 = vrot.slane %v1064, 4
    %v1066 = vadd.f32 %v1064, %v1065
    %v1067 = vrot.slane %v1066, 2
    %v1068 = vadd.f32 %v1066, %v1067
    %v1069 = vrot.slane %v1068, 1
    %v1070 = vadd.f32 %v1068, %v1069
    %v1071 = vsel %vm1056, %v544, 0.0
    %v1072 = vrot.slane %v1071, 4
    %v1073 = vadd.f32 %v1071, %v1072
    %v1074 = vrot.slane %v1073, 2
    %v1075 = vadd.f32 %v1073, %v1074
    %v1076 = vrot.slane %v1075, 1
    %v1077 = vadd.f32 %v1075, %v1076
    %v1078 = vsel %vm1056, %v564, 0.0
    %v1079 = vrot.slane %v1078, 4
    %v1080 = vadd.f32 %v1078, %v1079
    %v1081 = vrot.slane %v1080, 2
    %v1082 = vadd.f32 %v1080, %v1081
    %v1083 = vrot.slane %v1082, 1
    %v1084 = vadd.f32 %v1082, %v1083
    %v1085 = vsel %vm1056, %v584, 0.0
    %v1086 = vrot.slane %v1085, 4
    %v1087 = vadd.f32 %v1085, %v1086
    %v1088 = vrot.slane %v1087, 2
    %v1089 = vadd.f32 %v1087, %v1088
    %v1090 = vrot.slane %v1089, 1
    %v1091 = vadd.f32 %v1089, %v1090
    %v1092 = vsel %vm1056, %v604, 0.0
    %v1093 = vrot.slane %v1092, 4
    %v1094 = vadd.f32 %v1092, %v1093
    %v1095 = vrot.slane %v1094, 2
    %v1096 = vadd.f32 %v1094, %v1095
    %v1097 = vrot.slane %v1096, 1
    %v1098 = vadd.f32 %v1096, %v1097
    %v1099 = vsel %vm1056, %v953, 0.0
    %v1100 = vrot.slane %v1099, 4
    %v1101 = vadd.f32 %v1099, %v1100
    %v1102 = vrot.slane %v1101, 2
    %v1103 = vadd.f32 %v1101, %v1102
    %v1104 = vrot.slane %v1103, 1
    %v1105 = vadd.f32 %v1103, %v1104
    %v1106 = vsel %vm1056, %v973, 0.0
    %v1107 = vrot.slane %v1106, 4
    %v1108 = vadd.f32 %v1106, %v1107
    %v1109 = vrot.slane %v1108, 2
    %v1110 = vadd.f32 %v1108, %v1109
    %v1111 = vrot.slane %v1110, 1
    %v1112 = vadd.f32 %v1110, %v1111
    %1113 = vmatpush.msra.mxu0 %v48
    %1114 = vmatpush.msra.mxu0 %v47
    %1115 = vmatpush.msra.mxu0 %v46
    %1116 = vmatpush.msra.mxu0 %v45
    %1117 = vmatpush.msra.mxu0 %v44
    %1118 = vmatpush.msra.mxu0 %v43
    %1119 = vmatpush.msra.mxu0 %v42
    %1120 = vmatpush.msra.mxu0 %v41
    %1121 = vmatpush.msra.mxu0 %v40
    %1122 = vmatpush.msra.mxu0 %v39
    %1123 = vmatpush.msra.mxu0 %v38
    %1124 = vmatpush.msra.mxu0 %v37
    %1125 = vmatpush.msra.mxu0 %v36
    %1126 = vmatpush.msra.mxu0 %v35
    %1127 = vmatpush.msra.mxu0 %v34
    %1128 = vmatpush.msra.mxu0 %v33
    %1129 = vmatmul.f32.gmra.mxu0 %v1063
    %v1130 = vpop.f32.mrf.mxu0
    %v1131 = vadd.f32 0.0, %v1130
    %1132 = vdwg.mxu0
    %1133 = vmatpush.msra.mxu0 %v64
    %1134 = vmatpush.msra.mxu0 %v63
    %1135 = vmatpush.msra.mxu0 %v62
    %1136 = vmatpush.msra.mxu0 %v61
    %1137 = vmatpush.msra.mxu0 %v60
    %1138 = vmatpush.msra.mxu0 %v59
    %1139 = vmatpush.msra.mxu0 %v58
    %1140 = vmatpush.msra.mxu0 %v57
    %1141 = vmatpush.msra.mxu0 %v56
    %1142 = vmatpush.msra.mxu0 %v55
    %1143 = vmatpush.msra.mxu0 %v54
    %1144 = vmatpush.msra.mxu0 %v53
    %1145 = vmatpush.msra.mxu0 %v52
    %1146 = vmatpush.msra.mxu0 %v51
    %1147 = vmatpush.msra.mxu0 %v50
    %1148 = vmatpush.msra.mxu0 %v49
    %1149 = vmatmul.f32.gmra.mxu0 %v1070
    %v1150 = vpop.f32.mrf.mxu0
    %v1151 = vadd.f32 %v1131, %v1150
    %1152 = vdwg.mxu0
    %1153 = vmatpush.msra.mxu0 %v80
    %1154 = vmatpush.msra.mxu0 %v79
    %1155 = vmatpush.msra.mxu0 %v78
    %1156 = vmatpush.msra.mxu0 %v77
    %1157 = vmatpush.msra.mxu0 %v76
    %1158 = vmatpush.msra.mxu0 %v75
    %1159 = vmatpush.msra.mxu0 %v74
    %1160 = vmatpush.msra.mxu0 %v73
    %1161 = vmatpush.msra.mxu0 %v72
    %1162 = vmatpush.msra.mxu0 %v71
    %1163 = vmatpush.msra.mxu0 %v70
    %1164 = vmatpush.msra.mxu0 %v69
    %1165 = vmatpush.msra.mxu0 %v68
    %1166 = vmatpush.msra.mxu0 %v67
    %1167 = vmatpush.msra.mxu0 %v66
    %1168 = vmatpush.msra.mxu0 %v65
    %1169 = vmatmul.f32.gmra.mxu0 %v1077
    %v1170 = vpop.f32.mrf.mxu0
    %v1171 = vadd.f32 %v1151, %v1170
    %1172 = vdwg.mxu0
    %1173 = vmatpush.msra.mxu0 %v96
    %1174 = vmatpush.msra.mxu0 %v95
    %1175 = vmatpush.msra.mxu0 %v94
    %1176 = vmatpush.msra.mxu0 %v93
    %1177 = vmatpush.msra.mxu0 %v92
    %1178 = vmatpush.msra.mxu0 %v91
    %1179 = vmatpush.msra.mxu0 %v90
    %1180 = vmatpush.msra.mxu0 %v89
    %1181 = vmatpush.msra.mxu0 %v88
    %1182 = vmatpush.msra.mxu0 %v87
    %1183 = vmatpush.msra.mxu0 %v86
    %1184 = vmatpush.msra.mxu0 %v85
    %1185 = vmatpush.msra.mxu0 %v84
    %1186 = vmatpush.msra.mxu0 %v83
    %1187 = vmatpush.msra.mxu0 %v82
    %1188 = vmatpush.msra.mxu0 %v81
    %1189 = vmatmul.f32.gmra.mxu0 %v1084
    %v1190 = vpop.f32.mrf.mxu0
    %v1191 = vadd.f32 %v1171, %v1190
    %1192 = vdwg.mxu0
    %1193 = vmatpush.msra.mxu0 %v112
    %1194 = vmatpush.msra.mxu0 %v111
    %1195 = vmatpush.msra.mxu0 %v110
    %1196 = vmatpush.msra.mxu0 %v109
    %1197 = vmatpush.msra.mxu0 %v108
    %1198 = vmatpush.msra.mxu0 %v107
    %1199 = vmatpush.msra.mxu0 %v106
    %1200 = vmatpush.msra.mxu0 %v105
    %1201 = vmatpush.msra.mxu0 %v104
    %1202 = vmatpush.msra.mxu0 %v103
    %1203 = vmatpush.msra.mxu0 %v102
    %1204 = vmatpush.msra.mxu0 %v101
    %1205 = vmatpush.msra.mxu0 %v100
    %1206 = vmatpush.msra.mxu0 %v99
    %1207 = vmatpush.msra.mxu0 %v98
    %1208 = vmatpush.msra.mxu0 %v97
    %1209 = vmatmul.f32.gmra.mxu0 %v1091
    %v1210 = vpop.f32.mrf.mxu0
    %v1211 = vadd.f32 %v1191, %v1210
    %1212 = vdwg.mxu0
    %1213 = vmatpush.msra.mxu0 %v128
    %1214 = vmatpush.msra.mxu0 %v127
    %1215 = vmatpush.msra.mxu0 %v126
    %1216 = vmatpush.msra.mxu0 %v125
    %1217 = vmatpush.msra.mxu0 %v124
    %1218 = vmatpush.msra.mxu0 %v123
    %1219 = vmatpush.msra.mxu0 %v122
    %1220 = vmatpush.msra.mxu0 %v121
    %1221 = vmatpush.msra.mxu0 %v120
    %1222 = vmatpush.msra.mxu0 %v119
    %1223 = vmatpush.msra.mxu0 %v118
    %1224 = vmatpush.msra.mxu0 %v117
    %1225 = vmatpush.msra.mxu0 %v116
    %1226 = vmatpush.msra.mxu0 %v115
    %1227 = vmatpush.msra.mxu0 %v114
    %1228 = vmatpush.msra.mxu0 %v113
    %1229 = vmatmul.f32.gmra.mxu0 %v1098
    %v1230 = vpop.f32.mrf.mxu0
    %v1231 = vadd.f32 %v1211, %v1230
    %1232 = vdwg.mxu0
    %1233 = vmatpush.msra.mxu0 %v144
    %1234 = vmatpush.msra.mxu0 %v143
    %1235 = vmatpush.msra.mxu0 %v142
    %1236 = vmatpush.msra.mxu0 %v141
    %1237 = vmatpush.msra.mxu0 %v140
    %1238 = vmatpush.msra.mxu0 %v139
    %1239 = vmatpush.msra.mxu0 %v138
    %1240 = vmatpush.msra.mxu0 %v137
    %1241 = vmatpush.msra.mxu0 %v136
    %1242 = vmatpush.msra.mxu0 %v135
    %1243 = vmatpush.msra.mxu0 %v134
    %1244 = vmatpush.msra.mxu0 %v133
    %1245 = vmatpush.msra.mxu0 %v132
    %1246 = vmatpush.msra.mxu0 %v131
    %1247 = vmatpush.msra.mxu0 %v130
    %1248 = vmatpush.msra.mxu0 %v129
    %1249 = vmatmul.f32.gmra.mxu0 %v1105
    %v1250 = vpop.f32.mrf.mxu0
    %v1251 = vadd.f32 %v1231, %v1250
    %1252 = vdwg.mxu0
    %1253 = vmatpush.msra.mxu0 %v160
    %1254 = vmatpush.msra.mxu0 %v159
    %1255 = vmatpush.msra.mxu0 %v158
    %1256 = vmatpush.msra.mxu0 %v157
    %1257 = vmatpush.msra.mxu0 %v156
    %1258 = vmatpush.msra.mxu0 %v155
    %1259 = vmatpush.msra.mxu0 %v154
    %1260 = vmatpush.msra.mxu0 %v153
    %1261 = vmatpush.msra.mxu0 %v152
    %1262 = vmatpush.msra.mxu0 %v151
    %1263 = vmatpush.msra.mxu0 %v150
    %1264 = vmatpush.msra.mxu0 %v149
    %1265 = vmatpush.msra.mxu0 %v148
    %1266 = vmatpush.msra.mxu0 %v147
    %1267 = vmatpush.msra.mxu0 %v146
    %1268 = vmatpush.msra.mxu0 %v145
    %1269 = vmatmul.f32.gmra.mxu0 %v1112
    %v1270 = vpop.f32.mrf.mxu0
    %v1271 = vadd.f32 %v1251, %v1270
    %1272 = vdwg.mxu0
    %v1273 = vmul.f32 %v1271, 0.03125
    %vm1274 = vcmask 523264
    %v1276 = vsel %vm1274, %v1273, 0
    %1278 = vmatpush.msra.mxu0 0.0
    %1279 = vmatpush.msra.mxu0 0.0
    %1280 = vmatpush.msra.mxu0 0.0
    %1281 = vmatpush.msra.mxu0 0.0
    %1282 = vmatpush.msra.mxu0 0.0
    %1283 = vmatpush.msra.mxu0 0.0
    %1284 = vmatpush.msra.mxu0 0.0
    %1285 = vmatpush.msra.mxu0 0.0
    %1286 = vmatpush.msra.mxu0 %v217
    %1287 = vmatpush.msra.mxu0 %v209
    %1288 = vmatpush.msra.mxu0 %v201
    %1289 = vmatpush.msra.mxu0 %v193
    %1290 = vmatpush.msra.mxu0 %v185
    %1291 = vmatpush.msra.mxu0 %v177
    %1292 = vmatpush.msra.mxu0 %v169
    %1293 = vmatpush.msra.mxu0 %v161
    %1294 = vmatmul.f32.gmra.mxu0 %v1276
    %v1295 = vpop.f32.mrf.mxu0
    %v1296 = vadd.f32 0.0, %v1295
    %1297 = vdwg.mxu0
    %1298 = vmatpush.msra.mxu0 0.0
    %1299 = vmatpush.msra.mxu0 0.0
    %1300 = vmatpush.msra.mxu0 0.0
    %1301 = vmatpush.msra.mxu0 0.0
    %1302 = vmatpush.msra.mxu0 0.0
    %1303 = vmatpush.msra.mxu0 0.0
    %1304 = vmatpush.msra.mxu0 0.0
    %1305 = vmatpush.msra.mxu0 0.0
    %1306 = vmatpush.msra.mxu0 %v218
    %1307 = vmatpush.msra.mxu0 %v210
    %1308 = vmatpush.msra.mxu0 %v202
    %1309 = vmatpush.msra.mxu0 %v194
    %1310 = vmatpush.msra.mxu0 %v186
    %1311 = vmatpush.msra.mxu0 %v178
    %1312 = vmatpush.msra.mxu0 %v170
    %1313 = vmatpush.msra.mxu0 %v162
    %1314 = vmatmul.f32.gmra.mxu0 %v1276
    %v1315 = vpop.f32.mrf.mxu0
    %v1316 = vadd.f32 0.0, %v1315
    %1317 = vdwg.mxu0
    %1318 = vmatpush.msra.mxu0 0.0
    %1319 = vmatpush.msra.mxu0 0.0
    %1320 = vmatpush.msra.mxu0 0.0
    %1321 = vmatpush.msra.mxu0 0.0
    %1322 = vmatpush.msra.mxu0 0.0
    %1323 = vmatpush.msra.mxu0 0.0
    %1324 = vmatpush.msra.mxu0 0.0
    %1325 = vmatpush.msra.mxu0 0.0
    %1326 = vmatpush.msra.mxu0 %v219
    %1327 = vmatpush.msra.mxu0 %v211
    %1328 = vmatpush.msra.mxu0 %v203
    %1329 = vmatpush.msra.mxu0 %v195
    %1330 = vmatpush.msra.mxu0 %v187
    %1331 = vmatpush.msra.mxu0 %v179
    %1332 = vmatpush.msra.mxu0 %v171
    %1333 = vmatpush.msra.mxu0 %v163
    %1334 = vmatmul.f32.gmra.mxu0 %v1276
    %v1335 = vpop.f32.mrf.mxu0
    %v1336 = vadd.f32 0.0, %v1335
    %1337 = vdwg.mxu0
    %1338 = vmatpush.msra.mxu0 0.0
    %1339 = vmatpush.msra.mxu0 0.0
    %1340 = vmatpush.msra.mxu0 0.0
    %1341 = vmatpush.msra.mxu0 0.0
    %1342 = vmatpush.msra.mxu0 0.0
    %1343 = vmatpush.msra.mxu0 0.0
    %1344 = vmatpush.msra.mxu0 0.0
    %1345 = vmatpush.msra.mxu0 0.0
    %1346 = vmatpush.msra.mxu0 %v220
    %1347 = vmatpush.msra.mxu0 %v212
    %1348 = vmatpush.msra.mxu0 %v204
    %1349 = vmatpush.msra.mxu0 %v196
    %1350 = vmatpush.msra.mxu0 %v188
    %1351 = vmatpush.msra.mxu0 %v180
    %1352 = vmatpush.msra.mxu0 %v172
    %1353 = vmatpush.msra.mxu0 %v164
    %1354 = vmatmul.f32.gmra.mxu0 %v1276
    %v1355 = vpop.f32.mrf.mxu0
    %v1356 = vadd.f32 0.0, %v1355
    %1357 = vdwg.mxu0
    %1358 = vmatpush.msra.mxu0 0.0
    %1359 = vmatpush.msra.mxu0 0.0
    %1360 = vmatpush.msra.mxu0 0.0
    %1361 = vmatpush.msra.mxu0 0.0
    %1362 = vmatpush.msra.mxu0 0.0
    %1363 = vmatpush.msra.mxu0 0.0
    %1364 = vmatpush.msra.mxu0 0.0
    %1365 = vmatpush.msra.mxu0 0.0
    %1366 = vmatpush.msra.mxu0 %v221
    %1367 = vmatpush.msra.mxu0 %v213
    %1368 = vmatpush.msra.mxu0 %v205
    %1369 = vmatpush.msra.mxu0 %v197
    %1370 = vmatpush.msra.mxu0 %v189
    %1371 = vmatpush.msra.mxu0 %v181
    %1372 = vmatpush.msra.mxu0 %v173
    %1373 = vmatpush.msra.mxu0 %v165
    %1374 = vmatmul.f32.gmra.mxu0 %v1276
    %v1375 = vpop.f32.mrf.mxu0
    %v1376 = vadd.f32 0.0, %v1375
    %1377 = vdwg.mxu0
    %1378 = vmatpush.msra.mxu0 0.0
    %1379 = vmatpush.msra.mxu0 0.0
    %1380 = vmatpush.msra.mxu0 0.0
    %1381 = vmatpush.msra.mxu0 0.0
    %1382 = vmatpush.msra.mxu0 0.0
    %1383 = vmatpush.msra.mxu0 0.0
    %1384 = vmatpush.msra.mxu0 0.0
    %1385 = vmatpush.msra.mxu0 0.0
    %1386 = vmatpush.msra.mxu0 %v222
    %1387 = vmatpush.msra.mxu0 %v214
    %1388 = vmatpush.msra.mxu0 %v206
    %1389 = vmatpush.msra.mxu0 %v198
    %1390 = vmatpush.msra.mxu0 %v190
    %1391 = vmatpush.msra.mxu0 %v182
    %1392 = vmatpush.msra.mxu0 %v174
    %1393 = vmatpush.msra.mxu0 %v166
    %1394 = vmatmul.f32.gmra.mxu0 %v1276
    %v1395 = vpop.f32.mrf.mxu0
    %v1396 = vadd.f32 0.0, %v1395
    %1397 = vdwg.mxu0
    %1398 = vmatpush.msra.mxu0 0.0
    %1399 = vmatpush.msra.mxu0 0.0
    %1400 = vmatpush.msra.mxu0 0.0
    %1401 = vmatpush.msra.mxu0 0.0
    %1402 = vmatpush.msra.mxu0 0.0
    %1403 = vmatpush.msra.mxu0 0.0
    %1404 = vmatpush.msra.mxu0 0.0
    %1405 = vmatpush.msra.mxu0 0.0
    %1406 = vmatpush.msra.mxu0 %v223
    %1407 = vmatpush.msra.mxu0 %v215
    %1408 = vmatpush.msra.mxu0 %v207
    %1409 = vmatpush.msra.mxu0 %v199
    %1410 = vmatpush.msra.mxu0 %v191
    %1411 = vmatpush.msra.mxu0 %v183
    %1412 = vmatpush.msra.mxu0 %v175
    %1413 = vmatpush.msra.mxu0 %v167
    %1414 = vmatmul.f32.gmra.mxu0 %v1276
    %v1415 = vpop.f32.mrf.mxu0
    %v1416 = vadd.f32 0.0, %v1415
    %1417 = vdwg.mxu0
    %1418 = vmatpush.msra.mxu0 0.0
    %1419 = vmatpush.msra.mxu0 0.0
    %1420 = vmatpush.msra.mxu0 0.0
    %1421 = vmatpush.msra.mxu0 0.0
    %1422 = vmatpush.msra.mxu0 0.0
    %1423 = vmatpush.msra.mxu0 0.0
    %1424 = vmatpush.msra.mxu0 0.0
    %1425 = vmatpush.msra.mxu0 0.0
    %1426 = vmatpush.msra.mxu0 %v224
    %1427 = vmatpush.msra.mxu0 %v216
    %1428 = vmatpush.msra.mxu0 %v208
    %1429 = vmatpush.msra.mxu0 %v200
    %1430 = vmatpush.msra.mxu0 %v192
    %1431 = vmatpush.msra.mxu0 %v184
    %1432 = vmatpush.msra.mxu0 %v176
    %1433 = vmatpush.msra.mxu0 %v168
    %1434 = vmatmul.f32.gmra.mxu0 %v1276
    %v1435 = vpop.f32.mrf.mxu0
    %v1436 = vadd.f32 0.0, %v1435
    %1437 = vdwg.mxu0
    %v1438 = vperm.slane %v1296, 0
    %v1439 = vperm.slane %v1316, 0
    %v1440 = vperm.slane %v1336, 0
    %v1441 = vperm.slane %v1356, 0
    %v1442 = vperm.slane %v1376, 0
    %v1443 = vperm.slane %v1396, 0
    %v1444 = vperm.slane %v1416, 0
    %v1445 = vperm.slane %v1436, 0
    %v1446 = vsub.f32 %v504, %v1438
    %v1447 = vsub.f32 %v524, %v1439
    %v1448 = vsub.f32 %v544, %v1440
    %v1449 = vsub.f32 %v564, %v1441
    %v1450 = vsub.f32 %v584, %v1442
    %v1451 = vsub.f32 %v604, %v1443
    %v1452 = vsub.f32 %v953, %v1444
    %v1453 = vsub.f32 %v973, %v1445
    %v1454 = vmul.f32 %v1446, %v1446
    %v1455 = vmul.f32 %v1447, %v1447
    %v1456 = vmul.f32 %v1448, %v1448
    %v1457 = vmul.f32 %v1449, %v1449
    %v1458 = vmul.f32 %v1450, %v1450
    %v1459 = vmul.f32 %v1451, %v1451
    %v1460 = vmul.f32 %v1452, %v1452
    %v1461 = vmul.f32 %v1453, %v1453
    %v1462 = vsel %vm1056, %v1454, 0.0
    %v1463 = vrot.slane %v1462, 4
    %v1464 = vadd.f32 %v1462, %v1463
    %v1465 = vrot.slane %v1464, 2
    %v1466 = vadd.f32 %v1464, %v1465
    %v1467 = vrot.slane %v1466, 1
    %v1468 = vadd.f32 %v1466, %v1467
    %v1469 = vsel %vm1056, %v1455, 0.0
    %v1470 = vrot.slane %v1469, 4
    %v1471 = vadd.f32 %v1469, %v1470
    %v1472 = vrot.slane %v1471, 2
    %v1473 = vadd.f32 %v1471, %v1472
    %v1474 = vrot.slane %v1473, 1
    %v1475 = vadd.f32 %v1473, %v1474
    %v1476 = vsel %vm1056, %v1456, 0.0
    %v1477 = vrot.slane %v1476, 4
    %v1478 = vadd.f32 %v1476, %v1477
    %v1479 = vrot.slane %v1478, 2
    %v1480 = vadd.f32 %v1478, %v1479
    %v1481 = vrot.slane %v1480, 1
    %v1482 = vadd.f32 %v1480, %v1481
    %v1483 = vsel %vm1056, %v1457, 0.0
    %v1484 = vrot.slane %v1483, 4
    %v1485 = vadd.f32 %v1483, %v1484
    %v1486 = vrot.slane %v1485, 2
    %v1487 = vadd.f32 %v1485, %v1486
    %v1488 = vrot.slane %v1487, 1
    %v1489 = vadd.f32 %v1487, %v1488
    %v1490 = vsel %vm1056, %v1458, 0.0
    %v1491 = vrot.slane %v1490, 4
    %v1492 = vadd.f32 %v1490, %v1491
    %v1493 = vrot.slane %v1492, 2
    %v1494 = vadd.f32 %v1492, %v1493
    %v1495 = vrot.slane %v1494, 1
    %v1496 = vadd.f32 %v1494, %v1495
    %v1497 = vsel %vm1056, %v1459, 0.0
    %v1498 = vrot.slane %v1497, 4
    %v1499 = vadd.f32 %v1497, %v1498
    %v1500 = vrot.slane %v1499, 2
    %v1501 = vadd.f32 %v1499, %v1500
    %v1502 = vrot.slane %v1501, 1
    %v1503 = vadd.f32 %v1501, %v1502
    %v1504 = vsel %vm1056, %v1460, 0.0
    %v1505 = vrot.slane %v1504, 4
    %v1506 = vadd.f32 %v1504, %v1505
    %v1507 = vrot.slane %v1506, 2
    %v1508 = vadd.f32 %v1506, %v1507
    %v1509 = vrot.slane %v1508, 1
    %v1510 = vadd.f32 %v1508, %v1509
    %v1511 = vsel %vm1056, %v1461, 0.0
    %v1512 = vrot.slane %v1511, 4
    %v1513 = vadd.f32 %v1511, %v1512
    %v1514 = vrot.slane %v1513, 2
    %v1515 = vadd.f32 %v1513, %v1514
    %v1516 = vrot.slane %v1515, 1
    %v1517 = vadd.f32 %v1515, %v1516
    %1518 = vmatpush.msra.mxu0 %v48
    %1519 = vmatpush.msra.mxu0 %v47
    %1520 = vmatpush.msra.mxu0 %v46
    %1521 = vmatpush.msra.mxu0 %v45
    %1522 = vmatpush.msra.mxu0 %v44
    %1523 = vmatpush.msra.mxu0 %v43
    %1524 = vmatpush.msra.mxu0 %v42
    %1525 = vmatpush.msra.mxu0 %v41
    %1526 = vmatpush.msra.mxu0 %v40
    %1527 = vmatpush.msra.mxu0 %v39
    %1528 = vmatpush.msra.mxu0 %v38
    %1529 = vmatpush.msra.mxu0 %v37
    %1530 = vmatpush.msra.mxu0 %v36
    %1531 = vmatpush.msra.mxu0 %v35
    %1532 = vmatpush.msra.mxu0 %v34
    %1533 = vmatpush.msra.mxu0 %v33
    %1534 = vmatmul.f32.gmra.mxu0 %v1468
    %v1535 = vpop.f32.mrf.mxu0
    %v1536 = vadd.f32 0.0, %v1535
    %1537 = vdwg.mxu0
    %1538 = vmatpush.msra.mxu0 %v64
    %1539 = vmatpush.msra.mxu0 %v63
    %1540 = vmatpush.msra.mxu0 %v62
    %1541 = vmatpush.msra.mxu0 %v61
    %1542 = vmatpush.msra.mxu0 %v60
    %1543 = vmatpush.msra.mxu0 %v59
    %1544 = vmatpush.msra.mxu0 %v58
    %1545 = vmatpush.msra.mxu0 %v57
    %1546 = vmatpush.msra.mxu0 %v56
    %1547 = vmatpush.msra.mxu0 %v55
    %1548 = vmatpush.msra.mxu0 %v54
    %1549 = vmatpush.msra.mxu0 %v53
    %1550 = vmatpush.msra.mxu0 %v52
    %1551 = vmatpush.msra.mxu0 %v51
    %1552 = vmatpush.msra.mxu0 %v50
    %1553 = vmatpush.msra.mxu0 %v49
    %1554 = vmatmul.f32.gmra.mxu0 %v1475
    %v1555 = vpop.f32.mrf.mxu0
    %v1556 = vadd.f32 %v1536, %v1555
    %1557 = vdwg.mxu0
    %1558 = vmatpush.msra.mxu0 %v80
    %1559 = vmatpush.msra.mxu0 %v79
    %1560 = vmatpush.msra.mxu0 %v78
    %1561 = vmatpush.msra.mxu0 %v77
    %1562 = vmatpush.msra.mxu0 %v76
    %1563 = vmatpush.msra.mxu0 %v75
    %1564 = vmatpush.msra.mxu0 %v74
    %1565 = vmatpush.msra.mxu0 %v73
    %1566 = vmatpush.msra.mxu0 %v72
    %1567 = vmatpush.msra.mxu0 %v71
    %1568 = vmatpush.msra.mxu0 %v70
    %1569 = vmatpush.msra.mxu0 %v69
    %1570 = vmatpush.msra.mxu0 %v68
    %1571 = vmatpush.msra.mxu0 %v67
    %1572 = vmatpush.msra.mxu0 %v66
    %1573 = vmatpush.msra.mxu0 %v65
    %1574 = vmatmul.f32.gmra.mxu0 %v1482
    %v1575 = vpop.f32.mrf.mxu0
    %v1576 = vadd.f32 %v1556, %v1575
    %1577 = vdwg.mxu0
    %1578 = vmatpush.msra.mxu0 %v96
    %1579 = vmatpush.msra.mxu0 %v95
    %1580 = vmatpush.msra.mxu0 %v94
    %1581 = vmatpush.msra.mxu0 %v93
    %1582 = vmatpush.msra.mxu0 %v92
    %1583 = vmatpush.msra.mxu0 %v91
    %1584 = vmatpush.msra.mxu0 %v90
    %1585 = vmatpush.msra.mxu0 %v89
    %1586 = vmatpush.msra.mxu0 %v88
    %1587 = vmatpush.msra.mxu0 %v87
    %1588 = vmatpush.msra.mxu0 %v86
    %1589 = vmatpush.msra.mxu0 %v85
    %1590 = vmatpush.msra.mxu0 %v84
    %1591 = vmatpush.msra.mxu0 %v83
    %1592 = vmatpush.msra.mxu0 %v82
    %1593 = vmatpush.msra.mxu0 %v81
    %1594 = vmatmul.f32.gmra.mxu0 %v1489
    %v1595 = vpop.f32.mrf.mxu0
    %v1596 = vadd.f32 %v1576, %v1595
    %1597 = vdwg.mxu0
    %1598 = vmatpush.msra.mxu0 %v112
    %1599 = vmatpush.msra.mxu0 %v111
    %1600 = vmatpush.msra.mxu0 %v110
    %1601 = vmatpush.msra.mxu0 %v109
    %1602 = vmatpush.msra.mxu0 %v108
    %1603 = vmatpush.msra.mxu0 %v107
    %1604 = vmatpush.msra.mxu0 %v106
    %1605 = vmatpush.msra.mxu0 %v105
    %1606 = vmatpush.msra.mxu0 %v104
    %1607 = vmatpush.msra.mxu0 %v103
    %1608 = vmatpush.msra.mxu0 %v102
    %1609 = vmatpush.msra.mxu0 %v101
    %1610 = vmatpush.msra.mxu0 %v100
    %1611 = vmatpush.msra.mxu0 %v99
    %1612 = vmatpush.msra.mxu0 %v98
    %1613 = vmatpush.msra.mxu0 %v97
    %1614 = vmatmul.f32.gmra.mxu0 %v1496
    %v1615 = vpop.f32.mrf.mxu0
    %v1616 = vadd.f32 %v1596, %v1615
    %1617 = vdwg.mxu0
    %1618 = vmatpush.msra.mxu0 %v128
    %1619 = vmatpush.msra.mxu0 %v127
    %1620 = vmatpush.msra.mxu0 %v126
    %1621 = vmatpush.msra.mxu0 %v125
    %1622 = vmatpush.msra.mxu0 %v124
    %1623 = vmatpush.msra.mxu0 %v123
    %1624 = vmatpush.msra.mxu0 %v122
    %1625 = vmatpush.msra.mxu0 %v121
    %1626 = vmatpush.msra.mxu0 %v120
    %1627 = vmatpush.msra.mxu0 %v119
    %1628 = vmatpush.msra.mxu0 %v118
    %1629 = vmatpush.msra.mxu0 %v117
    %1630 = vmatpush.msra.mxu0 %v116
    %1631 = vmatpush.msra.mxu0 %v115
    %1632 = vmatpush.msra.mxu0 %v114
    %1633 = vmatpush.msra.mxu0 %v113
    %1634 = vmatmul.f32.gmra.mxu0 %v1503
    %v1635 = vpop.f32.mrf.mxu0
    %v1636 = vadd.f32 %v1616, %v1635
    %1637 = vdwg.mxu0
    %1638 = vmatpush.msra.mxu0 %v144
    %1639 = vmatpush.msra.mxu0 %v143
    %1640 = vmatpush.msra.mxu0 %v142
    %1641 = vmatpush.msra.mxu0 %v141
    %1642 = vmatpush.msra.mxu0 %v140
    %1643 = vmatpush.msra.mxu0 %v139
    %1644 = vmatpush.msra.mxu0 %v138
    %1645 = vmatpush.msra.mxu0 %v137
    %1646 = vmatpush.msra.mxu0 %v136
    %1647 = vmatpush.msra.mxu0 %v135
    %1648 = vmatpush.msra.mxu0 %v134
    %1649 = vmatpush.msra.mxu0 %v133
    %1650 = vmatpush.msra.mxu0 %v132
    %1651 = vmatpush.msra.mxu0 %v131
    %1652 = vmatpush.msra.mxu0 %v130
    %1653 = vmatpush.msra.mxu0 %v129
    %1654 = vmatmul.f32.gmra.mxu0 %v1510
    %v1655 = vpop.f32.mrf.mxu0
    %v1656 = vadd.f32 %v1636, %v1655
    %1657 = vdwg.mxu0
    %1658 = vmatpush.msra.mxu0 %v160
    %1659 = vmatpush.msra.mxu0 %v159
    %1660 = vmatpush.msra.mxu0 %v158
    %1661 = vmatpush.msra.mxu0 %v157
    %1662 = vmatpush.msra.mxu0 %v156
    %1663 = vmatpush.msra.mxu0 %v155
    %1664 = vmatpush.msra.mxu0 %v154
    %1665 = vmatpush.msra.mxu0 %v153
    %1666 = vmatpush.msra.mxu0 %v152
    %1667 = vmatpush.msra.mxu0 %v151
    %1668 = vmatpush.msra.mxu0 %v150
    %1669 = vmatpush.msra.mxu0 %v149
    %1670 = vmatpush.msra.mxu0 %v148
    %1671 = vmatpush.msra.mxu0 %v147
    %1672 = vmatpush.msra.mxu0 %v146
    %1673 = vmatpush.msra.mxu0 %v145
    %1674 = vmatmul.f32.gmra.mxu0 %v1517
    %v1675 = vpop.f32.mrf.mxu0
    %v1676 = vadd.f32 %v1656, %v1675
    %1677 = vdwg.mxu0
    %v1678 = vmul.f32 %v1676, 0.03125
    %v1679 = vld [vmem:[%s5] sm:$0x1]
    %v1680 = vadd.f32 %v1678, 1e-05
    %v1681 = vrsqrt.pop %v1680
    %v1682 = vmul.f32 %v1681, %v1680
    %v1683 = vmul.f32 %v1682, %v1681
    %v1684 = vmul.f32 0.5, %v1683
    %v1685 = vsub.f32 1.5, %v1684
    %v1686 = vmul.f32 %v1681, %v1685
    %vm1687 = vweird.f32 %v1680
    %vm1688 = vweird.f32 %v1681
    %vm1689 = vmor %vm1687, %vm1688
    %v1690 = vsel %vm1689, %v1681, %v1686
    %v1691 = vmul.f32 %v1679, %v1690
    %v1692 = vld [vmem:[%s6] sm:$0x1]
    %v1694 = vrot.slane %v1692, 7
    %vm1696 = vcmask 1040384
    %v1697 = vsel %vm1696, %v1691, %v1694
    %v1699 = vsel %vm1274, %v1697, 0
    %1701 = vmatpush.msra.mxu0 0.0
    %1702 = vmatpush.msra.mxu0 0.0
    %1703 = vmatpush.msra.mxu0 0.0
    %1704 = vmatpush.msra.mxu0 0.0
    %1705 = vmatpush.msra.mxu0 0.0
    %1706 = vmatpush.msra.mxu0 0.0
    %1707 = vmatpush.msra.mxu0 0.0
    %1708 = vmatpush.msra.mxu0 0.0
    %1709 = vmatpush.msra.mxu0 %v217
    %1710 = vmatpush.msra.mxu0 %v209
    %1711 = vmatpush.msra.mxu0 %v201
    %1712 = vmatpush.msra.mxu0 %v193
    %1713 = vmatpush.msra.mxu0 %v185
    %1714 = vmatpush.msra.mxu0 %v177
    %1715 = vmatpush.msra.mxu0 %v169
    %1716 = vmatpush.msra.mxu0 %v161
    %1717 = vmatmul.f32.gmra.mxu0 %v1699
    %v1718 = vpop.f32.mrf.mxu0
    %v1719 = vadd.f32 0.0, %v1718
    %1720 = vdwg.mxu0
    %1721 = vmatpush.msra.mxu0 0.0
    %1722 = vmatpush.msra.mxu0 0.0
    %1723 = vmatpush.msra.mxu0 0.0
    %1724 = vmatpush.msra.mxu0 0.0
    %1725 = vmatpush.msra.mxu0 0.0
    %1726 = vmatpush.msra.mxu0 0.0
    %1727 = vmatpush.msra.mxu0 0.0
    %1728 = vmatpush.msra.mxu0 0.0
    %1729 = vmatpush.msra.mxu0 %v218
    %1730 = vmatpush.msra.mxu0 %v210
    %1731 = vmatpush.msra.mxu0 %v202
    %1732 = vmatpush.msra.mxu0 %v194
    %1733 = vmatpush.msra.mxu0 %v186
    %1734 = vmatpush.msra.mxu0 %v178
    %1735 = vmatpush.msra.mxu0 %v170
    %1736 = vmatpush.msra.mxu0 %v162
    %1737 = vmatmul.f32.gmra.mxu0 %v1699
    %v1738 = vpop.f32.mrf.mxu0
    %v1739 = vadd.f32 0.0, %v1738
    %1740 = vdwg.mxu0
    %1741 = vmatpush.msra.mxu0 0.0
    %1742 = vmatpush.msra.mxu0 0.0
    %1743 = vmatpush.msra.mxu0 0.0
    %1744 = vmatpush.msra.mxu0 0.0
    %1745 = vmatpush.msra.mxu0 0.0
    %1746 = vmatpush.msra.mxu0 0.0
    %1747 = vmatpush.msra.mxu0 0.0
    %1748 = vmatpush.msra.mxu0 0.0
    %1749 = vmatpush.msra.mxu0 %v219
    %1750 = vmatpush.msra.mxu0 %v211
    %1751 = vmatpush.msra.mxu0 %v203
    %1752 = vmatpush.msra.mxu0 %v195
    %1753 = vmatpush.msra.mxu0 %v187
    %1754 = vmatpush.msra.mxu0 %v179
    %1755 = vmatpush.msra.mxu0 %v171
    %1756 = vmatpush.msra.mxu0 %v163
    %1757 = vmatmul.f32.gmra.mxu0 %v1699
    %v1758 = vpop.f32.mrf.mxu0
    %v1759 = vadd.f32 0.0, %v1758
    %1760 = vdwg.mxu0
    %1761 = vmatpush.msra.mxu0 0.0
    %1762 = vmatpush.msra.mxu0 0.0
    %1763 = vmatpush.msra.mxu0 0.0
    %1764 = vmatpush.msra.mxu0 0.0
    %1765 = vmatpush.msra.mxu0 0.0
    %1766 = vmatpush.msra.mxu0 0.0
    %1767 = vmatpush.msra.mxu0 0.0
    %1768 = vmatpush.msra.mxu0 0.0
    %1769 = vmatpush.msra.mxu0 %v220
    %1770 = vmatpush.msra.mxu0 %v212
    %1771 = vmatpush.msra.mxu0 %v204
    %1772 = vmatpush.msra.mxu0 %v196
    %1773 = vmatpush.msra.mxu0 %v188
    %1774 = vmatpush.msra.mxu0 %v180
    %1775 = vmatpush.msra.mxu0 %v172
    %1776 = vmatpush.msra.mxu0 %v164
    %1777 = vmatmul.f32.gmra.mxu0 %v1699
    %v1778 = vpop.f32.mrf.mxu0
    %v1779 = vadd.f32 0.0, %v1778
    %1780 = vdwg.mxu0
    %1781 = vmatpush.msra.mxu0 0.0
    %1782 = vmatpush.msra.mxu0 0.0
    %1783 = vmatpush.msra.mxu0 0.0
    %1784 = vmatpush.msra.mxu0 0.0
    %1785 = vmatpush.msra.mxu0 0.0
    %1786 = vmatpush.msra.mxu0 0.0
    %1787 = vmatpush.msra.mxu0 0.0
    %1788 = vmatpush.msra.mxu0 0.0
    %1789 = vmatpush.msra.mxu0 %v221
    %1790 = vmatpush.msra.mxu0 %v213
    %1791 = vmatpush.msra.mxu0 %v205
    %1792 = vmatpush.msra.mxu0 %v197
    %1793 = vmatpush.msra.mxu0 %v189
    %1794 = vmatpush.msra.mxu0 %v181
    %1795 = vmatpush.msra.mxu0 %v173
    %1796 = vmatpush.msra.mxu0 %v165
    %1797 = vmatmul.f32.gmra.mxu0 %v1699
    %v1798 = vpop.f32.mrf.mxu0
    %v1799 = vadd.f32 0.0, %v1798
    %1800 = vdwg.mxu0
    %1801 = vmatpush.msra.mxu0 0.0
    %1802 = vmatpush.msra.mxu0 0.0
    %1803 = vmatpush.msra.mxu0 0.0
    %1804 = vmatpush.msra.mxu0 0.0
    %1805 = vmatpush.msra.mxu0 0.0
    %1806 = vmatpush.msra.mxu0 0.0
    %1807 = vmatpush.msra.mxu0 0.0
    %1808 = vmatpush.msra.mxu0 0.0
    %1809 = vmatpush.msra.mxu0 %v222
    %1810 = vmatpush.msra.mxu0 %v214
    %1811 = vmatpush.msra.mxu0 %v206
    %1812 = vmatpush.msra.mxu0 %v198
    %1813 = vmatpush.msra.mxu0 %v190
    %1814 = vmatpush.msra.mxu0 %v182
    %1815 = vmatpush.msra.mxu0 %v174
    %1816 = vmatpush.msra.mxu0 %v166
    %1817 = vmatmul.f32.gmra.mxu0 %v1699
    %v1818 = vpop.f32.mrf.mxu0
    %v1819 = vadd.f32 0.0, %v1818
    %1820 = vdwg.mxu0
    %1821 = vmatpush.msra.mxu0 0.0
    %1822 = vmatpush.msra.mxu0 0.0
    %1823 = vmatpush.msra.mxu0 0.0
    %1824 = vmatpush.msra.mxu0 0.0
    %1825 = vmatpush.msra.mxu0 0.0
    %1826 = vmatpush.msra.mxu0 0.0
    %1827 = vmatpush.msra.mxu0 0.0
    %1828 = vmatpush.msra.mxu0 0.0
    %1829 = vmatpush.msra.mxu0 %v223
    %1830 = vmatpush.msra.mxu0 %v215
    %1831 = vmatpush.msra.mxu0 %v207
    %1832 = vmatpush.msra.mxu0 %v199
    %1833 = vmatpush.msra.mxu0 %v191
    %1834 = vmatpush.msra.mxu0 %v183
    %1835 = vmatpush.msra.mxu0 %v175
    %1836 = vmatpush.msra.mxu0 %v167
    %1837 = vmatmul.f32.gmra.mxu0 %v1699
    %v1838 = vpop.f32.mrf.mxu0
    %v1839 = vadd.f32 0.0, %v1838
    %1840 = vdwg.mxu0
    %1841 = vmatpush.msra.mxu0 0.0
    %1842 = vmatpush.msra.mxu0 0.0
    %1843 = vmatpush.msra.mxu0 0.0
    %1844 = vmatpush.msra.mxu0 0.0
    %1845 = vmatpush.msra.mxu0 0.0
    %1846 = vmatpush.msra.mxu0 0.0
    %1847 = vmatpush.msra.mxu0 0.0
    %1848 = vmatpush.msra.mxu0 0.0
    %1849 = vmatpush.msra.mxu0 %v224
    %1850 = vmatpush.msra.mxu0 %v216
    %1851 = vmatpush.msra.mxu0 %v208
    %1852 = vmatpush.msra.mxu0 %v200
    %1853 = vmatpush.msra.mxu0 %v192
    %1854 = vmatpush.msra.mxu0 %v184
    %1855 = vmatpush.msra.mxu0 %v176
    %1856 = vmatpush.msra.mxu0 %v168
    %1857 = vmatmul.f32.gmra.mxu0 %v1699
    %v1858 = vpop.f32.mrf.mxu0
    %v1859 = vadd.f32 0.0, %v1858
    %1860 = vdwg.mxu0
    %v1861 = vperm.slane %v1719, 0
    %v1862 = vperm.slane %v1739, 0
    %v1863 = vperm.slane %v1759, 0
    %v1864 = vperm.slane %v1779, 0
    %v1865 = vperm.slane %v1799, 0
    %v1866 = vperm.slane %v1819, 0
    %v1867 = vperm.slane %v1839, 0
    %v1868 = vperm.slane %v1859, 0
    %v1869 = vmul.f32 %v1446, %v1861
    %v1870 = vmul.f32 %v1447, %v1862
    %v1871 = vmul.f32 %v1448, %v1863
    %v1872 = vmul.f32 %v1449, %v1864
    %v1873 = vmul.f32 %v1450, %v1865
    %v1874 = vmul.f32 %v1451, %v1866
    %v1875 = vmul.f32 %v1452, %v1867
    %v1876 = vmul.f32 %v1453, %v1868
    %v1877 = vperm.slane %v1719, 1
    %v1878 = vperm.slane %v1739, 1
    %v1879 = vperm.slane %v1759, 1
    %v1880 = vperm.slane %v1779, 1
    %v1881 = vperm.slane %v1799, 1
    %v1882 = vperm.slane %v1819, 1
    %v1883 = vperm.slane %v1839, 1
    %v1884 = vperm.slane %v1859, 1
    %v1885 = vadd.f32 %v1869, %v1877
    %v1886 = vadd.f32 %v1870, %v1878
    %v1887 = vadd.f32 %v1871, %v1879
    %v1888 = vadd.f32 %v1872, %v1880
    %v1889 = vadd.f32 %v1873, %v1881
    %v1890 = vadd.f32 %v1874, %v1882
    %v1891 = vadd.f32 %v1875, %v1883
    %v1892 = vadd.f32 %v1876, %v1884
    %v1893 = vmax.f32 %v1885, 0.0
    %v1894 = vmax.f32 %v1886, 0.0
    %v1895 = vmax.f32 %v1887, 0.0
    %v1896 = vmax.f32 %v1888, 0.0
    %v1897 = vmax.f32 %v1889, 0.0
    %v1898 = vmax.f32 %v1890, 0.0
    %v1899 = vmax.f32 %v1891, 0.0
    %v1900 = vmax.f32 %v1892, 0.0
    %1901 = vmatpush.msra.mxu0 %v48
    %1902 = vmatpush.msra.mxu0 %v47
    %1903 = vmatpush.msra.mxu0 %v46
    %1904 = vmatpush.msra.mxu0 %v45
    %1905 = vmatpush.msra.mxu0 %v44
    %1906 = vmatpush.msra.mxu0 %v43
    %1907 = vmatpush.msra.mxu0 %v42
    %1908 = vmatpush.msra.mxu0 %v41
    %1909 = vmatpush.msra.mxu0 %v40
    %1910 = vmatpush.msra.mxu0 %v39
    %1911 = vmatpush.msra.mxu0 %v38
    %1912 = vmatpush.msra.mxu0 %v37
    %1913 = vmatpush.msra.mxu0 %v36
    %1914 = vmatpush.msra.mxu0 %v35
    %1915 = vmatpush.msra.mxu0 %v34
    %1916 = vmatpush.msra.mxu0 %v33
    %1917 = vmatmul.f32.gmra.mxu0 %v1893
    %v1918 = vpop.f32.mrf.mxu0
    %v1919 = vadd.f32 0.0, %v1918
    %1920 = vdwg.mxu0
    %1921 = vmatpush.msra.mxu0 %v64
    %1922 = vmatpush.msra.mxu0 %v63
    %1923 = vmatpush.msra.mxu0 %v62
    %1924 = vmatpush.msra.mxu0 %v61
    %1925 = vmatpush.msra.mxu0 %v60
    %1926 = vmatpush.msra.mxu0 %v59
    %1927 = vmatpush.msra.mxu0 %v58
    %1928 = vmatpush.msra.mxu0 %v57
    %1929 = vmatpush.msra.mxu0 %v56
    %1930 = vmatpush.msra.mxu0 %v55
    %1931 = vmatpush.msra.mxu0 %v54
    %1932 = vmatpush.msra.mxu0 %v53
    %1933 = vmatpush.msra.mxu0 %v52
    %1934 = vmatpush.msra.mxu0 %v51
    %1935 = vmatpush.msra.mxu0 %v50
    %1936 = vmatpush.msra.mxu0 %v49
    %1937 = vmatmul.f32.gmra.mxu0 %v1894
    %v1938 = vpop.f32.mrf.mxu0
    %v1939 = vadd.f32 %v1919, %v1938
    %1940 = vdwg.mxu0
    %1941 = vmatpush.msra.mxu0 %v80
    %1942 = vmatpush.msra.mxu0 %v79
    %1943 = vmatpush.msra.mxu0 %v78
    %1944 = vmatpush.msra.mxu0 %v77
    %1945 = vmatpush.msra.mxu0 %v76
    %1946 = vmatpush.msra.mxu0 %v75
    %1947 = vmatpush.msra.mxu0 %v74
    %1948 = vmatpush.msra.mxu0 %v73
    %1949 = vmatpush.msra.mxu0 %v72
    %1950 = vmatpush.msra.mxu0 %v71
    %1951 = vmatpush.msra.mxu0 %v70
    %1952 = vmatpush.msra.mxu0 %v69
    %1953 = vmatpush.msra.mxu0 %v68
    %1954 = vmatpush.msra.mxu0 %v67
    %1955 = vmatpush.msra.mxu0 %v66
    %1956 = vmatpush.msra.mxu0 %v65
    %1957 = vmatmul.f32.gmra.mxu0 %v1895
    %v1958 = vpop.f32.mrf.mxu0
    %v1959 = vadd.f32 %v1939, %v1958
    %1960 = vdwg.mxu0
    %1961 = vmatpush.msra.mxu0 %v96
    %1962 = vmatpush.msra.mxu0 %v95
    %1963 = vmatpush.msra.mxu0 %v94
    %1964 = vmatpush.msra.mxu0 %v93
    %1965 = vmatpush.msra.mxu0 %v92
    %1966 = vmatpush.msra.mxu0 %v91
    %1967 = vmatpush.msra.mxu0 %v90
    %1968 = vmatpush.msra.mxu0 %v89
    %1969 = vmatpush.msra.mxu0 %v88
    %1970 = vmatpush.msra.mxu0 %v87
    %1971 = vmatpush.msra.mxu0 %v86
    %1972 = vmatpush.msra.mxu0 %v85
    %1973 = vmatpush.msra.mxu0 %v84
    %1974 = vmatpush.msra.mxu0 %v83
    %1975 = vmatpush.msra.mxu0 %v82
    %1976 = vmatpush.msra.mxu0 %v81
    %1977 = vmatmul.f32.gmra.mxu0 %v1896
    %v1978 = vpop.f32.mrf.mxu0
    %v1979 = vadd.f32 %v1959, %v1978
    %1980 = vdwg.mxu0
    %1981 = vmatpush.msra.mxu0 %v112
    %1982 = vmatpush.msra.mxu0 %v111
    %1983 = vmatpush.msra.mxu0 %v110
    %1984 = vmatpush.msra.mxu0 %v109
    %1985 = vmatpush.msra.mxu0 %v108
    %1986 = vmatpush.msra.mxu0 %v107
    %1987 = vmatpush.msra.mxu0 %v106
    %1988 = vmatpush.msra.mxu0 %v105
    %1989 = vmatpush.msra.mxu0 %v104
    %1990 = vmatpush.msra.mxu0 %v103
    %1991 = vmatpush.msra.mxu0 %v102
    %1992 = vmatpush.msra.mxu0 %v101
    %1993 = vmatpush.msra.mxu0 %v100
    %1994 = vmatpush.msra.mxu0 %v99
    %1995 = vmatpush.msra.mxu0 %v98
    %1996 = vmatpush.msra.mxu0 %v97
    %1997 = vmatmul.f32.gmra.mxu0 %v1897
    %v1998 = vpop.f32.mrf.mxu0
    %v1999 = vadd.f32 %v1979, %v1998
    %2000 = vdwg.mxu0
    %2001 = vmatpush.msra.mxu0 %v128
    %2002 = vmatpush.msra.mxu0 %v127
    %2003 = vmatpush.msra.mxu0 %v126
    %2004 = vmatpush.msra.mxu0 %v125
    %2005 = vmatpush.msra.mxu0 %v124
    %2006 = vmatpush.msra.mxu0 %v123
    %2007 = vmatpush.msra.mxu0 %v122
    %2008 = vmatpush.msra.mxu0 %v121
    %2009 = vmatpush.msra.mxu0 %v120
    %2010 = vmatpush.msra.mxu0 %v119
    %2011 = vmatpush.msra.mxu0 %v118
    %2012 = vmatpush.msra.mxu0 %v117
    %2013 = vmatpush.msra.mxu0 %v116
    %2014 = vmatpush.msra.mxu0 %v115
    %2015 = vmatpush.msra.mxu0 %v114
    %2016 = vmatpush.msra.mxu0 %v113
    %2017 = vmatmul.f32.gmra.mxu0 %v1898
    %v2018 = vpop.f32.mrf.mxu0
    %v2019 = vadd.f32 %v1999, %v2018
    %2020 = vdwg.mxu0
    %2021 = vmatpush.msra.mxu0 %v144
    %2022 = vmatpush.msra.mxu0 %v143
    %2023 = vmatpush.msra.mxu0 %v142
    %2024 = vmatpush.msra.mxu0 %v141
    %2025 = vmatpush.msra.mxu0 %v140
    %2026 = vmatpush.msra.mxu0 %v139
    %2027 = vmatpush.msra.mxu0 %v138
    %2028 = vmatpush.msra.mxu0 %v137
    %2029 = vmatpush.msra.mxu0 %v136
    %2030 = vmatpush.msra.mxu0 %v135
    %2031 = vmatpush.msra.mxu0 %v134
    %2032 = vmatpush.msra.mxu0 %v133
    %2033 = vmatpush.msra.mxu0 %v132
    %2034 = vmatpush.msra.mxu0 %v131
    %2035 = vmatpush.msra.mxu0 %v130
    %2036 = vmatpush.msra.mxu0 %v129
    %2037 = vmatmul.f32.gmra.mxu0 %v1899
    %v2038 = vpop.f32.mrf.mxu0
    %v2039 = vadd.f32 %v2019, %v2038
    %2040 = vdwg.mxu0
    %2041 = vmatpush.msra.mxu0 %v160
    %2042 = vmatpush.msra.mxu0 %v159
    %2043 = vmatpush.msra.mxu0 %v158
    %2044 = vmatpush.msra.mxu0 %v157
    %2045 = vmatpush.msra.mxu0 %v156
    %2046 = vmatpush.msra.mxu0 %v155
    %2047 = vmatpush.msra.mxu0 %v154
    %2048 = vmatpush.msra.mxu0 %v153
    %2049 = vmatpush.msra.mxu0 %v152
    %2050 = vmatpush.msra.mxu0 %v151
    %2051 = vmatpush.msra.mxu0 %v150
    %2052 = vmatpush.msra.mxu0 %v149
    %2053 = vmatpush.msra.mxu0 %v148
    %2054 = vmatpush.msra.mxu0 %v147
    %2055 = vmatpush.msra.mxu0 %v146
    %2056 = vmatpush.msra.mxu0 %v145
    %2057 = vmatmul.f32.gmra.mxu0 %v1900
    %v2058 = vpop.f32.mrf.mxu0
    %v2059 = vadd.f32 %v2039, %v2058
    %2060 = vdwg.mxu0
    %v2061 = vmul.f32 %v2059, 0.0625
    %v2062 = vld [vmem:[%s7] sm:$0xff]
    %v2063 = vld [vmem:[%s7 + $0x8] sm:$0xff]
    %v2064 = vld [vmem:[%s7 + $0x10] sm:$0xff]
    %v2065 = vld [vmem:[%s7 + $0x18] sm:$0xff]
    %v2066 = vld [vmem:[%s7 + $0x20] sm:$0xff]
    %v2067 = vld [vmem:[%s7 + $0x28] sm:$0xff]
    %v2068 = vld [vmem:[%s7 + $0x30] sm:$0xff]
    %v2069 = vld [vmem:[%s7 + $0x38] sm:$0xff]
    %v2071 = vsel %vm1274, %v2061, 0
    %2073 = vmatpush.msra.mxu0 0.0
    %2074 = vmatpush.msra.mxu0 0.0
    %2075 = vmatpush.msra.mxu0 0.0
    %2076 = vmatpush.msra.mxu0 0.0
    %2077 = vmatpush.msra.mxu0 0.0
    %2078 = vmatpush.msra.mxu0 0.0
    %2079 = vmatpush.msra.mxu0 0.0
    %2080 = vmatpush.msra.mxu0 0.0
    %2081 = vmatpush.msra.mxu0 %v2069
    %2082 = vmatpush.msra.mxu0 %v2068
    %2083 = vmatpush.msra.mxu0 %v2067
    %2084 = vmatpush.msra.mxu0 %v2066
    %2085 = vmatpush.msra.mxu0 %v2065
    %2086 = vmatpush.msra.mxu0 %v2064
    %2087 = vmatpush.msra.mxu0 %v2063
    %2088 = vmatpush.msra.mxu0 %v2062
    %2089 = vmatmul.f32.gmra.mxu0 %v2071
    %v2090 = vpop.f32.mrf.mxu0
    %v2091 = vadd.f32 0.0, %v2090
    %2092 = vdwg.mxu0
    %v2094 = vperm.slane %v1055, 0
    %v2096 = vadd.f32 %v2094, %v2091
    %v2097 = vsel %vm1056, %v624, 0.0
    %v2098 = vrot.slane %v2097, 4
    %v2099 = vadd.f32 %v2097, %v2098
    %v2100 = vrot.slane %v2099, 2
    %v2101 = vadd.f32 %v2099, %v2100
    %v2102 = vrot.slane %v2101, 1
    %v2103 = vadd.f32 %v2101, %v2102
    %v2104 = vsel %vm1056, %v644, 0.0
    %v2105 = vrot.slane %v2104, 4
    %v2106 = vadd.f32 %v2104, %v2105
    %v2107 = vrot.slane %v2106, 2
    %v2108 = vadd.f32 %v2106, %v2107
    %v2109 = vrot.slane %v2108, 1
    %v2110 = vadd.f32 %v2108, %v2109
    %v2111 = vsel %vm1056, %v664, 0.0
    %v2112 = vrot.slane %v2111, 4
    %v2113 = vadd.f32 %v2111, %v2112
    %v2114 = vrot.slane %v2113, 2
    %v2115 = vadd.f32 %v2113, %v2114
    %v2116 = vrot.slane %v2115, 1
    %v2117 = vadd.f32 %v2115, %v2116
    %v2118 = vsel %vm1056, %v684, 0.0
    %v2119 = vrot.slane %v2118, 4
    %v2120 = vadd.f32 %v2118, %v2119
    %v2121 = vrot.slane %v2120, 2
    %v2122 = vadd.f32 %v2120, %v2121
    %v2123 = vrot.slane %v2122, 1
    %v2124 = vadd.f32 %v2122, %v2123
    %v2125 = vsel %vm1056, %v704, 0.0
    %v2126 = vrot.slane %v2125, 4
    %v2127 = vadd.f32 %v2125, %v2126
    %v2128 = vrot.slane %v2127, 2
    %v2129 = vadd.f32 %v2127, %v2128
    %v2130 = vrot.slane %v2129, 1
    %v2131 = vadd.f32 %v2129, %v2130
    %v2132 = vsel %vm1056, %v724, 0.0
    %v2133 = vrot.slane %v2132, 4
    %v2134 = vadd.f32 %v2132, %v2133
    %v2135 = vrot.slane %v2134, 2
    %v2136 = vadd.f32 %v2134, %v2135
    %v2137 = vrot.slane %v2136, 1
    %v2138 = vadd.f32 %v2136, %v2137
    %v2139 = vsel %vm1056, %v993, 0.0
    %v2140 = vrot.slane %v2139, 4
    %v2141 = vadd.f32 %v2139, %v2140
    %v2142 = vrot.slane %v2141, 2
    %v2143 = vadd.f32 %v2141, %v2142
    %v2144 = vrot.slane %v2143, 1
    %v2145 = vadd.f32 %v2143, %v2144
    %v2146 = vsel %vm1056, %v1013, 0.0
    %v2147 = vrot.slane %v2146, 4
    %v2148 = vadd.f32 %v2146, %v2147
    %v2149 = vrot.slane %v2148, 2
    %v2150 = vadd.f32 %v2148, %v2149
    %v2151 = vrot.slane %v2150, 1
    %v2152 = vadd.f32 %v2150, %v2151
    %2153 = vmatpush.msra.mxu0 %v48
    %2154 = vmatpush.msra.mxu0 %v47
    %2155 = vmatpush.msra.mxu0 %v46
    %2156 = vmatpush.msra.mxu0 %v45
    %2157 = vmatpush.msra.mxu0 %v44
    %2158 = vmatpush.msra.mxu0 %v43
    %2159 = vmatpush.msra.mxu0 %v42
    %2160 = vmatpush.msra.mxu0 %v41
    %2161 = vmatpush.msra.mxu0 %v40
    %2162 = vmatpush.msra.mxu0 %v39
    %2163 = vmatpush.msra.mxu0 %v38
    %2164 = vmatpush.msra.mxu0 %v37
    %2165 = vmatpush.msra.mxu0 %v36
    %2166 = vmatpush.msra.mxu0 %v35
    %2167 = vmatpush.msra.mxu0 %v34
    %2168 = vmatpush.msra.mxu0 %v33
    %2169 = vmatmul.f32.gmra.mxu0 %v2103
    %v2170 = vpop.f32.mrf.mxu0
    %v2171 = vadd.f32 0.0, %v2170
    %2172 = vdwg.mxu0
    %2173 = vmatpush.msra.mxu0 %v64
    %2174 = vmatpush.msra.mxu0 %v63
    %2175 = vmatpush.msra.mxu0 %v62
    %2176 = vmatpush.msra.mxu0 %v61
    %2177 = vmatpush.msra.mxu0 %v60
    %2178 = vmatpush.msra.mxu0 %v59
    %2179 = vmatpush.msra.mxu0 %v58
    %2180 = vmatpush.msra.mxu0 %v57
    %2181 = vmatpush.msra.mxu0 %v56
    %2182 = vmatpush.msra.mxu0 %v55
    %2183 = vmatpush.msra.mxu0 %v54
    %2184 = vmatpush.msra.mxu0 %v53
    %2185 = vmatpush.msra.mxu0 %v52
    %2186 = vmatpush.msra.mxu0 %v51
    %2187 = vmatpush.msra.mxu0 %v50
    %2188 = vmatpush.msra.mxu0 %v49
    %2189 = vmatmul.f32.gmra.mxu0 %v2110
    %v2190 = vpop.f32.mrf.mxu0
    %v2191 = vadd.f32 %v2171, %v2190
    %2192 = vdwg.mxu0
    %2193 = vmatpush.msra.mxu0 %v80
    %2194 = vmatpush.msra.mxu0 %v79
    %2195 = vmatpush.msra.mxu0 %v78
    %2196 = vmatpush.msra.mxu0 %v77
    %2197 = vmatpush.msra.mxu0 %v76
    %2198 = vmatpush.msra.mxu0 %v75
    %2199 = vmatpush.msra.mxu0 %v74
    %2200 = vmatpush.msra.mxu0 %v73
    %2201 = vmatpush.msra.mxu0 %v72
    %2202 = vmatpush.msra.mxu0 %v71
    %2203 = vmatpush.msra.mxu0 %v70
    %2204 = vmatpush.msra.mxu0 %v69
    %2205 = vmatpush.msra.mxu0 %v68
    %2206 = vmatpush.msra.mxu0 %v67
    %2207 = vmatpush.msra.mxu0 %v66
    %2208 = vmatpush.msra.mxu0 %v65
    %2209 = vmatmul.f32.gmra.mxu0 %v2117
    %v2210 = vpop.f32.mrf.mxu0
    %v2211 = vadd.f32 %v2191, %v2210
    %2212 = vdwg.mxu0
    %2213 = vmatpush.msra.mxu0 %v96
    %2214 = vmatpush.msra.mxu0 %v95
    %2215 = vmatpush.msra.mxu0 %v94
    %2216 = vmatpush.msra.mxu0 %v93
    %2217 = vmatpush.msra.mxu0 %v92
    %2218 = vmatpush.msra.mxu0 %v91
    %2219 = vmatpush.msra.mxu0 %v90
    %2220 = vmatpush.msra.mxu0 %v89
    %2221 = vmatpush.msra.mxu0 %v88
    %2222 = vmatpush.msra.mxu0 %v87
    %2223 = vmatpush.msra.mxu0 %v86
    %2224 = vmatpush.msra.mxu0 %v85
    %2225 = vmatpush.msra.mxu0 %v84
    %2226 = vmatpush.msra.mxu0 %v83
    %2227 = vmatpush.msra.mxu0 %v82
    %2228 = vmatpush.msra.mxu0 %v81
    %2229 = vmatmul.f32.gmra.mxu0 %v2124
    %v2230 = vpop.f32.mrf.mxu0
    %v2231 = vadd.f32 %v2211, %v2230
    %2232 = vdwg.mxu0
    %2233 = vmatpush.msra.mxu0 %v112
    %2234 = vmatpush.msra.mxu0 %v111
    %2235 = vmatpush.msra.mxu0 %v110
    %2236 = vmatpush.msra.mxu0 %v109
    %2237 = vmatpush.msra.mxu0 %v108
    %2238 = vmatpush.msra.mxu0 %v107
    %2239 = vmatpush.msra.mxu0 %v106
    %2240 = vmatpush.msra.mxu0 %v105
    %2241 = vmatpush.msra.mxu0 %v104
    %2242 = vmatpush.msra.mxu0 %v103
    %2243 = vmatpush.msra.mxu0 %v102
    %2244 = vmatpush.msra.mxu0 %v101
    %2245 = vmatpush.msra.mxu0 %v100
    %2246 = vmatpush.msra.mxu0 %v99
    %2247 = vmatpush.msra.mxu0 %v98
    %2248 = vmatpush.msra.mxu0 %v97
    %2249 = vmatmul.f32.gmra.mxu0 %v2131
    %v2250 = vpop.f32.mrf.mxu0
    %v2251 = vadd.f32 %v2231, %v2250
    %2252 = vdwg.mxu0
    %2253 = vmatpush.msra.mxu0 %v128
    %2254 = vmatpush.msra.mxu0 %v127
    %2255 = vmatpush.msra.mxu0 %v126
    %2256 = vmatpush.msra.mxu0 %v125
    %2257 = vmatpush.msra.mxu0 %v124
    %2258 = vmatpush.msra.mxu0 %v123
    %2259 = vmatpush.msra.mxu0 %v122
    %2260 = vmatpush.msra.mxu0 %v121
    %2261 = vmatpush.msra.mxu0 %v120
    %2262 = vmatpush.msra.mxu0 %v119
    %2263 = vmatpush.msra.mxu0 %v118
    %2264 = vmatpush.msra.mxu0 %v117
    %2265 = vmatpush.msra.mxu0 %v116
    %2266 = vmatpush.msra.mxu0 %v115
    %2267 = vmatpush.msra.mxu0 %v114
    %2268 = vmatpush.msra.mxu0 %v113
    %2269 = vmatmul.f32.gmra.mxu0 %v2138
    %v2270 = vpop.f32.mrf.mxu0
    %v2271 = vadd.f32 %v2251, %v2270
    %2272 = vdwg.mxu0
    %2273 = vmatpush.msra.mxu0 %v144
    %2274 = vmatpush.msra.mxu0 %v143
    %2275 = vmatpush.msra.mxu0 %v142
    %2276 = vmatpush.msra.mxu0 %v141
    %2277 = vmatpush.msra.mxu0 %v140
    %2278 = vmatpush.msra.mxu0 %v139
    %2279 = vmatpush.msra.mxu0 %v138
    %2280 = vmatpush.msra.mxu0 %v137
    %2281 = vmatpush.msra.mxu0 %v136
    %2282 = vmatpush.msra.mxu0 %v135
    %2283 = vmatpush.msra.mxu0 %v134
    %2284 = vmatpush.msra.mxu0 %v133
    %2285 = vmatpush.msra.mxu0 %v132
    %2286 = vmatpush.msra.mxu0 %v131
    %2287 = vmatpush.msra.mxu0 %v130
    %2288 = vmatpush.msra.mxu0 %v129
    %2289 = vmatmul.f32.gmra.mxu0 %v2145
    %v2290 = vpop.f32.mrf.mxu0
    %v2291 = vadd.f32 %v2271, %v2290
    %2292 = vdwg.mxu0
    %2293 = vmatpush.msra.mxu0 %v160
    %2294 = vmatpush.msra.mxu0 %v159
    %2295 = vmatpush.msra.mxu0 %v158
    %2296 = vmatpush.msra.mxu0 %v157
    %2297 = vmatpush.msra.mxu0 %v156
    %2298 = vmatpush.msra.mxu0 %v155
    %2299 = vmatpush.msra.mxu0 %v154
    %2300 = vmatpush.msra.mxu0 %v153
    %2301 = vmatpush.msra.mxu0 %v152
    %2302 = vmatpush.msra.mxu0 %v151
    %2303 = vmatpush.msra.mxu0 %v150
    %2304 = vmatpush.msra.mxu0 %v149
    %2305 = vmatpush.msra.mxu0 %v148
    %2306 = vmatpush.msra.mxu0 %v147
    %2307 = vmatpush.msra.mxu0 %v146
    %2308 = vmatpush.msra.mxu0 %v145
    %2309 = vmatmul.f32.gmra.mxu0 %v2152
    %v2310 = vpop.f32.mrf.mxu0
    %v2311 = vadd.f32 %v2291, %v2310
    %2312 = vdwg.mxu0
    %v2313 = vmul.f32 %v2311, 0.03125
    %v2315 = vsel %vm1274, %v2313, 0
    %2317 = vmatpush.msra.mxu0 0.0
    %2318 = vmatpush.msra.mxu0 0.0
    %2319 = vmatpush.msra.mxu0 0.0
    %2320 = vmatpush.msra.mxu0 0.0
    %2321 = vmatpush.msra.mxu0 0.0
    %2322 = vmatpush.msra.mxu0 0.0
    %2323 = vmatpush.msra.mxu0 0.0
    %2324 = vmatpush.msra.mxu0 0.0
    %2325 = vmatpush.msra.mxu0 %v217
    %2326 = vmatpush.msra.mxu0 %v209
    %2327 = vmatpush.msra.mxu0 %v201
    %2328 = vmatpush.msra.mxu0 %v193
    %2329 = vmatpush.msra.mxu0 %v185
    %2330 = vmatpush.msra.mxu0 %v177
    %2331 = vmatpush.msra.mxu0 %v169
    %2332 = vmatpush.msra.mxu0 %v161
    %2333 = vmatmul.f32.gmra.mxu0 %v2315
    %v2334 = vpop.f32.mrf.mxu0
    %v2335 = vadd.f32 0.0, %v2334
    %2336 = vdwg.mxu0
    %2337 = vmatpush.msra.mxu0 0.0
    %2338 = vmatpush.msra.mxu0 0.0
    %2339 = vmatpush.msra.mxu0 0.0
    %2340 = vmatpush.msra.mxu0 0.0
    %2341 = vmatpush.msra.mxu0 0.0
    %2342 = vmatpush.msra.mxu0 0.0
    %2343 = vmatpush.msra.mxu0 0.0
    %2344 = vmatpush.msra.mxu0 0.0
    %2345 = vmatpush.msra.mxu0 %v218
    %2346 = vmatpush.msra.mxu0 %v210
    %2347 = vmatpush.msra.mxu0 %v202
    %2348 = vmatpush.msra.mxu0 %v194
    %2349 = vmatpush.msra.mxu0 %v186
    %2350 = vmatpush.msra.mxu0 %v178
    %2351 = vmatpush.msra.mxu0 %v170
    %2352 = vmatpush.msra.mxu0 %v162
    %2353 = vmatmul.f32.gmra.mxu0 %v2315
    %v2354 = vpop.f32.mrf.mxu0
    %v2355 = vadd.f32 0.0, %v2354
    %2356 = vdwg.mxu0
    %2357 = vmatpush.msra.mxu0 0.0
    %2358 = vmatpush.msra.mxu0 0.0
    %2359 = vmatpush.msra.mxu0 0.0
    %2360 = vmatpush.msra.mxu0 0.0
    %2361 = vmatpush.msra.mxu0 0.0
    %2362 = vmatpush.msra.mxu0 0.0
    %2363 = vmatpush.msra.mxu0 0.0
    %2364 = vmatpush.msra.mxu0 0.0
    %2365 = vmatpush.msra.mxu0 %v219
    %2366 = vmatpush.msra.mxu0 %v211
    %2367 = vmatpush.msra.mxu0 %v203
    %2368 = vmatpush.msra.mxu0 %v195
    %2369 = vmatpush.msra.mxu0 %v187
    %2370 = vmatpush.msra.mxu0 %v179
    %2371 = vmatpush.msra.mxu0 %v171
    %2372 = vmatpush.msra.mxu0 %v163
    %2373 = vmatmul.f32.gmra.mxu0 %v2315
    %v2374 = vpop.f32.mrf.mxu0
    %v2375 = vadd.f32 0.0, %v2374
    %2376 = vdwg.mxu0
    %2377 = vmatpush.msra.mxu0 0.0
    %2378 = vmatpush.msra.mxu0 0.0
    %2379 = vmatpush.msra.mxu0 0.0
    %2380 = vmatpush.msra.mxu0 0.0
    %2381 = vmatpush.msra.mxu0 0.0
    %2382 = vmatpush.msra.mxu0 0.0
    %2383 = vmatpush.msra.mxu0 0.0
    %2384 = vmatpush.msra.mxu0 0.0
    %2385 = vmatpush.msra.mxu0 %v220
    %2386 = vmatpush.msra.mxu0 %v212
    %2387 = vmatpush.msra.mxu0 %v204
    %2388 = vmatpush.msra.mxu0 %v196
    %2389 = vmatpush.msra.mxu0 %v188
    %2390 = vmatpush.msra.mxu0 %v180
    %2391 = vmatpush.msra.mxu0 %v172
    %2392 = vmatpush.msra.mxu0 %v164
    %2393 = vmatmul.f32.gmra.mxu0 %v2315
    %v2394 = vpop.f32.mrf.mxu0
    %v2395 = vadd.f32 0.0, %v2394
    %2396 = vdwg.mxu0
    %2397 = vmatpush.msra.mxu0 0.0
    %2398 = vmatpush.msra.mxu0 0.0
    %2399 = vmatpush.msra.mxu0 0.0
    %2400 = vmatpush.msra.mxu0 0.0
    %2401 = vmatpush.msra.mxu0 0.0
    %2402 = vmatpush.msra.mxu0 0.0
    %2403 = vmatpush.msra.mxu0 0.0
    %2404 = vmatpush.msra.mxu0 0.0
    %2405 = vmatpush.msra.mxu0 %v221
    %2406 = vmatpush.msra.mxu0 %v213
    %2407 = vmatpush.msra.mxu0 %v205
    %2408 = vmatpush.msra.mxu0 %v197
    %2409 = vmatpush.msra.mxu0 %v189
    %2410 = vmatpush.msra.mxu0 %v181
    %2411 = vmatpush.msra.mxu0 %v173
    %2412 = vmatpush.msra.mxu0 %v165
    %2413 = vmatmul.f32.gmra.mxu0 %v2315
    %v2414 = vpop.f32.mrf.mxu0
    %v2415 = vadd.f32 0.0, %v2414
    %2416 = vdwg.mxu0
    %2417 = vmatpush.msra.mxu0 0.0
    %2418 = vmatpush.msra.mxu0 0.0
    %2419 = vmatpush.msra.mxu0 0.0
    %2420 = vmatpush.msra.mxu0 0.0
    %2421 = vmatpush.msra.mxu0 0.0
    %2422 = vmatpush.msra.mxu0 0.0
    %2423 = vmatpush.msra.mxu0 0.0
    %2424 = vmatpush.msra.mxu0 0.0
    %2425 = vmatpush.msra.mxu0 %v222
    %2426 = vmatpush.msra.mxu0 %v214
    %2427 = vmatpush.msra.mxu0 %v206
    %2428 = vmatpush.msra.mxu0 %v198
    %2429 = vmatpush.msra.mxu0 %v190
    %2430 = vmatpush.msra.mxu0 %v182
    %2431 = vmatpush.msra.mxu0 %v174
    %2432 = vmatpush.msra.mxu0 %v166
    %2433 = vmatmul.f32.gmra.mxu0 %v2315
    %v2434 = vpop.f32.mrf.mxu0
    %v2435 = vadd.f32 0.0, %v2434
    %2436 = vdwg.mxu0
    %2437 = vmatpush.msra.mxu0 0.0
    %2438 = vmatpush.msra.mxu0 0.0
    %2439 = vmatpush.msra.mxu0 0.0
    %2440 = vmatpush.msra.mxu0 0.0
    %2441 = vmatpush.msra.mxu0 0.0
    %2442 = vmatpush.msra.mxu0 0.0
    %2443 = vmatpush.msra.mxu0 0.0
    %2444 = vmatpush.msra.mxu0 0.0
    %2445 = vmatpush.msra.mxu0 %v223
    %2446 = vmatpush.msra.mxu0 %v215
    %2447 = vmatpush.msra.mxu0 %v207
    %2448 = vmatpush.msra.mxu0 %v199
    %2449 = vmatpush.msra.mxu0 %v191
    %2450 = vmatpush.msra.mxu0 %v183
    %2451 = vmatpush.msra.mxu0 %v175
    %2452 = vmatpush.msra.mxu0 %v167
    %2453 = vmatmul.f32.gmra.mxu0 %v2315
    %v2454 = vpop.f32.mrf.mxu0
    %v2455 = vadd.f32 0.0, %v2454
    %2456 = vdwg.mxu0
    %2457 = vmatpush.msra.mxu0 0.0
    %2458 = vmatpush.msra.mxu0 0.0
    %2459 = vmatpush.msra.mxu0 0.0
    %2460 = vmatpush.msra.mxu0 0.0
    %2461 = vmatpush.msra.mxu0 0.0
    %2462 = vmatpush.msra.mxu0 0.0
    %2463 = vmatpush.msra.mxu0 0.0
    %2464 = vmatpush.msra.mxu0 0.0
    %2465 = vmatpush.msra.mxu0 %v224
    %2466 = vmatpush.msra.mxu0 %v216
    %2467 = vmatpush.msra.mxu0 %v208
    %2468 = vmatpush.msra.mxu0 %v200
    %2469 = vmatpush.msra.mxu0 %v192
    %2470 = vmatpush.msra.mxu0 %v184
    %2471 = vmatpush.msra.mxu0 %v176
    %2472 = vmatpush.msra.mxu0 %v168
    %2473 = vmatmul.f32.gmra.mxu0 %v2315
    %v2474 = vpop.f32.mrf.mxu0
    %v2475 = vadd.f32 0.0, %v2474
    %2476 = vdwg.mxu0
    %v2477 = vperm.slane %v2335, 0
    %v2478 = vperm.slane %v2355, 0
    %v2479 = vperm.slane %v2375, 0
    %v2480 = vperm.slane %v2395, 0
    %v2481 = vperm.slane %v2415, 0
    %v2482 = vperm.slane %v2435, 0
    %v2483 = vperm.slane %v2455, 0
    %v2484 = vperm.slane %v2475, 0
    %v2485 = vsub.f32 %v624, %v2477
    %v2486 = vsub.f32 %v644, %v2478
    %v2487 = vsub.f32 %v664, %v2479
    %v2488 = vsub.f32 %v684, %v2480
    %v2489 = vsub.f32 %v704, %v2481
    %v2490 = vsub.f32 %v724, %v2482
    %v2491 = vsub.f32 %v993, %v2483
    %v2492 = vsub.f32 %v1013, %v2484
    %v2493 = vmul.f32 %v2485, %v2485
    %v2494 = vmul.f32 %v2486, %v2486
    %v2495 = vmul.f32 %v2487, %v2487
    %v2496 = vmul.f32 %v2488, %v2488
    %v2497 = vmul.f32 %v2489, %v2489
    %v2498 = vmul.f32 %v2490, %v2490
    %v2499 = vmul.f32 %v2491, %v2491
    %v2500 = vmul.f32 %v2492, %v2492
    %v2501 = vsel %vm1056, %v2493, 0.0
    %v2502 = vrot.slane %v2501, 4
    %v2503 = vadd.f32 %v2501, %v2502
    %v2504 = vrot.slane %v2503, 2
    %v2505 = vadd.f32 %v2503, %v2504
    %v2506 = vrot.slane %v2505, 1
    %v2507 = vadd.f32 %v2505, %v2506
    %v2508 = vsel %vm1056, %v2494, 0.0
    %v2509 = vrot.slane %v2508, 4
    %v2510 = vadd.f32 %v2508, %v2509
    %v2511 = vrot.slane %v2510, 2
    %v2512 = vadd.f32 %v2510, %v2511
    %v2513 = vrot.slane %v2512, 1
    %v2514 = vadd.f32 %v2512, %v2513
    %v2515 = vsel %vm1056, %v2495, 0.0
    %v2516 = vrot.slane %v2515, 4
    %v2517 = vadd.f32 %v2515, %v2516
    %v2518 = vrot.slane %v2517, 2
    %v2519 = vadd.f32 %v2517, %v2518
    %v2520 = vrot.slane %v2519, 1
    %v2521 = vadd.f32 %v2519, %v2520
    %v2522 = vsel %vm1056, %v2496, 0.0
    %v2523 = vrot.slane %v2522, 4
    %v2524 = vadd.f32 %v2522, %v2523
    %v2525 = vrot.slane %v2524, 2
    %v2526 = vadd.f32 %v2524, %v2525
    %v2527 = vrot.slane %v2526, 1
    %v2528 = vadd.f32 %v2526, %v2527
    %v2529 = vsel %vm1056, %v2497, 0.0
    %v2530 = vrot.slane %v2529, 4
    %v2531 = vadd.f32 %v2529, %v2530
    %v2532 = vrot.slane %v2531, 2
    %v2533 = vadd.f32 %v2531, %v2532
    %v2534 = vrot.slane %v2533, 1
    %v2535 = vadd.f32 %v2533, %v2534
    %v2536 = vsel %vm1056, %v2498, 0.0
    %v2537 = vrot.slane %v2536, 4
    %v2538 = vadd.f32 %v2536, %v2537
    %v2539 = vrot.slane %v2538, 2
    %v2540 = vadd.f32 %v2538, %v2539
    %v2541 = vrot.slane %v2540, 1
    %v2542 = vadd.f32 %v2540, %v2541
    %v2543 = vsel %vm1056, %v2499, 0.0
    %v2544 = vrot.slane %v2543, 4
    %v2545 = vadd.f32 %v2543, %v2544
    %v2546 = vrot.slane %v2545, 2
    %v2547 = vadd.f32 %v2545, %v2546
    %v2548 = vrot.slane %v2547, 1
    %v2549 = vadd.f32 %v2547, %v2548
    %v2550 = vsel %vm1056, %v2500, 0.0
    %v2551 = vrot.slane %v2550, 4
    %v2552 = vadd.f32 %v2550, %v2551
    %v2553 = vrot.slane %v2552, 2
    %v2554 = vadd.f32 %v2552, %v2553
    %v2555 = vrot.slane %v2554, 1
    %v2556 = vadd.f32 %v2554, %v2555
    %2557 = vmatpush.msra.mxu0 %v48
    %2558 = vmatpush.msra.mxu0 %v47
    %2559 = vmatpush.msra.mxu0 %v46
    %2560 = vmatpush.msra.mxu0 %v45
    %2561 = vmatpush.msra.mxu0 %v44
    %2562 = vmatpush.msra.mxu0 %v43
    %2563 = vmatpush.msra.mxu0 %v42
    %2564 = vmatpush.msra.mxu0 %v41
    %2565 = vmatpush.msra.mxu0 %v40
    %2566 = vmatpush.msra.mxu0 %v39
    %2567 = vmatpush.msra.mxu0 %v38
    %2568 = vmatpush.msra.mxu0 %v37
    %2569 = vmatpush.msra.mxu0 %v36
    %2570 = vmatpush.msra.mxu0 %v35
    %2571 = vmatpush.msra.mxu0 %v34
    %2572 = vmatpush.msra.mxu0 %v33
    %2573 = vmatmul.f32.gmra.mxu0 %v2507
    %v2574 = vpop.f32.mrf.mxu0
    %v2575 = vadd.f32 0.0, %v2574
    %2576 = vdwg.mxu0
    %2577 = vmatpush.msra.mxu0 %v64
    %2578 = vmatpush.msra.mxu0 %v63
    %2579 = vmatpush.msra.mxu0 %v62
    %2580 = vmatpush.msra.mxu0 %v61
    %2581 = vmatpush.msra.mxu0 %v60
    %2582 = vmatpush.msra.mxu0 %v59
    %2583 = vmatpush.msra.mxu0 %v58
    %2584 = vmatpush.msra.mxu0 %v57
    %2585 = vmatpush.msra.mxu0 %v56
    %2586 = vmatpush.msra.mxu0 %v55
    %2587 = vmatpush.msra.mxu0 %v54
    %2588 = vmatpush.msra.mxu0 %v53
    %2589 = vmatpush.msra.mxu0 %v52
    %2590 = vmatpush.msra.mxu0 %v51
    %2591 = vmatpush.msra.mxu0 %v50
    %2592 = vmatpush.msra.mxu0 %v49
    %2593 = vmatmul.f32.gmra.mxu0 %v2514
    %v2594 = vpop.f32.mrf.mxu0
    %v2595 = vadd.f32 %v2575, %v2594
    %2596 = vdwg.mxu0
    %2597 = vmatpush.msra.mxu0 %v80
    %2598 = vmatpush.msra.mxu0 %v79
    %2599 = vmatpush.msra.mxu0 %v78
    %2600 = vmatpush.msra.mxu0 %v77
    %2601 = vmatpush.msra.mxu0 %v76
    %2602 = vmatpush.msra.mxu0 %v75
    %2603 = vmatpush.msra.mxu0 %v74
    %2604 = vmatpush.msra.mxu0 %v73
    %2605 = vmatpush.msra.mxu0 %v72
    %2606 = vmatpush.msra.mxu0 %v71
    %2607 = vmatpush.msra.mxu0 %v70
    %2608 = vmatpush.msra.mxu0 %v69
    %2609 = vmatpush.msra.mxu0 %v68
    %2610 = vmatpush.msra.mxu0 %v67
    %2611 = vmatpush.msra.mxu0 %v66
    %2612 = vmatpush.msra.mxu0 %v65
    %2613 = vmatmul.f32.gmra.mxu0 %v2521
    %v2614 = vpop.f32.mrf.mxu0
    %v2615 = vadd.f32 %v2595, %v2614
    %2616 = vdwg.mxu0
    %2617 = vmatpush.msra.mxu0 %v96
    %2618 = vmatpush.msra.mxu0 %v95
    %2619 = vmatpush.msra.mxu0 %v94
    %2620 = vmatpush.msra.mxu0 %v93
    %2621 = vmatpush.msra.mxu0 %v92
    %2622 = vmatpush.msra.mxu0 %v91
    %2623 = vmatpush.msra.mxu0 %v90
    %2624 = vmatpush.msra.mxu0 %v89
    %2625 = vmatpush.msra.mxu0 %v88
    %2626 = vmatpush.msra.mxu0 %v87
    %2627 = vmatpush.msra.mxu0 %v86
    %2628 = vmatpush.msra.mxu0 %v85
    %2629 = vmatpush.msra.mxu0 %v84
    %2630 = vmatpush.msra.mxu0 %v83
    %2631 = vmatpush.msra.mxu0 %v82
    %2632 = vmatpush.msra.mxu0 %v81
    %2633 = vmatmul.f32.gmra.mxu0 %v2528
    %v2634 = vpop.f32.mrf.mxu0
    %v2635 = vadd.f32 %v2615, %v2634
    %2636 = vdwg.mxu0
    %2637 = vmatpush.msra.mxu0 %v112
    %2638 = vmatpush.msra.mxu0 %v111
    %2639 = vmatpush.msra.mxu0 %v110
    %2640 = vmatpush.msra.mxu0 %v109
    %2641 = vmatpush.msra.mxu0 %v108
    %2642 = vmatpush.msra.mxu0 %v107
    %2643 = vmatpush.msra.mxu0 %v106
    %2644 = vmatpush.msra.mxu0 %v105
    %2645 = vmatpush.msra.mxu0 %v104
    %2646 = vmatpush.msra.mxu0 %v103
    %2647 = vmatpush.msra.mxu0 %v102
    %2648 = vmatpush.msra.mxu0 %v101
    %2649 = vmatpush.msra.mxu0 %v100
    %2650 = vmatpush.msra.mxu0 %v99
    %2651 = vmatpush.msra.mxu0 %v98
    %2652 = vmatpush.msra.mxu0 %v97
    %2653 = vmatmul.f32.gmra.mxu0 %v2535
    %v2654 = vpop.f32.mrf.mxu0
    %v2655 = vadd.f32 %v2635, %v2654
    %2656 = vdwg.mxu0
    %2657 = vmatpush.msra.mxu0 %v128
    %2658 = vmatpush.msra.mxu0 %v127
    %2659 = vmatpush.msra.mxu0 %v126
    %2660 = vmatpush.msra.mxu0 %v125
    %2661 = vmatpush.msra.mxu0 %v124
    %2662 = vmatpush.msra.mxu0 %v123
    %2663 = vmatpush.msra.mxu0 %v122
    %2664 = vmatpush.msra.mxu0 %v121
    %2665 = vmatpush.msra.mxu0 %v120
    %2666 = vmatpush.msra.mxu0 %v119
    %2667 = vmatpush.msra.mxu0 %v118
    %2668 = vmatpush.msra.mxu0 %v117
    %2669 = vmatpush.msra.mxu0 %v116
    %2670 = vmatpush.msra.mxu0 %v115
    %2671 = vmatpush.msra.mxu0 %v114
    %2672 = vmatpush.msra.mxu0 %v113
    %2673 = vmatmul.f32.gmra.mxu0 %v2542
    %v2674 = vpop.f32.mrf.mxu0
    %v2675 = vadd.f32 %v2655, %v2674
    %2676 = vdwg.mxu0
    %2677 = vmatpush.msra.mxu0 %v144
    %2678 = vmatpush.msra.mxu0 %v143
    %2679 = vmatpush.msra.mxu0 %v142
    %2680 = vmatpush.msra.mxu0 %v141
    %2681 = vmatpush.msra.mxu0 %v140
    %2682 = vmatpush.msra.mxu0 %v139
    %2683 = vmatpush.msra.mxu0 %v138
    %2684 = vmatpush.msra.mxu0 %v137
    %2685 = vmatpush.msra.mxu0 %v136
    %2686 = vmatpush.msra.mxu0 %v135
    %2687 = vmatpush.msra.mxu0 %v134
    %2688 = vmatpush.msra.mxu0 %v133
    %2689 = vmatpush.msra.mxu0 %v132
    %2690 = vmatpush.msra.mxu0 %v131
    %2691 = vmatpush.msra.mxu0 %v130
    %2692 = vmatpush.msra.mxu0 %v129
    %2693 = vmatmul.f32.gmra.mxu0 %v2549
    %v2694 = vpop.f32.mrf.mxu0
    %v2695 = vadd.f32 %v2675, %v2694
    %2696 = vdwg.mxu0
    %2697 = vmatpush.msra.mxu0 %v160
    %2698 = vmatpush.msra.mxu0 %v159
    %2699 = vmatpush.msra.mxu0 %v158
    %2700 = vmatpush.msra.mxu0 %v157
    %2701 = vmatpush.msra.mxu0 %v156
    %2702 = vmatpush.msra.mxu0 %v155
    %2703 = vmatpush.msra.mxu0 %v154
    %2704 = vmatpush.msra.mxu0 %v153
    %2705 = vmatpush.msra.mxu0 %v152
    %2706 = vmatpush.msra.mxu0 %v151
    %2707 = vmatpush.msra.mxu0 %v150
    %2708 = vmatpush.msra.mxu0 %v149
    %2709 = vmatpush.msra.mxu0 %v148
    %2710 = vmatpush.msra.mxu0 %v147
    %2711 = vmatpush.msra.mxu0 %v146
    %2712 = vmatpush.msra.mxu0 %v145
    %2713 = vmatmul.f32.gmra.mxu0 %v2556
    %v2714 = vpop.f32.mrf.mxu0
    %v2715 = vadd.f32 %v2695, %v2714
    %2716 = vdwg.mxu0
    %v2717 = vmul.f32 %v2715, 0.03125
    %v2718 = vld [vmem:[%s5 + $0x1] sm:$0x1]
    %v2719 = vadd.f32 %v2717, 1e-05
    %v2720 = vrsqrt.pop %v2719
    %v2721 = vmul.f32 %v2720, %v2719
    %v2722 = vmul.f32 %v2721, %v2720
    %v2723 = vmul.f32 0.5, %v2722
    %v2724 = vsub.f32 1.5, %v2723
    %v2725 = vmul.f32 %v2720, %v2724
    %vm2726 = vweird.f32 %v2719
    %vm2727 = vweird.f32 %v2720
    %vm2728 = vmor %vm2726, %vm2727
    %v2729 = vsel %vm2728, %v2720, %v2725
    %v2730 = vmul.f32 %v2718, %v2729
    %v2731 = vld [vmem:[%s6 + $0x1] sm:$0x1]
    %v2733 = vrot.slane %v2731, 7
    %v2735 = vsel %vm1696, %v2730, %v2733
    %v2737 = vsel %vm1274, %v2735, 0
    %2739 = vmatpush.msra.mxu0 0.0
    %2740 = vmatpush.msra.mxu0 0.0
    %2741 = vmatpush.msra.mxu0 0.0
    %2742 = vmatpush.msra.mxu0 0.0
    %2743 = vmatpush.msra.mxu0 0.0
    %2744 = vmatpush.msra.mxu0 0.0
    %2745 = vmatpush.msra.mxu0 0.0
    %2746 = vmatpush.msra.mxu0 0.0
    %2747 = vmatpush.msra.mxu0 %v217
    %2748 = vmatpush.msra.mxu0 %v209
    %2749 = vmatpush.msra.mxu0 %v201
    %2750 = vmatpush.msra.mxu0 %v193
    %2751 = vmatpush.msra.mxu0 %v185
    %2752 = vmatpush.msra.mxu0 %v177
    %2753 = vmatpush.msra.mxu0 %v169
    %2754 = vmatpush.msra.mxu0 %v161
    %2755 = vmatmul.f32.gmra.mxu0 %v2737
    %v2756 = vpop.f32.mrf.mxu0
    %v2757 = vadd.f32 0.0, %v2756
    %2758 = vdwg.mxu0
    %2759 = vmatpush.msra.mxu0 0.0
    %2760 = vmatpush.msra.mxu0 0.0
    %2761 = vmatpush.msra.mxu0 0.0
    %2762 = vmatpush.msra.mxu0 0.0
    %2763 = vmatpush.msra.mxu0 0.0
    %2764 = vmatpush.msra.mxu0 0.0
    %2765 = vmatpush.msra.mxu0 0.0
    %2766 = vmatpush.msra.mxu0 0.0
    %2767 = vmatpush.msra.mxu0 %v218
    %2768 = vmatpush.msra.mxu0 %v210
    %2769 = vmatpush.msra.mxu0 %v202
    %2770 = vmatpush.msra.mxu0 %v194
    %2771 = vmatpush.msra.mxu0 %v186
    %2772 = vmatpush.msra.mxu0 %v178
    %2773 = vmatpush.msra.mxu0 %v170
    %2774 = vmatpush.msra.mxu0 %v162
    %2775 = vmatmul.f32.gmra.mxu0 %v2737
    %v2776 = vpop.f32.mrf.mxu0
    %v2777 = vadd.f32 0.0, %v2776
    %2778 = vdwg.mxu0
    %2779 = vmatpush.msra.mxu0 0.0
    %2780 = vmatpush.msra.mxu0 0.0
    %2781 = vmatpush.msra.mxu0 0.0
    %2782 = vmatpush.msra.mxu0 0.0
    %2783 = vmatpush.msra.mxu0 0.0
    %2784 = vmatpush.msra.mxu0 0.0
    %2785 = vmatpush.msra.mxu0 0.0
    %2786 = vmatpush.msra.mxu0 0.0
    %2787 = vmatpush.msra.mxu0 %v219
    %2788 = vmatpush.msra.mxu0 %v211
    %2789 = vmatpush.msra.mxu0 %v203
    %2790 = vmatpush.msra.mxu0 %v195
    %2791 = vmatpush.msra.mxu0 %v187
    %2792 = vmatpush.msra.mxu0 %v179
    %2793 = vmatpush.msra.mxu0 %v171
    %2794 = vmatpush.msra.mxu0 %v163
    %2795 = vmatmul.f32.gmra.mxu0 %v2737
    %v2796 = vpop.f32.mrf.mxu0
    %v2797 = vadd.f32 0.0, %v2796
    %2798 = vdwg.mxu0
    %2799 = vmatpush.msra.mxu0 0.0
    %2800 = vmatpush.msra.mxu0 0.0
    %2801 = vmatpush.msra.mxu0 0.0
    %2802 = vmatpush.msra.mxu0 0.0
    %2803 = vmatpush.msra.mxu0 0.0
    %2804 = vmatpush.msra.mxu0 0.0
    %2805 = vmatpush.msra.mxu0 0.0
    %2806 = vmatpush.msra.mxu0 0.0
    %2807 = vmatpush.msra.mxu0 %v220
    %2808 = vmatpush.msra.mxu0 %v212
    %2809 = vmatpush.msra.mxu0 %v204
    %2810 = vmatpush.msra.mxu0 %v196
    %2811 = vmatpush.msra.mxu0 %v188
    %2812 = vmatpush.msra.mxu0 %v180
    %2813 = vmatpush.msra.mxu0 %v172
    %2814 = vmatpush.msra.mxu0 %v164
    %2815 = vmatmul.f32.gmra.mxu0 %v2737
    %v2816 = vpop.f32.mrf.mxu0
    %v2817 = vadd.f32 0.0, %v2816
    %2818 = vdwg.mxu0
    %2819 = vmatpush.msra.mxu0 0.0
    %2820 = vmatpush.msra.mxu0 0.0
    %2821 = vmatpush.msra.mxu0 0.0
    %2822 = vmatpush.msra.mxu0 0.0
    %2823 = vmatpush.msra.mxu0 0.0
    %2824 = vmatpush.msra.mxu0 0.0
    %2825 = vmatpush.msra.mxu0 0.0
    %2826 = vmatpush.msra.mxu0 0.0
    %2827 = vmatpush.msra.mxu0 %v221
    %2828 = vmatpush.msra.mxu0 %v213
    %2829 = vmatpush.msra.mxu0 %v205
    %2830 = vmatpush.msra.mxu0 %v197
    %2831 = vmatpush.msra.mxu0 %v189
    %2832 = vmatpush.msra.mxu0 %v181
    %2833 = vmatpush.msra.mxu0 %v173
    %2834 = vmatpush.msra.mxu0 %v165
    %2835 = vmatmul.f32.gmra.mxu0 %v2737
    %v2836 = vpop.f32.mrf.mxu0
    %v2837 = vadd.f32 0.0, %v2836
    %2838 = vdwg.mxu0
    %2839 = vmatpush.msra.mxu0 0.0
    %2840 = vmatpush.msra.mxu0 0.0
    %2841 = vmatpush.msra.mxu0 0.0
    %2842 = vmatpush.msra.mxu0 0.0
    %2843 = vmatpush.msra.mxu0 0.0
    %2844 = vmatpush.msra.mxu0 0.0
    %2845 = vmatpush.msra.mxu0 0.0
    %2846 = vmatpush.msra.mxu0 0.0
    %2847 = vmatpush.msra.mxu0 %v222
    %2848 = vmatpush.msra.mxu0 %v214
    %2849 = vmatpush.msra.mxu0 %v206
    %2850 = vmatpush.msra.mxu0 %v198
    %2851 = vmatpush.msra.mxu0 %v190
    %2852 = vmatpush.msra.mxu0 %v182
    %2853 = vmatpush.msra.mxu0 %v174
    %2854 = vmatpush.msra.mxu0 %v166
    %2855 = vmatmul.f32.gmra.mxu0 %v2737
    %v2856 = vpop.f32.mrf.mxu0
    %v2857 = vadd.f32 0.0, %v2856
    %2858 = vdwg.mxu0
    %2859 = vmatpush.msra.mxu0 0.0
    %2860 = vmatpush.msra.mxu0 0.0
    %2861 = vmatpush.msra.mxu0 0.0
    %2862 = vmatpush.msra.mxu0 0.0
    %2863 = vmatpush.msra.mxu0 0.0
    %2864 = vmatpush.msra.mxu0 0.0
    %2865 = vmatpush.msra.mxu0 0.0
    %2866 = vmatpush.msra.mxu0 0.0
    %2867 = vmatpush.msra.mxu0 %v223
    %2868 = vmatpush.msra.mxu0 %v215
    %2869 = vmatpush.msra.mxu0 %v207
    %2870 = vmatpush.msra.mxu0 %v199
    %2871 = vmatpush.msra.mxu0 %v191
    %2872 = vmatpush.msra.mxu0 %v183
    %2873 = vmatpush.msra.mxu0 %v175
    %2874 = vmatpush.msra.mxu0 %v167
    %2875 = vmatmul.f32.gmra.mxu0 %v2737
    %v2876 = vpop.f32.mrf.mxu0
    %v2877 = vadd.f32 0.0, %v2876
    %2878 = vdwg.mxu0
    %2879 = vmatpush.msra.mxu0 0.0
    %2880 = vmatpush.msra.mxu0 0.0
    %2881 = vmatpush.msra.mxu0 0.0
    %2882 = vmatpush.msra.mxu0 0.0
    %2883 = vmatpush.msra.mxu0 0.0
    %2884 = vmatpush.msra.mxu0 0.0
    %2885 = vmatpush.msra.mxu0 0.0
    %2886 = vmatpush.msra.mxu0 0.0
    %2887 = vmatpush.msra.mxu0 %v224
    %2888 = vmatpush.msra.mxu0 %v216
    %2889 = vmatpush.msra.mxu0 %v208
    %2890 = vmatpush.msra.mxu0 %v200
    %2891 = vmatpush.msra.mxu0 %v192
    %2892 = vmatpush.msra.mxu0 %v184
    %2893 = vmatpush.msra.mxu0 %v176
    %2894 = vmatpush.msra.mxu0 %v168
    %2895 = vmatmul.f32.gmra.mxu0 %v2737
    %v2896 = vpop.f32.mrf.mxu0
    %v2897 = vadd.f32 0.0, %v2896
    %2898 = vdwg.mxu0
    %v2899 = vperm.slane %v2757, 0
    %v2900 = vperm.slane %v2777, 0
    %v2901 = vperm.slane %v2797, 0
    %v2902 = vperm.slane %v2817, 0
    %v2903 = vperm.slane %v2837, 0
    %v2904 = vperm.slane %v2857, 0
    %v2905 = vperm.slane %v2877, 0
    %v2906 = vperm.slane %v2897, 0
    %v2907 = vmul.f32 %v2485, %v2899
    %v2908 = vmul.f32 %v2486, %v2900
    %v2909 = vmul.f32 %v2487, %v2901
    %v2910 = vmul.f32 %v2488, %v2902
    %v2911 = vmul.f32 %v2489, %v2903
    %v2912 = vmul.f32 %v2490, %v2904
    %v2913 = vmul.f32 %v2491, %v2905
    %v2914 = vmul.f32 %v2492, %v2906
    %v2915 = vperm.slane %v2757, 1
    %v2916 = vperm.slane %v2777, 1
    %v2917 = vperm.slane %v2797, 1
    %v2918 = vperm.slane %v2817, 1
    %v2919 = vperm.slane %v2837, 1
    %v2920 = vperm.slane %v2857, 1
    %v2921 = vperm.slane %v2877, 1
    %v2922 = vperm.slane %v2897, 1
    %v2923 = vadd.f32 %v2907, %v2915
    %v2924 = vadd.f32 %v2908, %v2916
    %v2925 = vadd.f32 %v2909, %v2917
    %v2926 = vadd.f32 %v2910, %v2918
    %v2927 = vadd.f32 %v2911, %v2919
    %v2928 = vadd.f32 %v2912, %v2920
    %v2929 = vadd.f32 %v2913, %v2921
    %v2930 = vadd.f32 %v2914, %v2922
    %v2931 = vmax.f32 %v2923, 0.0
    %v2932 = vmax.f32 %v2924, 0.0
    %v2933 = vmax.f32 %v2925, 0.0
    %v2934 = vmax.f32 %v2926, 0.0
    %v2935 = vmax.f32 %v2927, 0.0
    %v2936 = vmax.f32 %v2928, 0.0
    %v2937 = vmax.f32 %v2929, 0.0
    %v2938 = vmax.f32 %v2930, 0.0
    %2939 = vmatpush.msra.mxu0 %v48
    %2940 = vmatpush.msra.mxu0 %v47
    %2941 = vmatpush.msra.mxu0 %v46
    %2942 = vmatpush.msra.mxu0 %v45
    %2943 = vmatpush.msra.mxu0 %v44
    %2944 = vmatpush.msra.mxu0 %v43
    %2945 = vmatpush.msra.mxu0 %v42
    %2946 = vmatpush.msra.mxu0 %v41
    %2947 = vmatpush.msra.mxu0 %v40
    %2948 = vmatpush.msra.mxu0 %v39
    %2949 = vmatpush.msra.mxu0 %v38
    %2950 = vmatpush.msra.mxu0 %v37
    %2951 = vmatpush.msra.mxu0 %v36
    %2952 = vmatpush.msra.mxu0 %v35
    %2953 = vmatpush.msra.mxu0 %v34
    %2954 = vmatpush.msra.mxu0 %v33
    %2955 = vmatmul.f32.gmra.mxu0 %v2931
    %v2956 = vpop.f32.mrf.mxu0
    %v2957 = vadd.f32 0.0, %v2956
    %2958 = vdwg.mxu0
    %2959 = vmatpush.msra.mxu0 %v64
    %2960 = vmatpush.msra.mxu0 %v63
    %2961 = vmatpush.msra.mxu0 %v62
    %2962 = vmatpush.msra.mxu0 %v61
    %2963 = vmatpush.msra.mxu0 %v60
    %2964 = vmatpush.msra.mxu0 %v59
    %2965 = vmatpush.msra.mxu0 %v58
    %2966 = vmatpush.msra.mxu0 %v57
    %2967 = vmatpush.msra.mxu0 %v56
    %2968 = vmatpush.msra.mxu0 %v55
    %2969 = vmatpush.msra.mxu0 %v54
    %2970 = vmatpush.msra.mxu0 %v53
    %2971 = vmatpush.msra.mxu0 %v52
    %2972 = vmatpush.msra.mxu0 %v51
    %2973 = vmatpush.msra.mxu0 %v50
    %2974 = vmatpush.msra.mxu0 %v49
    %2975 = vmatmul.f32.gmra.mxu0 %v2932
    %v2976 = vpop.f32.mrf.mxu0
    %v2977 = vadd.f32 %v2957, %v2976
    %2978 = vdwg.mxu0
    %2979 = vmatpush.msra.mxu0 %v80
    %2980 = vmatpush.msra.mxu0 %v79
    %2981 = vmatpush.msra.mxu0 %v78
    %2982 = vmatpush.msra.mxu0 %v77
    %2983 = vmatpush.msra.mxu0 %v76
    %2984 = vmatpush.msra.mxu0 %v75
    %2985 = vmatpush.msra.mxu0 %v74
    %2986 = vmatpush.msra.mxu0 %v73
    %2987 = vmatpush.msra.mxu0 %v72
    %2988 = vmatpush.msra.mxu0 %v71
    %2989 = vmatpush.msra.mxu0 %v70
    %2990 = vmatpush.msra.mxu0 %v69
    %2991 = vmatpush.msra.mxu0 %v68
    %2992 = vmatpush.msra.mxu0 %v67
    %2993 = vmatpush.msra.mxu0 %v66
    %2994 = vmatpush.msra.mxu0 %v65
    %2995 = vmatmul.f32.gmra.mxu0 %v2933
    %v2996 = vpop.f32.mrf.mxu0
    %v2997 = vadd.f32 %v2977, %v2996
    %2998 = vdwg.mxu0
    %2999 = vmatpush.msra.mxu0 %v96
    %3000 = vmatpush.msra.mxu0 %v95
    %3001 = vmatpush.msra.mxu0 %v94
    %3002 = vmatpush.msra.mxu0 %v93
    %3003 = vmatpush.msra.mxu0 %v92
    %3004 = vmatpush.msra.mxu0 %v91
    %3005 = vmatpush.msra.mxu0 %v90
    %3006 = vmatpush.msra.mxu0 %v89
    %3007 = vmatpush.msra.mxu0 %v88
    %3008 = vmatpush.msra.mxu0 %v87
    %3009 = vmatpush.msra.mxu0 %v86
    %3010 = vmatpush.msra.mxu0 %v85
    %3011 = vmatpush.msra.mxu0 %v84
    %3012 = vmatpush.msra.mxu0 %v83
    %3013 = vmatpush.msra.mxu0 %v82
    %3014 = vmatpush.msra.mxu0 %v81
    %3015 = vmatmul.f32.gmra.mxu0 %v2934
    %v3016 = vpop.f32.mrf.mxu0
    %v3017 = vadd.f32 %v2997, %v3016
    %3018 = vdwg.mxu0
    %3019 = vmatpush.msra.mxu0 %v112
    %3020 = vmatpush.msra.mxu0 %v111
    %3021 = vmatpush.msra.mxu0 %v110
    %3022 = vmatpush.msra.mxu0 %v109
    %3023 = vmatpush.msra.mxu0 %v108
    %3024 = vmatpush.msra.mxu0 %v107
    %3025 = vmatpush.msra.mxu0 %v106
    %3026 = vmatpush.msra.mxu0 %v105
    %3027 = vmatpush.msra.mxu0 %v104
    %3028 = vmatpush.msra.mxu0 %v103
    %3029 = vmatpush.msra.mxu0 %v102
    %3030 = vmatpush.msra.mxu0 %v101
    %3031 = vmatpush.msra.mxu0 %v100
    %3032 = vmatpush.msra.mxu0 %v99
    %3033 = vmatpush.msra.mxu0 %v98
    %3034 = vmatpush.msra.mxu0 %v97
    %3035 = vmatmul.f32.gmra.mxu0 %v2935
    %v3036 = vpop.f32.mrf.mxu0
    %v3037 = vadd.f32 %v3017, %v3036
    %3038 = vdwg.mxu0
    %3039 = vmatpush.msra.mxu0 %v128
    %3040 = vmatpush.msra.mxu0 %v127
    %3041 = vmatpush.msra.mxu0 %v126
    %3042 = vmatpush.msra.mxu0 %v125
    %3043 = vmatpush.msra.mxu0 %v124
    %3044 = vmatpush.msra.mxu0 %v123
    %3045 = vmatpush.msra.mxu0 %v122
    %3046 = vmatpush.msra.mxu0 %v121
    %3047 = vmatpush.msra.mxu0 %v120
    %3048 = vmatpush.msra.mxu0 %v119
    %3049 = vmatpush.msra.mxu0 %v118
    %3050 = vmatpush.msra.mxu0 %v117
    %3051 = vmatpush.msra.mxu0 %v116
    %3052 = vmatpush.msra.mxu0 %v115
    %3053 = vmatpush.msra.mxu0 %v114
    %3054 = vmatpush.msra.mxu0 %v113
    %3055 = vmatmul.f32.gmra.mxu0 %v2936
    %v3056 = vpop.f32.mrf.mxu0
    %v3057 = vadd.f32 %v3037, %v3056
    %3058 = vdwg.mxu0
    %3059 = vmatpush.msra.mxu0 %v144
    %3060 = vmatpush.msra.mxu0 %v143
    %3061 = vmatpush.msra.mxu0 %v142
    %3062 = vmatpush.msra.mxu0 %v141
    %3063 = vmatpush.msra.mxu0 %v140
    %3064 = vmatpush.msra.mxu0 %v139
    %3065 = vmatpush.msra.mxu0 %v138
    %3066 = vmatpush.msra.mxu0 %v137
    %3067 = vmatpush.msra.mxu0 %v136
    %3068 = vmatpush.msra.mxu0 %v135
    %3069 = vmatpush.msra.mxu0 %v134
    %3070 = vmatpush.msra.mxu0 %v133
    %3071 = vmatpush.msra.mxu0 %v132
    %3072 = vmatpush.msra.mxu0 %v131
    %3073 = vmatpush.msra.mxu0 %v130
    %3074 = vmatpush.msra.mxu0 %v129
    %3075 = vmatmul.f32.gmra.mxu0 %v2937
    %v3076 = vpop.f32.mrf.mxu0
    %v3077 = vadd.f32 %v3057, %v3076
    %3078 = vdwg.mxu0
    %3079 = vmatpush.msra.mxu0 %v160
    %3080 = vmatpush.msra.mxu0 %v159
    %3081 = vmatpush.msra.mxu0 %v158
    %3082 = vmatpush.msra.mxu0 %v157
    %3083 = vmatpush.msra.mxu0 %v156
    %3084 = vmatpush.msra.mxu0 %v155
    %3085 = vmatpush.msra.mxu0 %v154
    %3086 = vmatpush.msra.mxu0 %v153
    %3087 = vmatpush.msra.mxu0 %v152
    %3088 = vmatpush.msra.mxu0 %v151
    %3089 = vmatpush.msra.mxu0 %v150
    %3090 = vmatpush.msra.mxu0 %v149
    %3091 = vmatpush.msra.mxu0 %v148
    %3092 = vmatpush.msra.mxu0 %v147
    %3093 = vmatpush.msra.mxu0 %v146
    %3094 = vmatpush.msra.mxu0 %v145
    %3095 = vmatmul.f32.gmra.mxu0 %v2938
    %v3096 = vpop.f32.mrf.mxu0
    %v3097 = vadd.f32 %v3077, %v3096
    %3098 = vdwg.mxu0
    %v3099 = vmul.f32 %v3097, 0.0625
    %v3100 = vld [vmem:[%s7 + $0x40] sm:$0xff]
    %v3101 = vld [vmem:[%s7 + $0x48] sm:$0xff]
    %v3102 = vld [vmem:[%s7 + $0x50] sm:$0xff]
    %v3103 = vld [vmem:[%s7 + $0x58] sm:$0xff]
    %v3104 = vld [vmem:[%s7 + $0x60] sm:$0xff]
    %v3105 = vld [vmem:[%s7 + $0x68] sm:$0xff]
    %v3106 = vld [vmem:[%s7 + $0x70] sm:$0xff]
    %v3107 = vld [vmem:[%s7 + $0x78] sm:$0xff]
    %v3109 = vsel %vm1274, %v3099, 0
    %3111 = vmatpush.msra.mxu0 0.0
    %3112 = vmatpush.msra.mxu0 0.0
    %3113 = vmatpush.msra.mxu0 0.0
    %3114 = vmatpush.msra.mxu0 0.0
    %3115 = vmatpush.msra.mxu0 0.0
    %3116 = vmatpush.msra.mxu0 0.0
    %3117 = vmatpush.msra.mxu0 0.0
    %3118 = vmatpush.msra.mxu0 0.0
    %3119 = vmatpush.msra.mxu0 %v3107
    %3120 = vmatpush.msra.mxu0 %v3106
    %3121 = vmatpush.msra.mxu0 %v3105
    %3122 = vmatpush.msra.mxu0 %v3104
    %3123 = vmatpush.msra.mxu0 %v3103
    %3124 = vmatpush.msra.mxu0 %v3102
    %3125 = vmatpush.msra.mxu0 %v3101
    %3126 = vmatpush.msra.mxu0 %v3100
    %3127 = vmatmul.f32.gmra.mxu0 %v3109
    %v3128 = vpop.f32.mrf.mxu0
    %v3129 = vadd.f32 0.0, %v3128
    %3130 = vdwg.mxu0
    %v3131 = vadd.f32 %v2096, %v3129
    %v3132 = vsel %vm1056, %v744, 0.0
    %v3133 = vrot.slane %v3132, 4
    %v3134 = vadd.f32 %v3132, %v3133
    %v3135 = vrot.slane %v3134, 2
    %v3136 = vadd.f32 %v3134, %v3135
    %v3137 = vrot.slane %v3136, 1
    %v3138 = vadd.f32 %v3136, %v3137
    %v3139 = vsel %vm1056, %v764, 0.0
    %v3140 = vrot.slane %v3139, 4
    %v3141 = vadd.f32 %v3139, %v3140
    %v3142 = vrot.slane %v3141, 2
    %v3143 = vadd.f32 %v3141, %v3142
    %v3144 = vrot.slane %v3143, 1
    %v3145 = vadd.f32 %v3143, %v3144
    %v3146 = vsel %vm1056, %v784, 0.0
    %v3147 = vrot.slane %v3146, 4
    %v3148 = vadd.f32 %v3146, %v3147
    %v3149 = vrot.slane %v3148, 2
    %v3150 = vadd.f32 %v3148, %v3149
    %v3151 = vrot.slane %v3150, 1
    %v3152 = vadd.f32 %v3150, %v3151
    %v3153 = vsel %vm1056, %v804, 0.0
    %v3154 = vrot.slane %v3153, 4
    %v3155 = vadd.f32 %v3153, %v3154
    %v3156 = vrot.slane %v3155, 2
    %v3157 = vadd.f32 %v3155, %v3156
    %v3158 = vrot.slane %v3157, 1
    %v3159 = vadd.f32 %v3157, %v3158
    %v3160 = vsel %vm1056, %v824, 0.0
    %v3161 = vrot.slane %v3160, 4
    %v3162 = vadd.f32 %v3160, %v3161
    %v3163 = vrot.slane %v3162, 2
    %v3164 = vadd.f32 %v3162, %v3163
    %v3165 = vrot.slane %v3164, 1
    %v3166 = vadd.f32 %v3164, %v3165
    %v3167 = vsel %vm1056, %v844, 0.0
    %v3168 = vrot.slane %v3167, 4
    %v3169 = vadd.f32 %v3167, %v3168
    %v3170 = vrot.slane %v3169, 2
    %v3171 = vadd.f32 %v3169, %v3170
    %v3172 = vrot.slane %v3171, 1
    %v3173 = vadd.f32 %v3171, %v3172
    %v3174 = vsel %vm1056, %v1033, 0.0
    %v3175 = vrot.slane %v3174, 4
    %v3176 = vadd.f32 %v3174, %v3175
    %v3177 = vrot.slane %v3176, 2
    %v3178 = vadd.f32 %v3176, %v3177
    %v3179 = vrot.slane %v3178, 1
    %v3180 = vadd.f32 %v3178, %v3179
    %v3181 = vsel %vm1056, %v1053, 0.0
    %v3182 = vrot.slane %v3181, 4
    %v3183 = vadd.f32 %v3181, %v3182
    %v3184 = vrot.slane %v3183, 2
    %v3185 = vadd.f32 %v3183, %v3184
    %v3186 = vrot.slane %v3185, 1
    %v3187 = vadd.f32 %v3185, %v3186
    %3188 = vmatpush.msra.mxu0 %v48
    %3189 = vmatpush.msra.mxu0 %v47
    %3190 = vmatpush.msra.mxu0 %v46
    %3191 = vmatpush.msra.mxu0 %v45
    %3192 = vmatpush.msra.mxu0 %v44
    %3193 = vmatpush.msra.mxu0 %v43
    %3194 = vmatpush.msra.mxu0 %v42
    %3195 = vmatpush.msra.mxu0 %v41
    %3196 = vmatpush.msra.mxu0 %v40
    %3197 = vmatpush.msra.mxu0 %v39
    %3198 = vmatpush.msra.mxu0 %v38
    %3199 = vmatpush.msra.mxu0 %v37
    %3200 = vmatpush.msra.mxu0 %v36
    %3201 = vmatpush.msra.mxu0 %v35
    %3202 = vmatpush.msra.mxu0 %v34
    %3203 = vmatpush.msra.mxu0 %v33
    %3204 = vmatmul.f32.gmra.mxu0 %v3138
    %v3205 = vpop.f32.mrf.mxu0
    %v3206 = vadd.f32 0.0, %v3205
    %3207 = vdwg.mxu0
    %3208 = vmatpush.msra.mxu0 %v64
    %3209 = vmatpush.msra.mxu0 %v63
    %3210 = vmatpush.msra.mxu0 %v62
    %3211 = vmatpush.msra.mxu0 %v61
    %3212 = vmatpush.msra.mxu0 %v60
    %3213 = vmatpush.msra.mxu0 %v59
    %3214 = vmatpush.msra.mxu0 %v58
    %3215 = vmatpush.msra.mxu0 %v57
    %3216 = vmatpush.msra.mxu0 %v56
    %3217 = vmatpush.msra.mxu0 %v55
    %3218 = vmatpush.msra.mxu0 %v54
    %3219 = vmatpush.msra.mxu0 %v53
    %3220 = vmatpush.msra.mxu0 %v52
    %3221 = vmatpush.msra.mxu0 %v51
    %3222 = vmatpush.msra.mxu0 %v50
    %3223 = vmatpush.msra.mxu0 %v49
    %3224 = vmatmul.f32.gmra.mxu0 %v3145
    %v3225 = vpop.f32.mrf.mxu0
    %v3226 = vadd.f32 %v3206, %v3225
    %3227 = vdwg.mxu0
    %3228 = vmatpush.msra.mxu0 %v80
    %3229 = vmatpush.msra.mxu0 %v79
    %3230 = vmatpush.msra.mxu0 %v78
    %3231 = vmatpush.msra.mxu0 %v77
    %3232 = vmatpush.msra.mxu0 %v76
    %3233 = vmatpush.msra.mxu0 %v75
    %3234 = vmatpush.msra.mxu0 %v74
    %3235 = vmatpush.msra.mxu0 %v73
    %3236 = vmatpush.msra.mxu0 %v72
    %3237 = vmatpush.msra.mxu0 %v71
    %3238 = vmatpush.msra.mxu0 %v70
    %3239 = vmatpush.msra.mxu0 %v69
    %3240 = vmatpush.msra.mxu0 %v68
    %3241 = vmatpush.msra.mxu0 %v67
    %3242 = vmatpush.msra.mxu0 %v66
    %3243 = vmatpush.msra.mxu0 %v65
    %3244 = vmatmul.f32.gmra.mxu0 %v3152
    %v3245 = vpop.f32.mrf.mxu0
    %v3246 = vadd.f32 %v3226, %v3245
    %3247 = vdwg.mxu0
    %3248 = vmatpush.msra.mxu0 %v96
    %3249 = vmatpush.msra.mxu0 %v95
    %3250 = vmatpush.msra.mxu0 %v94
    %3251 = vmatpush.msra.mxu0 %v93
    %3252 = vmatpush.msra.mxu0 %v92
    %3253 = vmatpush.msra.mxu0 %v91
    %3254 = vmatpush.msra.mxu0 %v90
    %3255 = vmatpush.msra.mxu0 %v89
    %3256 = vmatpush.msra.mxu0 %v88
    %3257 = vmatpush.msra.mxu0 %v87
    %3258 = vmatpush.msra.mxu0 %v86
    %3259 = vmatpush.msra.mxu0 %v85
    %3260 = vmatpush.msra.mxu0 %v84
    %3261 = vmatpush.msra.mxu0 %v83
    %3262 = vmatpush.msra.mxu0 %v82
    %3263 = vmatpush.msra.mxu0 %v81
    %3264 = vmatmul.f32.gmra.mxu0 %v3159
    %v3265 = vpop.f32.mrf.mxu0
    %v3266 = vadd.f32 %v3246, %v3265
    %3267 = vdwg.mxu0
    %3268 = vmatpush.msra.mxu0 %v112
    %3269 = vmatpush.msra.mxu0 %v111
    %3270 = vmatpush.msra.mxu0 %v110
    %3271 = vmatpush.msra.mxu0 %v109
    %3272 = vmatpush.msra.mxu0 %v108
    %3273 = vmatpush.msra.mxu0 %v107
    %3274 = vmatpush.msra.mxu0 %v106
    %3275 = vmatpush.msra.mxu0 %v105
    %3276 = vmatpush.msra.mxu0 %v104
    %3277 = vmatpush.msra.mxu0 %v103
    %3278 = vmatpush.msra.mxu0 %v102
    %3279 = vmatpush.msra.mxu0 %v101
    %3280 = vmatpush.msra.mxu0 %v100
    %3281 = vmatpush.msra.mxu0 %v99
    %3282 = vmatpush.msra.mxu0 %v98
    %3283 = vmatpush.msra.mxu0 %v97
    %3284 = vmatmul.f32.gmra.mxu0 %v3166
    %v3285 = vpop.f32.mrf.mxu0
    %v3286 = vadd.f32 %v3266, %v3285
    %3287 = vdwg.mxu0
    %3288 = vmatpush.msra.mxu0 %v128
    %3289 = vmatpush.msra.mxu0 %v127
    %3290 = vmatpush.msra.mxu0 %v126
    %3291 = vmatpush.msra.mxu0 %v125
    %3292 = vmatpush.msra.mxu0 %v124
    %3293 = vmatpush.msra.mxu0 %v123
    %3294 = vmatpush.msra.mxu0 %v122
    %3295 = vmatpush.msra.mxu0 %v121
    %3296 = vmatpush.msra.mxu0 %v120
    %3297 = vmatpush.msra.mxu0 %v119
    %3298 = vmatpush.msra.mxu0 %v118
    %3299 = vmatpush.msra.mxu0 %v117
    %3300 = vmatpush.msra.mxu0 %v116
    %3301 = vmatpush.msra.mxu0 %v115
    %3302 = vmatpush.msra.mxu0 %v114
    %3303 = vmatpush.msra.mxu0 %v113
    %3304 = vmatmul.f32.gmra.mxu0 %v3173
    %v3305 = vpop.f32.mrf.mxu0
    %v3306 = vadd.f32 %v3286, %v3305
    %3307 = vdwg.mxu0
    %3308 = vmatpush.msra.mxu0 %v144
    %3309 = vmatpush.msra.mxu0 %v143
    %3310 = vmatpush.msra.mxu0 %v142
    %3311 = vmatpush.msra.mxu0 %v141
    %3312 = vmatpush.msra.mxu0 %v140
    %3313 = vmatpush.msra.mxu0 %v139
    %3314 = vmatpush.msra.mxu0 %v138
    %3315 = vmatpush.msra.mxu0 %v137
    %3316 = vmatpush.msra.mxu0 %v136
    %3317 = vmatpush.msra.mxu0 %v135
    %3318 = vmatpush.msra.mxu0 %v134
    %3319 = vmatpush.msra.mxu0 %v133
    %3320 = vmatpush.msra.mxu0 %v132
    %3321 = vmatpush.msra.mxu0 %v131
    %3322 = vmatpush.msra.mxu0 %v130
    %3323 = vmatpush.msra.mxu0 %v129
    %3324 = vmatmul.f32.gmra.mxu0 %v3180
    %v3325 = vpop.f32.mrf.mxu0
    %v3326 = vadd.f32 %v3306, %v3325
    %3327 = vdwg.mxu0
    %3328 = vmatpush.msra.mxu0 %v160
    %3329 = vmatpush.msra.mxu0 %v159
    %3330 = vmatpush.msra.mxu0 %v158
    %3331 = vmatpush.msra.mxu0 %v157
    %3332 = vmatpush.msra.mxu0 %v156
    %3333 = vmatpush.msra.mxu0 %v155
    %3334 = vmatpush.msra.mxu0 %v154
    %3335 = vmatpush.msra.mxu0 %v153
    %3336 = vmatpush.msra.mxu0 %v152
    %3337 = vmatpush.msra.mxu0 %v151
    %3338 = vmatpush.msra.mxu0 %v150
    %3339 = vmatpush.msra.mxu0 %v149
    %3340 = vmatpush.msra.mxu0 %v148
    %3341 = vmatpush.msra.mxu0 %v147
    %3342 = vmatpush.msra.mxu0 %v146
    %3343 = vmatpush.msra.mxu0 %v145
    %3344 = vmatmul.f32.gmra.mxu0 %v3187
    %v3345 = vpop.f32.mrf.mxu0
    %v3346 = vadd.f32 %v3326, %v3345
    %3347 = vdwg.mxu0
    %v3348 = vmul.f32 %v3346, 0.03125
    %v3350 = vsel %vm1274, %v3348, 0
    %3352 = vmatpush.msra.mxu0 0.0
    %3353 = vmatpush.msra.mxu0 0.0
    %3354 = vmatpush.msra.mxu0 0.0
    %3355 = vmatpush.msra.mxu0 0.0
    %3356 = vmatpush.msra.mxu0 0.0
    %3357 = vmatpush.msra.mxu0 0.0
    %3358 = vmatpush.msra.mxu0 0.0
    %3359 = vmatpush.msra.mxu0 0.0
    %3360 = vmatpush.msra.mxu0 %v217
    %3361 = vmatpush.msra.mxu0 %v209
    %3362 = vmatpush.msra.mxu0 %v201
    %3363 = vmatpush.msra.mxu0 %v193
    %3364 = vmatpush.msra.mxu0 %v185
    %3365 = vmatpush.msra.mxu0 %v177
    %3366 = vmatpush.msra.mxu0 %v169
    %3367 = vmatpush.msra.mxu0 %v161
    %3368 = vmatmul.f32.gmra.mxu0 %v3350
    %v3369 = vpop.f32.mrf.mxu0
    %v3370 = vadd.f32 0.0, %v3369
    %3371 = vdwg.mxu0
    %3372 = vmatpush.msra.mxu0 0.0
    %3373 = vmatpush.msra.mxu0 0.0
    %3374 = vmatpush.msra.mxu0 0.0
    %3375 = vmatpush.msra.mxu0 0.0
    %3376 = vmatpush.msra.mxu0 0.0
    %3377 = vmatpush.msra.mxu0 0.0
    %3378 = vmatpush.msra.mxu0 0.0
    %3379 = vmatpush.msra.mxu0 0.0
    %3380 = vmatpush.msra.mxu0 %v218
    %3381 = vmatpush.msra.mxu0 %v210
    %3382 = vmatpush.msra.mxu0 %v202
    %3383 = vmatpush.msra.mxu0 %v194
    %3384 = vmatpush.msra.mxu0 %v186
    %3385 = vmatpush.msra.mxu0 %v178
    %3386 = vmatpush.msra.mxu0 %v170
    %3387 = vmatpush.msra.mxu0 %v162
    %3388 = vmatmul.f32.gmra.mxu0 %v3350
    %v3389 = vpop.f32.mrf.mxu0
    %v3390 = vadd.f32 0.0, %v3389
    %3391 = vdwg.mxu0
    %3392 = vmatpush.msra.mxu0 0.0
    %3393 = vmatpush.msra.mxu0 0.0
    %3394 = vmatpush.msra.mxu0 0.0
    %3395 = vmatpush.msra.mxu0 0.0
    %3396 = vmatpush.msra.mxu0 0.0
    %3397 = vmatpush.msra.mxu0 0.0
    %3398 = vmatpush.msra.mxu0 0.0
    %3399 = vmatpush.msra.mxu0 0.0
    %3400 = vmatpush.msra.mxu0 %v219
    %3401 = vmatpush.msra.mxu0 %v211
    %3402 = vmatpush.msra.mxu0 %v203
    %3403 = vmatpush.msra.mxu0 %v195
    %3404 = vmatpush.msra.mxu0 %v187
    %3405 = vmatpush.msra.mxu0 %v179
    %3406 = vmatpush.msra.mxu0 %v171
    %3407 = vmatpush.msra.mxu0 %v163
    %3408 = vmatmul.f32.gmra.mxu0 %v3350
    %v3409 = vpop.f32.mrf.mxu0
    %v3410 = vadd.f32 0.0, %v3409
    %3411 = vdwg.mxu0
    %3412 = vmatpush.msra.mxu0 0.0
    %3413 = vmatpush.msra.mxu0 0.0
    %3414 = vmatpush.msra.mxu0 0.0
    %3415 = vmatpush.msra.mxu0 0.0
    %3416 = vmatpush.msra.mxu0 0.0
    %3417 = vmatpush.msra.mxu0 0.0
    %3418 = vmatpush.msra.mxu0 0.0
    %3419 = vmatpush.msra.mxu0 0.0
    %3420 = vmatpush.msra.mxu0 %v220
    %3421 = vmatpush.msra.mxu0 %v212
    %3422 = vmatpush.msra.mxu0 %v204
    %3423 = vmatpush.msra.mxu0 %v196
    %3424 = vmatpush.msra.mxu0 %v188
    %3425 = vmatpush.msra.mxu0 %v180
    %3426 = vmatpush.msra.mxu0 %v172
    %3427 = vmatpush.msra.mxu0 %v164
    %3428 = vmatmul.f32.gmra.mxu0 %v3350
    %v3429 = vpop.f32.mrf.mxu0
    %v3430 = vadd.f32 0.0, %v3429
    %3431 = vdwg.mxu0
    %3432 = vmatpush.msra.mxu0 0.0
    %3433 = vmatpush.msra.mxu0 0.0
    %3434 = vmatpush.msra.mxu0 0.0
    %3435 = vmatpush.msra.mxu0 0.0
    %3436 = vmatpush.msra.mxu0 0.0
    %3437 = vmatpush.msra.mxu0 0.0
    %3438 = vmatpush.msra.mxu0 0.0
    %3439 = vmatpush.msra.mxu0 0.0
    %3440 = vmatpush.msra.mxu0 %v221
    %3441 = vmatpush.msra.mxu0 %v213
    %3442 = vmatpush.msra.mxu0 %v205
    %3443 = vmatpush.msra.mxu0 %v197
    %3444 = vmatpush.msra.mxu0 %v189
    %3445 = vmatpush.msra.mxu0 %v181
    %3446 = vmatpush.msra.mxu0 %v173
    %3447 = vmatpush.msra.mxu0 %v165
    %3448 = vmatmul.f32.gmra.mxu0 %v3350
    %v3449 = vpop.f32.mrf.mxu0
    %v3450 = vadd.f32 0.0, %v3449
    %3451 = vdwg.mxu0
    %3452 = vmatpush.msra.mxu0 0.0
    %3453 = vmatpush.msra.mxu0 0.0
    %3454 = vmatpush.msra.mxu0 0.0
    %3455 = vmatpush.msra.mxu0 0.0
    %3456 = vmatpush.msra.mxu0 0.0
    %3457 = vmatpush.msra.mxu0 0.0
    %3458 = vmatpush.msra.mxu0 0.0
    %3459 = vmatpush.msra.mxu0 0.0
    %3460 = vmatpush.msra.mxu0 %v222
    %3461 = vmatpush.msra.mxu0 %v214
    %3462 = vmatpush.msra.mxu0 %v206
    %3463 = vmatpush.msra.mxu0 %v198
    %3464 = vmatpush.msra.mxu0 %v190
    %3465 = vmatpush.msra.mxu0 %v182
    %3466 = vmatpush.msra.mxu0 %v174
    %3467 = vmatpush.msra.mxu0 %v166
    %3468 = vmatmul.f32.gmra.mxu0 %v3350
    %v3469 = vpop.f32.mrf.mxu0
    %v3470 = vadd.f32 0.0, %v3469
    %3471 = vdwg.mxu0
    %3472 = vmatpush.msra.mxu0 0.0
    %3473 = vmatpush.msra.mxu0 0.0
    %3474 = vmatpush.msra.mxu0 0.0
    %3475 = vmatpush.msra.mxu0 0.0
    %3476 = vmatpush.msra.mxu0 0.0
    %3477 = vmatpush.msra.mxu0 0.0
    %3478 = vmatpush.msra.mxu0 0.0
    %3479 = vmatpush.msra.mxu0 0.0
    %3480 = vmatpush.msra.mxu0 %v223
    %3481 = vmatpush.msra.mxu0 %v215
    %3482 = vmatpush.msra.mxu0 %v207
    %3483 = vmatpush.msra.mxu0 %v199
    %3484 = vmatpush.msra.mxu0 %v191
    %3485 = vmatpush.msra.mxu0 %v183
    %3486 = vmatpush.msra.mxu0 %v175
    %3487 = vmatpush.msra.mxu0 %v167
    %3488 = vmatmul.f32.gmra.mxu0 %v3350
    %v3489 = vpop.f32.mrf.mxu0
    %v3490 = vadd.f32 0.0, %v3489
    %3491 = vdwg.mxu0
    %3492 = vmatpush.msra.mxu0 0.0
    %3493 = vmatpush.msra.mxu0 0.0
    %3494 = vmatpush.msra.mxu0 0.0
    %3495 = vmatpush.msra.mxu0 0.0
    %3496 = vmatpush.msra.mxu0 0.0
    %3497 = vmatpush.msra.mxu0 0.0
    %3498 = vmatpush.msra.mxu0 0.0
    %3499 = vmatpush.msra.mxu0 0.0
    %3500 = vmatpush.msra.mxu0 %v224
    %3501 = vmatpush.msra.mxu0 %v216
    %3502 = vmatpush.msra.mxu0 %v208
    %3503 = vmatpush.msra.mxu0 %v200
    %3504 = vmatpush.msra.mxu0 %v192
    %3505 = vmatpush.msra.mxu0 %v184
    %3506 = vmatpush.msra.mxu0 %v176
    %3507 = vmatpush.msra.mxu0 %v168
    %3508 = vmatmul.f32.gmra.mxu0 %v3350
    %v3509 = vpop.f32.mrf.mxu0
    %v3510 = vadd.f32 0.0, %v3509
    %3511 = vdwg.mxu0
    %v3512 = vperm.slane %v3370, 0
    %v3513 = vperm.slane %v3390, 0
    %v3514 = vperm.slane %v3410, 0
    %v3515 = vperm.slane %v3430, 0
    %v3516 = vperm.slane %v3450, 0
    %v3517 = vperm.slane %v3470, 0
    %v3518 = vperm.slane %v3490, 0
    %v3519 = vperm.slane %v3510, 0
    %v3520 = vsub.f32 %v744, %v3512
    %v3521 = vsub.f32 %v764, %v3513
    %v3522 = vsub.f32 %v784, %v3514
    %v3523 = vsub.f32 %v804, %v3515
    %v3524 = vsub.f32 %v824, %v3516
    %v3525 = vsub.f32 %v844, %v3517
    %v3526 = vsub.f32 %v1033, %v3518
    %v3527 = vsub.f32 %v1053, %v3519
    %v3528 = vmul.f32 %v3520, %v3520
    %v3529 = vmul.f32 %v3521, %v3521
    %v3530 = vmul.f32 %v3522, %v3522
    %v3531 = vmul.f32 %v3523, %v3523
    %v3532 = vmul.f32 %v3524, %v3524
    %v3533 = vmul.f32 %v3525, %v3525
    %v3534 = vmul.f32 %v3526, %v3526
    %v3535 = vmul.f32 %v3527, %v3527
    %v3536 = vsel %vm1056, %v3528, 0.0
    %v3537 = vrot.slane %v3536, 4
    %v3538 = vadd.f32 %v3536, %v3537
    %v3539 = vrot.slane %v3538, 2
    %v3540 = vadd.f32 %v3538, %v3539
    %v3541 = vrot.slane %v3540, 1
    %v3542 = vadd.f32 %v3540, %v3541
    %v3543 = vsel %vm1056, %v3529, 0.0
    %v3544 = vrot.slane %v3543, 4
    %v3545 = vadd.f32 %v3543, %v3544
    %v3546 = vrot.slane %v3545, 2
    %v3547 = vadd.f32 %v3545, %v3546
    %v3548 = vrot.slane %v3547, 1
    %v3549 = vadd.f32 %v3547, %v3548
    %v3550 = vsel %vm1056, %v3530, 0.0
    %v3551 = vrot.slane %v3550, 4
    %v3552 = vadd.f32 %v3550, %v3551
    %v3553 = vrot.slane %v3552, 2
    %v3554 = vadd.f32 %v3552, %v3553
    %v3555 = vrot.slane %v3554, 1
    %v3556 = vadd.f32 %v3554, %v3555
    %v3557 = vsel %vm1056, %v3531, 0.0
    %v3558 = vrot.slane %v3557, 4
    %v3559 = vadd.f32 %v3557, %v3558
    %v3560 = vrot.slane %v3559, 2
    %v3561 = vadd.f32 %v3559, %v3560
    %v3562 = vrot.slane %v3561, 1
    %v3563 = vadd.f32 %v3561, %v3562
    %v3564 = vsel %vm1056, %v3532, 0.0
    %v3565 = vrot.slane %v3564, 4
    %v3566 = vadd.f32 %v3564, %v3565
    %v3567 = vrot.slane %v3566, 2
    %v3568 = vadd.f32 %v3566, %v3567
    %v3569 = vrot.slane %v3568, 1
    %v3570 = vadd.f32 %v3568, %v3569
    %v3571 = vsel %vm1056, %v3533, 0.0
    %v3572 = vrot.slane %v3571, 4
    %v3573 = vadd.f32 %v3571, %v3572
    %v3574 = vrot.slane %v3573, 2
    %v3575 = vadd.f32 %v3573, %v3574
    %v3576 = vrot.slane %v3575, 1
    %v3577 = vadd.f32 %v3575, %v3576
    %v3578 = vsel %vm1056, %v3534, 0.0
    %v3579 = vrot.slane %v3578, 4
    %v3580 = vadd.f32 %v3578, %v3579
    %v3581 = vrot.slane %v3580, 2
    %v3582 = vadd.f32 %v3580, %v3581
    %v3583 = vrot.slane %v3582, 1
    %v3584 = vadd.f32 %v3582, %v3583
    %v3585 = vsel %vm1056, %v3535, 0.0
    %v3586 = vrot.slane %v3585, 4
    %v3587 = vadd.f32 %v3585, %v3586
    %v3588 = vrot.slane %v3587, 2
    %v3589 = vadd.f32 %v3587, %v3588
    %v3590 = vrot.slane %v3589, 1
    %v3591 = vadd.f32 %v3589, %v3590
    %3592 = vmatpush.msra.mxu0 %v48
    %3593 = vmatpush.msra.mxu0 %v47
    %3594 = vmatpush.msra.mxu0 %v46
    %3595 = vmatpush.msra.mxu0 %v45
    %3596 = vmatpush.msra.mxu0 %v44
    %3597 = vmatpush.msra.mxu0 %v43
    %3598 = vmatpush.msra.mxu0 %v42
    %3599 = vmatpush.msra.mxu0 %v41
    %3600 = vmatpush.msra.mxu0 %v40
    %3601 = vmatpush.msra.mxu0 %v39
    %3602 = vmatpush.msra.mxu0 %v38
    %3603 = vmatpush.msra.mxu0 %v37
    %3604 = vmatpush.msra.mxu0 %v36
    %3605 = vmatpush.msra.mxu0 %v35
    %3606 = vmatpush.msra.mxu0 %v34
    %3607 = vmatpush.msra.mxu0 %v33
    %3608 = vmatmul.f32.gmra.mxu0 %v3542
    %v3609 = vpop.f32.mrf.mxu0
    %v3610 = vadd.f32 0.0, %v3609
    %3611 = vdwg.mxu0
    %3612 = vmatpush.msra.mxu0 %v64
    %3613 = vmatpush.msra.mxu0 %v63
    %3614 = vmatpush.msra.mxu0 %v62
    %3615 = vmatpush.msra.mxu0 %v61
    %3616 = vmatpush.msra.mxu0 %v60
    %3617 = vmatpush.msra.mxu0 %v59
    %3618 = vmatpush.msra.mxu0 %v58
    %3619 = vmatpush.msra.mxu0 %v57
    %3620 = vmatpush.msra.mxu0 %v56
    %3621 = vmatpush.msra.mxu0 %v55
    %3622 = vmatpush.msra.mxu0 %v54
    %3623 = vmatpush.msra.mxu0 %v53
    %3624 = vmatpush.msra.mxu0 %v52
    %3625 = vmatpush.msra.mxu0 %v51
    %3626 = vmatpush.msra.mxu0 %v50
    %3627 = vmatpush.msra.mxu0 %v49
    %3628 = vmatmul.f32.gmra.mxu0 %v3549
    %v3629 = vpop.f32.mrf.mxu0
    %v3630 = vadd.f32 %v3610, %v3629
    %3631 = vdwg.mxu0
    %3632 = vmatpush.msra.mxu0 %v80
    %3633 = vmatpush.msra.mxu0 %v79
    %3634 = vmatpush.msra.mxu0 %v78
    %3635 = vmatpush.msra.mxu0 %v77
    %3636 = vmatpush.msra.mxu0 %v76
    %3637 = vmatpush.msra.mxu0 %v75
    %3638 = vmatpush.msra.mxu0 %v74
    %3639 = vmatpush.msra.mxu0 %v73
    %3640 = vmatpush.msra.mxu0 %v72
    %3641 = vmatpush.msra.mxu0 %v71
    %3642 = vmatpush.msra.mxu0 %v70
    %3643 = vmatpush.msra.mxu0 %v69
    %3644 = vmatpush.msra.mxu0 %v68
    %3645 = vmatpush.msra.mxu0 %v67
    %3646 = vmatpush.msra.mxu0 %v66
    %3647 = vmatpush.msra.mxu0 %v65
    %3648 = vmatmul.f32.gmra.mxu0 %v3556
    %v3649 = vpop.f32.mrf.mxu0
    %v3650 = vadd.f32 %v3630, %v3649
    %3651 = vdwg.mxu0
    %3652 = vmatpush.msra.mxu0 %v96
    %3653 = vmatpush.msra.mxu0 %v95
    %3654 = vmatpush.msra.mxu0 %v94
    %3655 = vmatpush.msra.mxu0 %v93
    %3656 = vmatpush.msra.mxu0 %v92
    %3657 = vmatpush.msra.mxu0 %v91
    %3658 = vmatpush.msra.mxu0 %v90
    %3659 = vmatpush.msra.mxu0 %v89
    %3660 = vmatpush.msra.mxu0 %v88
    %3661 = vmatpush.msra.mxu0 %v87
    %3662 = vmatpush.msra.mxu0 %v86
    %3663 = vmatpush.msra.mxu0 %v85
    %3664 = vmatpush.msra.mxu0 %v84
    %3665 = vmatpush.msra.mxu0 %v83
    %3666 = vmatpush.msra.mxu0 %v82
    %3667 = vmatpush.msra.mxu0 %v81
    %3668 = vmatmul.f32.gmra.mxu0 %v3563
    %v3669 = vpop.f32.mrf.mxu0
    %v3670 = vadd.f32 %v3650, %v3669
    %3671 = vdwg.mxu0
    %3672 = vmatpush.msra.mxu0 %v112
    %3673 = vmatpush.msra.mxu0 %v111
    %3674 = vmatpush.msra.mxu0 %v110
    %3675 = vmatpush.msra.mxu0 %v109
    %3676 = vmatpush.msra.mxu0 %v108
    %3677 = vmatpush.msra.mxu0 %v107
    %3678 = vmatpush.msra.mxu0 %v106
    %3679 = vmatpush.msra.mxu0 %v105
    %3680 = vmatpush.msra.mxu0 %v104
    %3681 = vmatpush.msra.mxu0 %v103
    %3682 = vmatpush.msra.mxu0 %v102
    %3683 = vmatpush.msra.mxu0 %v101
    %3684 = vmatpush.msra.mxu0 %v100
    %3685 = vmatpush.msra.mxu0 %v99
    %3686 = vmatpush.msra.mxu0 %v98
    %3687 = vmatpush.msra.mxu0 %v97
    %3688 = vmatmul.f32.gmra.mxu0 %v3570
    %v3689 = vpop.f32.mrf.mxu0
    %v3690 = vadd.f32 %v3670, %v3689
    %3691 = vdwg.mxu0
    %3692 = vmatpush.msra.mxu0 %v128
    %3693 = vmatpush.msra.mxu0 %v127
    %3694 = vmatpush.msra.mxu0 %v126
    %3695 = vmatpush.msra.mxu0 %v125
    %3696 = vmatpush.msra.mxu0 %v124
    %3697 = vmatpush.msra.mxu0 %v123
    %3698 = vmatpush.msra.mxu0 %v122
    %3699 = vmatpush.msra.mxu0 %v121
    %3700 = vmatpush.msra.mxu0 %v120
    %3701 = vmatpush.msra.mxu0 %v119
    %3702 = vmatpush.msra.mxu0 %v118
    %3703 = vmatpush.msra.mxu0 %v117
    %3704 = vmatpush.msra.mxu0 %v116
    %3705 = vmatpush.msra.mxu0 %v115
    %3706 = vmatpush.msra.mxu0 %v114
    %3707 = vmatpush.msra.mxu0 %v113
    %3708 = vmatmul.f32.gmra.mxu0 %v3577
    %v3709 = vpop.f32.mrf.mxu0
    %v3710 = vadd.f32 %v3690, %v3709
    %3711 = vdwg.mxu0
    %3712 = vmatpush.msra.mxu0 %v144
    %3713 = vmatpush.msra.mxu0 %v143
    %3714 = vmatpush.msra.mxu0 %v142
    %3715 = vmatpush.msra.mxu0 %v141
    %3716 = vmatpush.msra.mxu0 %v140
    %3717 = vmatpush.msra.mxu0 %v139
    %3718 = vmatpush.msra.mxu0 %v138
    %3719 = vmatpush.msra.mxu0 %v137
    %3720 = vmatpush.msra.mxu0 %v136
    %3721 = vmatpush.msra.mxu0 %v135
    %3722 = vmatpush.msra.mxu0 %v134
    %3723 = vmatpush.msra.mxu0 %v133
    %3724 = vmatpush.msra.mxu0 %v132
    %3725 = vmatpush.msra.mxu0 %v131
    %3726 = vmatpush.msra.mxu0 %v130
    %3727 = vmatpush.msra.mxu0 %v129
    %3728 = vmatmul.f32.gmra.mxu0 %v3584
    %v3729 = vpop.f32.mrf.mxu0
    %v3730 = vadd.f32 %v3710, %v3729
    %3731 = vdwg.mxu0
    %3732 = vmatpush.msra.mxu0 %v160
    %3733 = vmatpush.msra.mxu0 %v159
    %3734 = vmatpush.msra.mxu0 %v158
    %3735 = vmatpush.msra.mxu0 %v157
    %3736 = vmatpush.msra.mxu0 %v156
    %3737 = vmatpush.msra.mxu0 %v155
    %3738 = vmatpush.msra.mxu0 %v154
    %3739 = vmatpush.msra.mxu0 %v153
    %3740 = vmatpush.msra.mxu0 %v152
    %3741 = vmatpush.msra.mxu0 %v151
    %3742 = vmatpush.msra.mxu0 %v150
    %3743 = vmatpush.msra.mxu0 %v149
    %3744 = vmatpush.msra.mxu0 %v148
    %3745 = vmatpush.msra.mxu0 %v147
    %3746 = vmatpush.msra.mxu0 %v146
    %3747 = vmatpush.msra.mxu0 %v145
    %3748 = vmatmul.f32.gmra.mxu0 %v3591
    %v3749 = vpop.f32.mrf.mxu0
    %v3750 = vadd.f32 %v3730, %v3749
    %3751 = vdwg.mxu0
    %v3752 = vmul.f32 %v3750, 0.03125
    %v3753 = vld [vmem:[%s5 + $0x2] sm:$0x1]
    %v3754 = vadd.f32 %v3752, 1e-05
    %v3755 = vrsqrt.pop %v3754
    %v3756 = vmul.f32 %v3755, %v3754
    %v3757 = vmul.f32 %v3756, %v3755
    %v3758 = vmul.f32 0.5, %v3757
    %v3759 = vsub.f32 1.5, %v3758
    %v3760 = vmul.f32 %v3755, %v3759
    %vm3761 = vweird.f32 %v3754
    %vm3762 = vweird.f32 %v3755
    %vm3763 = vmor %vm3761, %vm3762
    %v3764 = vsel %vm3763, %v3755, %v3760
    %v3765 = vmul.f32 %v3753, %v3764
    %v3766 = vld [vmem:[%s6 + $0x2] sm:$0x1]
    %v3768 = vrot.slane %v3766, 7
    %v3770 = vsel %vm1696, %v3765, %v3768
    %v3772 = vsel %vm1274, %v3770, 0
    %3774 = vmatpush.msra.mxu0 0.0
    %3775 = vmatpush.msra.mxu0 0.0
    %3776 = vmatpush.msra.mxu0 0.0
    %3777 = vmatpush.msra.mxu0 0.0
    %3778 = vmatpush.msra.mxu0 0.0
    %3779 = vmatpush.msra.mxu0 0.0
    %3780 = vmatpush.msra.mxu0 0.0
    %3781 = vmatpush.msra.mxu0 0.0
    %3782 = vmatpush.msra.mxu0 %v217
    %3783 = vmatpush.msra.mxu0 %v209
    %3784 = vmatpush.msra.mxu0 %v201
    %3785 = vmatpush.msra.mxu0 %v193
    %3786 = vmatpush.msra.mxu0 %v185
    %3787 = vmatpush.msra.mxu0 %v177
    %3788 = vmatpush.msra.mxu0 %v169
    %3789 = vmatpush.msra.mxu0 %v161
    %3790 = vmatmul.f32.gmra.mxu0 %v3772
    %v3791 = vpop.f32.mrf.mxu0
    %v3792 = vadd.f32 0.0, %v3791
    %3793 = vdwg.mxu0
    %3794 = vmatpush.msra.mxu0 0.0
    %3795 = vmatpush.msra.mxu0 0.0
    %3796 = vmatpush.msra.mxu0 0.0
    %3797 = vmatpush.msra.mxu0 0.0
    %3798 = vmatpush.msra.mxu0 0.0
    %3799 = vmatpush.msra.mxu0 0.0
    %3800 = vmatpush.msra.mxu0 0.0
    %3801 = vmatpush.msra.mxu0 0.0
    %3802 = vmatpush.msra.mxu0 %v218
    %3803 = vmatpush.msra.mxu0 %v210
    %3804 = vmatpush.msra.mxu0 %v202
    %3805 = vmatpush.msra.mxu0 %v194
    %3806 = vmatpush.msra.mxu0 %v186
    %3807 = vmatpush.msra.mxu0 %v178
    %3808 = vmatpush.msra.mxu0 %v170
    %3809 = vmatpush.msra.mxu0 %v162
    %3810 = vmatmul.f32.gmra.mxu0 %v3772
    %v3811 = vpop.f32.mrf.mxu0
    %v3812 = vadd.f32 0.0, %v3811
    %3813 = vdwg.mxu0
    %3814 = vmatpush.msra.mxu0 0.0
    %3815 = vmatpush.msra.mxu0 0.0
    %3816 = vmatpush.msra.mxu0 0.0
    %3817 = vmatpush.msra.mxu0 0.0
    %3818 = vmatpush.msra.mxu0 0.0
    %3819 = vmatpush.msra.mxu0 0.0
    %3820 = vmatpush.msra.mxu0 0.0
    %3821 = vmatpush.msra.mxu0 0.0
    %3822 = vmatpush.msra.mxu0 %v219
    %3823 = vmatpush.msra.mxu0 %v211
    %3824 = vmatpush.msra.mxu0 %v203
    %3825 = vmatpush.msra.mxu0 %v195
    %3826 = vmatpush.msra.mxu0 %v187
    %3827 = vmatpush.msra.mxu0 %v179
    %3828 = vmatpush.msra.mxu0 %v171
    %3829 = vmatpush.msra.mxu0 %v163
    %3830 = vmatmul.f32.gmra.mxu0 %v3772
    %v3831 = vpop.f32.mrf.mxu0
    %v3832 = vadd.f32 0.0, %v3831
    %3833 = vdwg.mxu0
    %3834 = vmatpush.msra.mxu0 0.0
    %3835 = vmatpush.msra.mxu0 0.0
    %3836 = vmatpush.msra.mxu0 0.0
    %3837 = vmatpush.msra.mxu0 0.0
    %3838 = vmatpush.msra.mxu0 0.0
    %3839 = vmatpush.msra.mxu0 0.0
    %3840 = vmatpush.msra.mxu0 0.0
    %3841 = vmatpush.msra.mxu0 0.0
    %3842 = vmatpush.msra.mxu0 %v220
    %3843 = vmatpush.msra.mxu0 %v212
    %3844 = vmatpush.msra.mxu0 %v204
    %3845 = vmatpush.msra.mxu0 %v196
    %3846 = vmatpush.msra.mxu0 %v188
    %3847 = vmatpush.msra.mxu0 %v180
    %3848 = vmatpush.msra.mxu0 %v172
    %3849 = vmatpush.msra.mxu0 %v164
    %3850 = vmatmul.f32.gmra.mxu0 %v3772
    %v3851 = vpop.f32.mrf.mxu0
    %v3852 = vadd.f32 0.0, %v3851
    %3853 = vdwg.mxu0
    %3854 = vmatpush.msra.mxu0 0.0
    %3855 = vmatpush.msra.mxu0 0.0
    %3856 = vmatpush.msra.mxu0 0.0
    %3857 = vmatpush.msra.mxu0 0.0
    %3858 = vmatpush.msra.mxu0 0.0
    %3859 = vmatpush.msra.mxu0 0.0
    %3860 = vmatpush.msra.mxu0 0.0
    %3861 = vmatpush.msra.mxu0 0.0
    %3862 = vmatpush.msra.mxu0 %v221
    %3863 = vmatpush.msra.mxu0 %v213
    %3864 = vmatpush.msra.mxu0 %v205
    %3865 = vmatpush.msra.mxu0 %v197
    %3866 = vmatpush.msra.mxu0 %v189
    %3867 = vmatpush.msra.mxu0 %v181
    %3868 = vmatpush.msra.mxu0 %v173
    %3869 = vmatpush.msra.mxu0 %v165
    %3870 = vmatmul.f32.gmra.mxu0 %v3772
    %v3871 = vpop.f32.mrf.mxu0
    %v3872 = vadd.f32 0.0, %v3871
    %3873 = vdwg.mxu0
    %3874 = vmatpush.msra.mxu0 0.0
    %3875 = vmatpush.msra.mxu0 0.0
    %3876 = vmatpush.msra.mxu0 0.0
    %3877 = vmatpush.msra.mxu0 0.0
    %3878 = vmatpush.msra.mxu0 0.0
    %3879 = vmatpush.msra.mxu0 0.0
    %3880 = vmatpush.msra.mxu0 0.0
    %3881 = vmatpush.msra.mxu0 0.0
    %3882 = vmatpush.msra.mxu0 %v222
    %3883 = vmatpush.msra.mxu0 %v214
    %3884 = vmatpush.msra.mxu0 %v206
    %3885 = vmatpush.msra.mxu0 %v198
    %3886 = vmatpush.msra.mxu0 %v190
    %3887 = vmatpush.msra.mxu0 %v182
    %3888 = vmatpush.msra.mxu0 %v174
    %3889 = vmatpush.msra.mxu0 %v166
    %3890 = vmatmul.f32.gmra.mxu0 %v3772
    %v3891 = vpop.f32.mrf.mxu0
    %v3892 = vadd.f32 0.0, %v3891
    %3893 = vdwg.mxu0
    %3894 = vmatpush.msra.mxu0 0.0
    %3895 = vmatpush.msra.mxu0 0.0
    %3896 = vmatpush.msra.mxu0 0.0
    %3897 = vmatpush.msra.mxu0 0.0
    %3898 = vmatpush.msra.mxu0 0.0
    %3899 = vmatpush.msra.mxu0 0.0
    %3900 = vmatpush.msra.mxu0 0.0
    %3901 = vmatpush.msra.mxu0 0.0
    %3902 = vmatpush.msra.mxu0 %v223
    %3903 = vmatpush.msra.mxu0 %v215
    %3904 = vmatpush.msra.mxu0 %v207
    %3905 = vmatpush.msra.mxu0 %v199
    %3906 = vmatpush.msra.mxu0 %v191
    %3907 = vmatpush.msra.mxu0 %v183
    %3908 = vmatpush.msra.mxu0 %v175
    %3909 = vmatpush.msra.mxu0 %v167
    %3910 = vmatmul.f32.gmra.mxu0 %v3772
    %v3911 = vpop.f32.mrf.mxu0
    %v3912 = vadd.f32 0.0, %v3911
    %3913 = vdwg.mxu0
    %3914 = vmatpush.msra.mxu0 0.0
    %3915 = vmatpush.msra.mxu0 0.0
    %3916 = vmatpush.msra.mxu0 0.0
    %3917 = vmatpush.msra.mxu0 0.0
    %3918 = vmatpush.msra.mxu0 0.0
    %3919 = vmatpush.msra.mxu0 0.0
    %3920 = vmatpush.msra.mxu0 0.0
    %3921 = vmatpush.msra.mxu0 0.0
    %3922 = vmatpush.msra.mxu0 %v224
    %3923 = vmatpush.msra.mxu0 %v216
    %3924 = vmatpush.msra.mxu0 %v208
    %3925 = vmatpush.msra.mxu0 %v200
    %3926 = vmatpush.msra.mxu0 %v192
    %3927 = vmatpush.msra.mxu0 %v184
    %3928 = vmatpush.msra.mxu0 %v176
    %3929 = vmatpush.msra.mxu0 %v168
    %3930 = vmatmul.f32.gmra.mxu0 %v3772
    %v3931 = vpop.f32.mrf.mxu0
    %v3932 = vadd.f32 0.0, %v3931
    %3933 = vdwg.mxu0
    %v3934 = vperm.slane %v3792, 0
    %v3935 = vperm.slane %v3812, 0
    %v3936 = vperm.slane %v3832, 0
    %v3937 = vperm.slane %v3852, 0
    %v3938 = vperm.slane %v3872, 0
    %v3939 = vperm.slane %v3892, 0
    %v3940 = vperm.slane %v3912, 0
    %v3941 = vperm.slane %v3932, 0
    %v3942 = vmul.f32 %v3520, %v3934
    %v3943 = vmul.f32 %v3521, %v3935
    %v3944 = vmul.f32 %v3522, %v3936
    %v3945 = vmul.f32 %v3523, %v3937
    %v3946 = vmul.f32 %v3524, %v3938
    %v3947 = vmul.f32 %v3525, %v3939
    %v3948 = vmul.f32 %v3526, %v3940
    %v3949 = vmul.f32 %v3527, %v3941
    %v3950 = vperm.slane %v3792, 1
    %v3951 = vperm.slane %v3812, 1
    %v3952 = vperm.slane %v3832, 1
    %v3953 = vperm.slane %v3852, 1
    %v3954 = vperm.slane %v3872, 1
    %v3955 = vperm.slane %v3892, 1
    %v3956 = vperm.slane %v3912, 1
    %v3957 = vperm.slane %v3932, 1
    %v3958 = vadd.f32 %v3942, %v3950
    %v3959 = vadd.f32 %v3943, %v3951
    %v3960 = vadd.f32 %v3944, %v3952
    %v3961 = vadd.f32 %v3945, %v3953
    %v3962 = vadd.f32 %v3946, %v3954
    %v3963 = vadd.f32 %v3947, %v3955
    %v3964 = vadd.f32 %v3948, %v3956
    %v3965 = vadd.f32 %v3949, %v3957
    %v3966 = vmax.f32 %v3958, 0.0
    %v3967 = vmax.f32 %v3959, 0.0
    %v3968 = vmax.f32 %v3960, 0.0
    %v3969 = vmax.f32 %v3961, 0.0
    %v3970 = vmax.f32 %v3962, 0.0
    %v3971 = vmax.f32 %v3963, 0.0
    %v3972 = vmax.f32 %v3964, 0.0
    %v3973 = vmax.f32 %v3965, 0.0
    %3974 = vmatpush.msra.mxu0 %v48
    %3975 = vmatpush.msra.mxu0 %v47
    %3976 = vmatpush.msra.mxu0 %v46
    %3977 = vmatpush.msra.mxu0 %v45
    %3978 = vmatpush.msra.mxu0 %v44
    %3979 = vmatpush.msra.mxu0 %v43
    %3980 = vmatpush.msra.mxu0 %v42
    %3981 = vmatpush.msra.mxu0 %v41
    %3982 = vmatpush.msra.mxu0 %v40
    %3983 = vmatpush.msra.mxu0 %v39
    %3984 = vmatpush.msra.mxu0 %v38
    %3985 = vmatpush.msra.mxu0 %v37
    %3986 = vmatpush.msra.mxu0 %v36
    %3987 = vmatpush.msra.mxu0 %v35
    %3988 = vmatpush.msra.mxu0 %v34
    %3989 = vmatpush.msra.mxu0 %v33
    %3990 = vmatmul.f32.gmra.mxu0 %v3966
    %v3991 = vpop.f32.mrf.mxu0
    %v3992 = vadd.f32 0.0, %v3991
    %3993 = vdwg.mxu0
    %3994 = vmatpush.msra.mxu0 %v64
    %3995 = vmatpush.msra.mxu0 %v63
    %3996 = vmatpush.msra.mxu0 %v62
    %3997 = vmatpush.msra.mxu0 %v61
    %3998 = vmatpush.msra.mxu0 %v60
    %3999 = vmatpush.msra.mxu0 %v59
    %4000 = vmatpush.msra.mxu0 %v58
    %4001 = vmatpush.msra.mxu0 %v57
    %4002 = vmatpush.msra.mxu0 %v56
    %4003 = vmatpush.msra.mxu0 %v55
    %4004 = vmatpush.msra.mxu0 %v54
    %4005 = vmatpush.msra.mxu0 %v53
    %4006 = vmatpush.msra.mxu0 %v52
    %4007 = vmatpush.msra.mxu0 %v51
    %4008 = vmatpush.msra.mxu0 %v50
    %4009 = vmatpush.msra.mxu0 %v49
    %4010 = vmatmul.f32.gmra.mxu0 %v3967
    %v4011 = vpop.f32.mrf.mxu0
    %v4012 = vadd.f32 %v3992, %v4011
    %4013 = vdwg.mxu0
    %4014 = vmatpush.msra.mxu0 %v80
    %4015 = vmatpush.msra.mxu0 %v79
    %4016 = vmatpush.msra.mxu0 %v78
    %4017 = vmatpush.msra.mxu0 %v77
    %4018 = vmatpush.msra.mxu0 %v76
    %4019 = vmatpush.msra.mxu0 %v75
    %4020 = vmatpush.msra.mxu0 %v74
    %4021 = vmatpush.msra.mxu0 %v73
    %4022 = vmatpush.msra.mxu0 %v72
    %4023 = vmatpush.msra.mxu0 %v71
    %4024 = vmatpush.msra.mxu0 %v70
    %4025 = vmatpush.msra.mxu0 %v69
    %4026 = vmatpush.msra.mxu0 %v68
    %4027 = vmatpush.msra.mxu0 %v67
    %4028 = vmatpush.msra.mxu0 %v66
    %4029 = vmatpush.msra.mxu0 %v65
    %4030 = vmatmul.f32.gmra.mxu0 %v3968
    %v4031 = vpop.f32.mrf.mxu0
    %v4032 = vadd.f32 %v4012, %v4031
    %4033 = vdwg.mxu0
    %4034 = vmatpush.msra.mxu0 %v96
    %4035 = vmatpush.msra.mxu0 %v95
    %4036 = vmatpush.msra.mxu0 %v94
    %4037 = vmatpush.msra.mxu0 %v93
    %4038 = vmatpush.msra.mxu0 %v92
    %4039 = vmatpush.msra.mxu0 %v91
    %4040 = vmatpush.msra.mxu0 %v90
    %4041 = vmatpush.msra.mxu0 %v89
    %4042 = vmatpush.msra.mxu0 %v88
    %4043 = vmatpush.msra.mxu0 %v87
    %4044 = vmatpush.msra.mxu0 %v86
    %4045 = vmatpush.msra.mxu0 %v85
    %4046 = vmatpush.msra.mxu0 %v84
    %4047 = vmatpush.msra.mxu0 %v83
    %4048 = vmatpush.msra.mxu0 %v82
    %4049 = vmatpush.msra.mxu0 %v81
    %4050 = vmatmul.f32.gmra.mxu0 %v3969
    %v4051 = vpop.f32.mrf.mxu0
    %v4052 = vadd.f32 %v4032, %v4051
    %4053 = vdwg.mxu0
    %4054 = vmatpush.msra.mxu0 %v112
    %4055 = vmatpush.msra.mxu0 %v111
    %4056 = vmatpush.msra.mxu0 %v110
    %4057 = vmatpush.msra.mxu0 %v109
    %4058 = vmatpush.msra.mxu0 %v108
    %4059 = vmatpush.msra.mxu0 %v107
    %4060 = vmatpush.msra.mxu0 %v106
    %4061 = vmatpush.msra.mxu0 %v105
    %4062 = vmatpush.msra.mxu0 %v104
    %4063 = vmatpush.msra.mxu0 %v103
    %4064 = vmatpush.msra.mxu0 %v102
    %4065 = vmatpush.msra.mxu0 %v101
    %4066 = vmatpush.msra.mxu0 %v100
    %4067 = vmatpush.msra.mxu0 %v99
    %4068 = vmatpush.msra.mxu0 %v98
    %4069 = vmatpush.msra.mxu0 %v97
    %4070 = vmatmul.f32.gmra.mxu0 %v3970
    %v4071 = vpop.f32.mrf.mxu0
    %v4072 = vadd.f32 %v4052, %v4071
    %4073 = vdwg.mxu0
    %4074 = vmatpush.msra.mxu0 %v128
    %4075 = vmatpush.msra.mxu0 %v127
    %4076 = vmatpush.msra.mxu0 %v126
    %4077 = vmatpush.msra.mxu0 %v125
    %4078 = vmatpush.msra.mxu0 %v124
    %4079 = vmatpush.msra.mxu0 %v123
    %4080 = vmatpush.msra.mxu0 %v122
    %4081 = vmatpush.msra.mxu0 %v121
    %4082 = vmatpush.msra.mxu0 %v120
    %4083 = vmatpush.msra.mxu0 %v119
    %4084 = vmatpush.msra.mxu0 %v118
    %4085 = vmatpush.msra.mxu0 %v117
    %4086 = vmatpush.msra.mxu0 %v116
    %4087 = vmatpush.msra.mxu0 %v115
    %4088 = vmatpush.msra.mxu0 %v114
    %4089 = vmatpush.msra.mxu0 %v113
    %4090 = vmatmul.f32.gmra.mxu0 %v3971
    %v4091 = vpop.f32.mrf.mxu0
    %v4092 = vadd.f32 %v4072, %v4091
    %4093 = vdwg.mxu0
    %4094 = vmatpush.msra.mxu0 %v144
    %4095 = vmatpush.msra.mxu0 %v143
    %4096 = vmatpush.msra.mxu0 %v142
    %4097 = vmatpush.msra.mxu0 %v141
    %4098 = vmatpush.msra.mxu0 %v140
    %4099 = vmatpush.msra.mxu0 %v139
    %4100 = vmatpush.msra.mxu0 %v138
    %4101 = vmatpush.msra.mxu0 %v137
    %4102 = vmatpush.msra.mxu0 %v136
    %4103 = vmatpush.msra.mxu0 %v135
    %4104 = vmatpush.msra.mxu0 %v134
    %4105 = vmatpush.msra.mxu0 %v133
    %4106 = vmatpush.msra.mxu0 %v132
    %4107 = vmatpush.msra.mxu0 %v131
    %4108 = vmatpush.msra.mxu0 %v130
    %4109 = vmatpush.msra.mxu0 %v129
    %4110 = vmatmul.f32.gmra.mxu0 %v3972
    %v4111 = vpop.f32.mrf.mxu0
    %v4112 = vadd.f32 %v4092, %v4111
    %4113 = vdwg.mxu0
    %4114 = vmatpush.msra.mxu0 %v160
    %4115 = vmatpush.msra.mxu0 %v159
    %4116 = vmatpush.msra.mxu0 %v158
    %4117 = vmatpush.msra.mxu0 %v157
    %4118 = vmatpush.msra.mxu0 %v156
    %4119 = vmatpush.msra.mxu0 %v155
    %4120 = vmatpush.msra.mxu0 %v154
    %4121 = vmatpush.msra.mxu0 %v153
    %4122 = vmatpush.msra.mxu0 %v152
    %4123 = vmatpush.msra.mxu0 %v151
    %4124 = vmatpush.msra.mxu0 %v150
    %4125 = vmatpush.msra.mxu0 %v149
    %4126 = vmatpush.msra.mxu0 %v148
    %4127 = vmatpush.msra.mxu0 %v147
    %4128 = vmatpush.msra.mxu0 %v146
    %4129 = vmatpush.msra.mxu0 %v145
    %4130 = vmatmul.f32.gmra.mxu0 %v3973
    %v4131 = vpop.f32.mrf.mxu0
    %v4132 = vadd.f32 %v4112, %v4131
    %4133 = vdwg.mxu0
    %v4134 = vmul.f32 %v4132, 0.0625
    %v4135 = vld [vmem:[%s7 + $0x80] sm:$0xff]
    %v4136 = vld [vmem:[%s7 + $0x88] sm:$0xff]
    %v4137 = vld [vmem:[%s7 + $0x90] sm:$0xff]
    %v4138 = vld [vmem:[%s7 + $0x98] sm:$0xff]
    %v4139 = vld [vmem:[%s7 + $0xa0] sm:$0xff]
    %v4140 = vld [vmem:[%s7 + $0xa8] sm:$0xff]
    %v4141 = vld [vmem:[%s7 + $0xb0] sm:$0xff]
    %v4142 = vld [vmem:[%s7 + $0xb8] sm:$0xff]
    %v4144 = vsel %vm1274, %v4134, 0
    %4146 = vmatpush.msra.mxu0 0.0
    %4147 = vmatpush.msra.mxu0 0.0
    %4148 = vmatpush.msra.mxu0 0.0
    %4149 = vmatpush.msra.mxu0 0.0
    %4150 = vmatpush.msra.mxu0 0.0
    %4151 = vmatpush.msra.mxu0 0.0
    %4152 = vmatpush.msra.mxu0 0.0
    %4153 = vmatpush.msra.mxu0 0.0
    %4154 = vmatpush.msra.mxu0 %v4142
    %4155 = vmatpush.msra.mxu0 %v4141
    %4156 = vmatpush.msra.mxu0 %v4140
    %4157 = vmatpush.msra.mxu0 %v4139
    %4158 = vmatpush.msra.mxu0 %v4138
    %4159 = vmatpush.msra.mxu0 %v4137
    %4160 = vmatpush.msra.mxu0 %v4136
    %4161 = vmatpush.msra.mxu0 %v4135
    %4162 = vmatmul.f32.gmra.mxu0 %v4144
    %v4163 = vpop.f32.mrf.mxu0
    %v4164 = vadd.f32 0.0, %v4163
    %4165 = vdwg.mxu0
    %v4166 = vadd.f32 %v3131, %v4164
    %vm4167 = vcmask 33792
    %v4168 = vsel %vm4167, %v4166, -inf
    %4169 = vmax.xlane.f32.xlu0 %v4168
    %v4170 = vpop.xlane.xlu0 %4169
    %v4171 = vsub.f32 %v4166, %v4170
    %v4172 = vmul.f32 %v4171, 1.442695
    %v4173 = vpow.pop %v4172
    %v4174 = vsel %vm4167, %v4173, 0.0
    %4175 = vadd.xlane.f32.xlu0 %v4174
    %v4176 = vpop.xlane.xlu0 %4175
    %v4177 = vlog2.pop %v4176
    %v4178 = vmul.f32 %v4177, 0.6931472
    %v4179 = vsub.f32 %v4171, %v4178
    %4180 = vst.msk [vmem:[#allocation2] sm:$0x3] %vm4167, %v4179
    // Predicated region
    $region38: #{inception_fuse_net.1} parent=1 // pred_check
      _
    $region39: #{inception_fuse_net.1} parent=1 // pred_check_branch
      %4182 = sbr.rel (0) target = $region41
    $region40: #{inception_fuse_net.1} parent=1 // pred_region
      %4184 = vsyncadd [#allocation3], 0
      %s4186 = sshll.u32 [#allocation2], 4
      %s4187 = int_to_ptr.vmem [resolvable:$true] %s4186
      %s4188 = sshll.u32 %s9, 4
      %s4189 = int_to_ptr.hbm [resolvable:$true] %s4188
      %4191 = dma.vmem_to_hbm [thread:$0]  %s4187, 32, %s4189, [#allocation3]
    $region41: #{inception_fuse_net.1} parent=1 // pred_fallthru
      _
    // Predicated region
    $region42: #{inception_fuse_net.1} parent=1 // pred_check
      _
    $region43: #{inception_fuse_net.1} parent=1 // pred_check_branch
      %4193 = sbr.rel (0) target = $region45
    $region44: #{inception_fuse_net.1} parent=1 // pred_region
      %4195 = dma.done [#allocation3], 32
    $region45: #{inception_fuse_net.1} parent=1 // pred_fallthru
      _
    %4196 = vsyncpa [#allocation3], 1

</llo_original>
